<compile_context>
chip_gen: v5e
topology: v5e:2x2
jax: 0.10.0
libtpu: 0.0.40
codegen_flags: <defaults>
</compile_context>

<pallas_src>
import functools

import jax
import jax.numpy as jnp
from jax.experimental import pallas as pl
from jax.experimental.pallas import tpu as pltpu


def _round_up(a, m):
    return ((a + m - 1) // m) * m


def _mlp_kernel(*refs, L, in_channel, slab):
    """Fused PE + MLP forward on one (features, batch_tile) slab.

    refs = [x_t,                          # (in_channel, tm) input tile (batch on lanes)
            w0_packed,                    # (hidden, pe_rows) fused layer-0 weights + bias col
            w1, b1, ..., w_last, b_last,  # remaining layers, bias shaped (out, 1)
            out,                          # (num_out_pad, tm)
            pe_scratch]                   # (pe_rows, tm) VMEM scratch
    """
    x_ref, w0p_ref = refs[0], refs[1]
    layer_refs = refs[2:-2]
    o_ref, pe_ref = refs[-2], refs[-1]

    x = x_ref[...].astype(jnp.float32)           # (in_channel, tm)
    tm = x.shape[1]

    # ---- assemble the packed positional-encoding slab in VMEM ------------------
    # Row layout (all slab starts 8-aligned):
    #   row 0                       : ones   (folds the layer-0 bias into the matmul)
    #   rows [(k+1)*slab, +C)       : feature k   (0 -> x, 2i+1 -> sin(2^i x), 2i+2 -> cos)
    # All other rows must be zero: their W0_packed columns are zero, but the MXU still
    # multiplies them, so garbage/NaN here would corrupt the accumulate.
    pe_ref[...] = jnp.zeros_like(pe_ref)
    pe_ref[pl.ds(0, 1), :] = jnp.ones((1, tm), jnp.float32)
    pe_ref[pl.ds(slab, in_channel), :] = x

    # sin/cos of 2^i x via angle doubling: 2 EUP transcendentals total instead of 2L.
    s = jnp.sin(x)
    c = jnp.cos(x)
    for i in range(L):
        pe_ref[pl.ds((2 * i + 2) * slab, in_channel), :] = s
        pe_ref[pl.ds((2 * i + 3) * slab, in_channel), :] = c
        if i + 1 < L:
            # sin(2a) = 2 sin(a) cos(a);  cos(2a) = 2 cos(a)^2 - 1   (VALU only)
            s, c = 2.0 * s * c, 2.0 * c * c - 1.0

    # ---- single fused first-layer matmul (bias included via the ones row) ------
    h = jnp.dot(w0p_ref[...], pe_ref[...], preferred_element_type=jnp.float32)
    h = jnp.maximum(h, 0.0)                      # (hidden, tm)

    # ---- remaining layers -------------------------------------------------------
    n_rest = len(layer_refs) // 2
    for li in range(n_rest):
        w = layer_refs[2 * li][...]
        b = layer_refs[2 * li + 1][...]          # (out, 1) broadcast over the lane axis
        h = jnp.dot(w, h, preferred_element_type=jnp.float32) + b
        if li != n_rest - 1:
            h = jnp.maximum(h, 0.0)

    o_ref[...] = h.astype(o_ref.dtype)           # (num_out_pad, tm) lane-dense store


def mlp_forward(x, params, *, L, block_batch=None, interpret=False):
    """x: (batch, in_channel) f32.  params: [(W, b)] in PyTorch layout W:(out,in), b:(out,)."""
    batch, in_channel = x.shape
    hidden = params[0][0].shape[0]
    num_in = params[0][0].shape[1]
    num_out = params[-1][0].shape[0]
    assert num_in == (2 * L + 1) * in_channel

    # ---- batch tiling -----------------------------------------------------------
    if block_batch is None:
        # Default to a 2-step grid: amortizes per-step overhead (dominant at 512-row
        # tiles) while keeping two "parallel" steps so v7x's 2 TensorCores both work.
        # Cap the tile so the per-step working set (~0.4 KiB/row) stays at a few MiB,
        # comfortably inside every generation's scoped-VMEM default.
        block_batch = max(128, min(4096, _round_up(pl.cdiv(batch, 2), 128)))
    assert block_batch % 128 == 0
    tm = block_batch
    b_pad = _round_up(batch, tm)
    grid = (b_pad // tm,)

    # Feature-major input so the batch rides the 128-lane axis inside the kernel.
    x_t = x.T.astype(jnp.float32)
    if b_pad != batch:
        x_t = jnp.zeros((in_channel, b_pad), jnp.float32).at[:, :batch].set(x_t)

    # ---- pack the first layer: PE slabs + bias column into one matrix ------------
    slab = _round_up(in_channel, 8)
    n_feat = 2 * L + 1
    pe_rows = (n_feat + 1) * slab                # leading 8-row "ones/bias" slab + features
    w0, b0 = params[0]
    w0 = w0.astype(jnp.float32)
    w0p = jnp.zeros((hidden, pe_rows), jnp.float32)
    w0p = w0p.at[:, 0].set(b0.astype(jnp.float32))
    for k in range(n_feat):
        w0p = w0p.at[:, (k + 1) * slab:(k + 1) * slab + in_channel].set(
            w0[:, k * in_channel:(k + 1) * in_channel])

    # Pad the tiny output layer (3 rows) up to 8 sublanes so the final store is unmasked.
    num_out_pad = _round_up(num_out, 8)
    flat = [w0p]
    for li, (w, b) in enumerate(params[1:], start=1):
        w = w.astype(jnp.float32)
        b = b.astype(jnp.float32).reshape(-1, 1)
        if li == len(params) - 1 and num_out_pad != num_out:
            w = jnp.zeros((num_out_pad, w.shape[1]), jnp.float32).at[:num_out].set(w)
            b = jnp.zeros((num_out_pad, 1), jnp.float32).at[:num_out].set(b)
        flat += [w, b]

    def const_spec(a):
        # Full-array block, constant index_map -> stays VMEM-resident across the grid.
        return pl.BlockSpec(a.shape, lambda i: (0,) * a.ndim)

    in_specs = [pl.BlockSpec((in_channel, tm), lambda i: (0, i))] + [const_spec(a) for a in flat]
    out_specs = pl.BlockSpec((num_out_pad, tm), lambda i: (0, i))

    depth = len(params)
    flops = 2 * b_pad * (pe_rows * hidden + hidden * hidden * (depth - 2)
                         + hidden * num_out_pad)
    bytes_accessed = 4 * (b_pad * (in_channel + num_out_pad)
                          + sum(int(a.size) for a in flat))
    cost = pl.CostEstimate(flops=flops, transcendentals=2 * b_pad * in_channel,
                           bytes_accessed=bytes_accessed)

    kernel = functools.partial(_mlp_kernel, L=L, in_channel=in_channel, slab=slab)
    out_t = pl.pallas_call(
        kernel,
        out_shape=jax.ShapeDtypeStruct((num_out_pad, b_pad), jnp.float32),
        grid=grid,
        in_specs=in_specs,
        out_specs=out_specs,
        scratch_shapes=[pltpu.VMEM((pe_rows, tm), jnp.float32)],
        compiler_params=pltpu.CompilerParams(dimension_semantics=("parallel",)),
        cost_estimate=cost,
        interpret=interpret,
    )(x_t, *flat)

    return out_t[:num_out, :batch].T


def init_params(key, dims):
    """Deterministic Linear params in PyTorch layout: W (out, in), b (out,)."""
    params = []
    for (din, dout) in dims:
        key, kw, kb = jax.random.split(key, 3)
        scale = 1.0 / jnp.sqrt(jnp.float32(din))
        w = jax.random.uniform(kw, (dout, din), jnp.float32, -scale, scale)
        b = jax.random.uniform(kb, (dout,), jnp.float32, -scale, scale)
        params.append((w, b))
    return params


def reference_forward(x, params, *, L):
    feats = [x]
    for i in range(L):
        a = (2.0 ** i) * x
        feats.append(jnp.sin(a))
        feats.append(jnp.cos(a))
    h = jnp.concatenate(feats, axis=-1)
    n = len(params)
    for idx, (w, b) in enumerate(params):
        h = h @ w.T + b
        if idx != n - 1:
            h = jnp.maximum(h, 0.0)
    return h


if __name__ == "__main__":
    # Module config: MLP(hiden_depth=4, hiden_width=32, in_channel=4, L=4,
    #                    num_out=3, activation=nn.ReLU())
    hidden_depth = 4
    hidden_width = 32
    in_channel = 4
    L = 4
    num_out = 3
    batch = 2048          # demo batch; auto tile = 1024 rows -> 2-step "parallel" grid

    num_in = L * 2 * in_channel + in_channel  # 36

    dims = [(num_in, hidden_width)]
    dims += [(hidden_width, hidden_width)] * (hidden_depth - 2)
    dims += [(hidden_width, num_out)]

    key = jax.random.PRNGKey(0)
    key, kx = jax.random.split(key)
    x = jax.random.normal(kx, (batch, in_channel), jnp.float32)
    params = init_params(key, dims)

    out = mlp_forward(x, params, L=L)
    out = jax.block_until_ready(out)

    ref = reference_forward(x, params, L=L)
    assert out.shape == (batch, num_out)
    # Slightly loose tolerance: angle-doubling recurrence drifts a few ulp vs direct sin/cos.
    assert jnp.allclose(out, ref, atol=5e-4, rtol=5e-4), "mismatch vs reference"

    print("KERNEL_OK")
</pallas_src>

<mosaic_0001>
module attributes {stable_mosaic.version = 11 : i64} {
  func.func @_mlp_kernel(%arg0: i32, %arg1: memref<4x1024xf32, #tpu.memory_space<vmem>>, %arg2: memref<32x80xf32, #tpu.memory_space<vmem>>, %arg3: memref<32x32xf32, #tpu.memory_space<vmem>>, %arg4: memref<32x1xf32, #tpu.memory_space<vmem>>, %arg5: memref<32x32xf32, #tpu.memory_space<vmem>>, %arg6: memref<32x1xf32, #tpu.memory_space<vmem>>, %arg7: memref<8x32xf32, #tpu.memory_space<vmem>>, %arg8: memref<8x1xf32, #tpu.memory_space<vmem>>, %arg9: memref<8x1024xf32, #tpu.memory_space<vmem>>, %arg10: memref<80x1024xf32, #tpu.memory_space<vmem>>) attributes {dimension_semantics = [#tpu.dimension_semantics<parallel>], iteration_bounds = array<i64: 2>, scalar_prefetch = 0 : i64, scratch_operands = 1 : i64, tpu.core_type = #tpu.core_type<tc>, window_params = [{transform_indices = @transform_0, window_bounds = array<i64: 4, 1024>}, {pipeline_mode = #tpu.pipeline_mode<synchronous>, transform_indices = @transform_1, window_bounds = array<i64: 32, 80>}, {pipeline_mode = #tpu.pipeline_mode<synchronous>, transform_indices = @transform_2, window_bounds = array<i64: 32, 32>}, {pipeline_mode = #tpu.pipeline_mode<synchronous>, transform_indices = @transform_3, window_bounds = array<i64: 32, 1>}, {pipeline_mode = #tpu.pipeline_mode<synchronous>, transform_indices = @transform_4, window_bounds = array<i64: 32, 32>}, {pipeline_mode = #tpu.pipeline_mode<synchronous>, transform_indices = @transform_5, window_bounds = array<i64: 32, 1>}, {pipeline_mode = #tpu.pipeline_mode<synchronous>, transform_indices = @transform_6, window_bounds = array<i64: 8, 32>}, {pipeline_mode = #tpu.pipeline_mode<synchronous>, transform_indices = @transform_7, window_bounds = array<i64: 8, 1>}, {transform_indices = @transform_8, window_bounds = array<i64: 8, 1024>}]} {
    %c0 = arith.constant 0 : index
    %c0_0 = arith.constant 0 : index
    %0 = vector.load %arg1[%c0, %c0_0] : memref<4x1024xf32, #tpu.memory_space<vmem>>, vector<4x1024xf32>
    %cst = arith.constant 0.000000e+00 : f32
    %1 = vector.broadcast %cst : f32 to vector<80x1024xf32>
    %c0_1 = arith.constant 0 : index
    %c0_2 = arith.constant 0 : index
    %2 = vector.load %arg10[%c0_1, %c0_2] : memref<80x1024xf32, #tpu.memory_space<vmem>>, vector<80x1024xf32>
    tpu.vector_store %arg10[%c0_1, %c0_2], %1 {strides = array<i32>} : memref<80x1024xf32, #tpu.memory_space<vmem>>, vector<80x1024xf32>,
    %cst_3 = arith.constant 1.000000e+00 : f32
    %3 = vector.broadcast %cst_3 : f32 to vector<1x1024xf32>
    %c0_4 = arith.constant 0 : index
    %c0_5 = arith.constant 0 : index
    %4 = vector.load %arg10[%c0_4, %c0_5] : memref<80x1024xf32, #tpu.memory_space<vmem>>, vector<1x1024xf32>
    tpu.vector_store %arg10[%c0_4, %c0_5], %3 {strides = array<i32>} : memref<80x1024xf32, #tpu.memory_space<vmem>>, vector<1x1024xf32>,
    %c8 = arith.constant 8 : index
    %c0_6 = arith.constant 0 : index
    %5 = vector.load %arg10[%c8, %c0_6] : memref<80x1024xf32, #tpu.memory_space<vmem>>, vector<4x1024xf32>
    tpu.vector_store %arg10[%c8, %c0_6], %0 {strides = array<i32>} : memref<80x1024xf32, #tpu.memory_space<vmem>>, vector<4x1024xf32>,
    %6 = math.sin %0 : vector<4x1024xf32>
    %7 = math.cos %0 : vector<4x1024xf32>
    %c16 = arith.constant 16 : index
    %c0_7 = arith.constant 0 : index
    %8 = vector.load %arg10[%c16, %c0_7] : memref<80x1024xf32, #tpu.memory_space<vmem>>, vector<4x1024xf32>
    tpu.vector_store %arg10[%c16, %c0_7], %6 {strides = array<i32>} : memref<80x1024xf32, #tpu.memory_space<vmem>>, vector<4x1024xf32>,
    %c24 = arith.constant 24 : index
    %c0_8 = arith.constant 0 : index
    %9 = vector.load %arg10[%c24, %c0_8] : memref<80x1024xf32, #tpu.memory_space<vmem>>, vector<4x1024xf32>
    tpu.vector_store %arg10[%c24, %c0_8], %7 {strides = array<i32>} : memref<80x1024xf32, #tpu.memory_space<vmem>>, vector<4x1024xf32>,
    %cst_9 = arith.constant 2.000000e+00 : f32
    %10 = vector.broadcast %cst_9 : f32 to vector<4x1024xf32>
    %11 = arith.mulf %10, %6 : vector<4x1024xf32>
    %12 = arith.mulf %11, %7 : vector<4x1024xf32>
    %cst_10 = arith.constant 2.000000e+00 : f32
    %13 = vector.broadcast %cst_10 : f32 to vector<4x1024xf32>
    %14 = arith.mulf %13, %7 : vector<4x1024xf32>
    %15 = arith.mulf %14, %7 : vector<4x1024xf32>
    %cst_11 = arith.constant 1.000000e+00 : f32
    %16 = vector.broadcast %cst_11 : f32 to vector<4x1024xf32>
    %17 = arith.subf %15, %16 : vector<4x1024xf32>
    %c32 = arith.constant 32 : index
    %c0_12 = arith.constant 0 : index
    %18 = vector.load %arg10[%c32, %c0_12] : memref<80x1024xf32, #tpu.memory_space<vmem>>, vector<4x1024xf32>
    tpu.vector_store %arg10[%c32, %c0_12], %12 {strides = array<i32>} : memref<80x1024xf32, #tpu.memory_space<vmem>>, vector<4x1024xf32>,
    %c40 = arith.constant 40 : index
    %c0_13 = arith.constant 0 : index
    %19 = vector.load %arg10[%c40, %c0_13] : memref<80x1024xf32, #tpu.memory_space<vmem>>, vector<4x1024xf32>
    tpu.vector_store %arg10[%c40, %c0_13], %17 {strides = array<i32>} : memref<80x1024xf32, #tpu.memory_space<vmem>>, vector<4x1024xf32>,
    %cst_14 = arith.constant 2.000000e+00 : f32
    %20 = vector.broadcast %cst_14 : f32 to vector<4x1024xf32>
    %21 = arith.mulf %20, %12 : vector<4x1024xf32>
    %22 = arith.mulf %21, %17 : vector<4x1024xf32>
    %cst_15 = arith.constant 2.000000e+00 : f32
    %23 = vector.broadcast %cst_15 : f32 to vector<4x1024xf32>
    %24 = arith.mulf %23, %17 : vector<4x1024xf32>
    %25 = arith.mulf %24, %17 : vector<4x1024xf32>
    %cst_16 = arith.constant 1.000000e+00 : f32
    %26 = vector.broadcast %cst_16 : f32 to vector<4x1024xf32>
    %27 = arith.subf %25, %26 : vector<4x1024xf32>
    %c48 = arith.constant 48 : index
    %c0_17 = arith.constant 0 : index
    %28 = vector.load %arg10[%c48, %c0_17] : memref<80x1024xf32, #tpu.memory_space<vmem>>, vector<4x1024xf32>
    tpu.vector_store %arg10[%c48, %c0_17], %22 {strides = array<i32>} : memref<80x1024xf32, #tpu.memory_space<vmem>>, vector<4x1024xf32>,
    %c56 = arith.constant 56 : index
    %c0_18 = arith.constant 0 : index
    %29 = vector.load %arg10[%c56, %c0_18] : memref<80x1024xf32, #tpu.memory_space<vmem>>, vector<4x1024xf32>
    tpu.vector_store %arg10[%c56, %c0_18], %27 {strides = array<i32>} : memref<80x1024xf32, #tpu.memory_space<vmem>>, vector<4x1024xf32>,
    %cst_19 = arith.constant 2.000000e+00 : f32
    %30 = vector.broadcast %cst_19 : f32 to vector<4x1024xf32>
    %31 = arith.mulf %30, %22 : vector<4x1024xf32>
    %32 = arith.mulf %31, %27 : vector<4x1024xf32>
    %cst_20 = arith.constant 2.000000e+00 : f32
    %33 = vector.broadcast %cst_20 : f32 to vector<4x1024xf32>
    %34 = arith.mulf %33, %27 : vector<4x1024xf32>
    %35 = arith.mulf %34, %27 : vector<4x1024xf32>
    %cst_21 = arith.constant 1.000000e+00 : f32
    %36 = vector.broadcast %cst_21 : f32 to vector<4x1024xf32>
    %37 = arith.subf %35, %36 : vector<4x1024xf32>
    %c64 = arith.constant 64 : index
    %c0_22 = arith.constant 0 : index
    %38 = vector.load %arg10[%c64, %c0_22] : memref<80x1024xf32, #tpu.memory_space<vmem>>, vector<4x1024xf32>
    tpu.vector_store %arg10[%c64, %c0_22], %32 {strides = array<i32>} : memref<80x1024xf32, #tpu.memory_space<vmem>>, vector<4x1024xf32>,
    %c72 = arith.constant 72 : index
    %c0_23 = arith.constant 0 : index
    %39 = vector.load %arg10[%c72, %c0_23] : memref<80x1024xf32, #tpu.memory_space<vmem>>, vector<4x1024xf32>
    tpu.vector_store %arg10[%c72, %c0_23], %37 {strides = array<i32>} : memref<80x1024xf32, #tpu.memory_space<vmem>>, vector<4x1024xf32>,
    %c0_24 = arith.constant 0 : index
    %c0_25 = arith.constant 0 : index
    %40 = vector.load %arg2[%c0_24, %c0_25] : memref<32x80xf32, #tpu.memory_space<vmem>>, vector<32x80xf32>
    %c0_26 = arith.constant 0 : index
    %c0_27 = arith.constant 0 : index
    %41 = vector.load %arg10[%c0_26, %c0_27] : memref<80x1024xf32, #tpu.memory_space<vmem>>, vector<80x1024xf32>
    %cst_28 = arith.constant dense<0.000000e+00> : vector<32x1024xf32>
    %42 = tpu.matmul %40, %41, %cst_28 {dimension_numbers = #tpu.dot_dimension_numbers<[1], [0], [0], [1], [0, 0, 1, 1], [], []>} : vector<32x80xf32>, vector<80x1024xf32>, vector<32x1024xf32> -> vector<32x1024xf32>
    %cst_29 = arith.constant 0.000000e+00 : f32
    %43 = vector.broadcast %cst_29 : f32 to vector<32x1024xf32>
    %44 = arith.maximumf %42, %43 : vector<32x1024xf32>
    %c0_30 = arith.constant 0 : index
    %c0_31 = arith.constant 0 : index
    %45 = vector.load %arg3[%c0_30, %c0_31] : memref<32x32xf32, #tpu.memory_space<vmem>>, vector<32x32xf32>
    %c0_32 = arith.constant 0 : index
    %c0_33 = arith.constant 0 : index
    %46 = vector.load %arg4[%c0_32, %c0_33] : memref<32x1xf32, #tpu.memory_space<vmem>>, vector<32x1xf32>
    %cst_34 = arith.constant dense<0.000000e+00> : vector<32x1024xf32>
    %47 = tpu.matmul %45, %44, %cst_34 {dimension_numbers = #tpu.dot_dimension_numbers<[1], [0], [0], [1], [0, 0, 1, 1], [], []>} : vector<32x32xf32>, vector<32x1024xf32>, vector<32x1024xf32> -> vector<32x1024xf32>
    %48 = vector.broadcast %46 : vector<32x1xf32> to vector<32x1024xf32>
    %49 = arith.addf %47, %48 : vector<32x1024xf32>
    %cst_35 = arith.constant 0.000000e+00 : f32
    %50 = vector.broadcast %cst_35 : f32 to vector<32x1024xf32>
    %51 = arith.maximumf %49, %50 : vector<32x1024xf32>
    %c0_36 = arith.constant 0 : index
    %c0_37 = arith.constant 0 : index
    %52 = vector.load %arg5[%c0_36, %c0_37] : memref<32x32xf32, #tpu.memory_space<vmem>>, vector<32x32xf32>
    %c0_38 = arith.constant 0 : index
    %c0_39 = arith.constant 0 : index
    %53 = vector.load %arg6[%c0_38, %c0_39] : memref<32x1xf32, #tpu.memory_space<vmem>>, vector<32x1xf32>
    %cst_40 = arith.constant dense<0.000000e+00> : vector<32x1024xf32>
    %54 = tpu.matmul %52, %51, %cst_40 {dimension_numbers = #tpu.dot_dimension_numbers<[1], [0], [0], [1], [0, 0, 1, 1], [], []>} : vector<32x32xf32>, vector<32x1024xf32>, vector<32x1024xf32> -> vector<32x1024xf32>
    %55 = vector.broadcast %53 : vector<32x1xf32> to vector<32x1024xf32>
    %56 = arith.addf %54, %55 : vector<32x1024xf32>
    %cst_41 = arith.constant 0.000000e+00 : f32
    %57 = vector.broadcast %cst_41 : f32 to vector<32x1024xf32>
    %58 = arith.maximumf %56, %57 : vector<32x1024xf32>
    %c0_42 = arith.constant 0 : index
    %c0_43 = arith.constant 0 : index
    %59 = vector.load %arg7[%c0_42, %c0_43] : memref<8x32xf32, #tpu.memory_space<vmem>>, vector<8x32xf32>
    %c0_44 = arith.constant 0 : index
    %c0_45 = arith.constant 0 : index
    %60 = vector.load %arg8[%c0_44, %c0_45] : memref<8x1xf32, #tpu.memory_space<vmem>>, vector<8x1xf32>
    %cst_46 = arith.constant dense<0.000000e+00> : vector<8x1024xf32>
    %61 = tpu.matmul %59, %58, %cst_46 {dimension_numbers = #tpu.dot_dimension_numbers<[1], [0], [0], [1], [0, 0, 1, 1], [], []>} : vector<8x32xf32>, vector<32x1024xf32>, vector<8x1024xf32> -> vector<8x1024xf32>
    %62 = vector.broadcast %60 : vector<8x1xf32> to vector<8x1024xf32>
    %63 = arith.addf %61, %62 : vector<8x1024xf32>
    %c0_47 = arith.constant 0 : index
    %c0_48 = arith.constant 0 : index
    %64 = vector.load %arg9[%c0_47, %c0_48] : memref<8x1024xf32, #tpu.memory_space<vmem>>, vector<8x1024xf32>
    tpu.vector_store %arg9[%c0_47, %c0_48], %63 {strides = array<i32>} : memref<8x1024xf32, #tpu.memory_space<vmem>>, vector<8x1024xf32>,
    return
  }
  func.func @transform_0(%arg0: i32) -> (i32, i32) {
    %c0_i32 = arith.constant 0 : i32
    %c0_i32_0 = arith.constant 0 : i32
    return %c0_i32, %arg0 : i32, i32
  }
  func.func @transform_1(%arg0: i32) -> (i32, i32) {
    %c0_i32 = arith.constant 0 : i32
    %c0_i32_0 = arith.constant 0 : i32
    %c0_i32_1 = arith.constant 0 : i32
    return %c0_i32, %c0_i32_0 : i32, i32
  }
  func.func @transform_2(%arg0: i32) -> (i32, i32) {
    %c0_i32 = arith.constant 0 : i32
    %c0_i32_0 = arith.constant 0 : i32
    %c0_i32_1 = arith.constant 0 : i32
    return %c0_i32, %c0_i32_0 : i32, i32
  }
  func.func @transform_3(%arg0: i32) -> (i32, i32) {
    %c0_i32 = arith.constant 0 : i32
    %c0_i32_0 = arith.constant 0 : i32
    %c0_i32_1 = arith.constant 0 : i32
    return %c0_i32, %c0_i32_0 : i32, i32
  }
  func.func @transform_4(%arg0: i32) -> (i32, i32) {
    %c0_i32 = arith.constant 0 : i32
    %c0_i32_0 = arith.constant 0 : i32
    %c0_i32_1 = arith.constant 0 : i32
    return %c0_i32, %c0_i32_0 : i32, i32
  }
  func.func @transform_5(%arg0: i32) -> (i32, i32) {
    %c0_i32 = arith.constant 0 : i32
    %c0_i32_0 = arith.constant 0 : i32
    %c0_i32_1 = arith.constant 0 : i32
    return %c0_i32, %c0_i32_0 : i32, i32
  }
  func.func @transform_6(%arg0: i32) -> (i32, i32) {
    %c0_i32 = arith.constant 0 : i32
    %c0_i32_0 = arith.constant 0 : i32
    %c0_i32_1 = arith.constant 0 : i32
    return %c0_i32, %c0_i32_0 : i32, i32
  }
  func.func @transform_7(%arg0: i32) -> (i32, i32) {
    %c0_i32 = arith.constant 0 : i32
    %c0_i32_0 = arith.constant 0 : i32
    %c0_i32_1 = arith.constant 0 : i32
    return %c0_i32, %c0_i32_0 : i32, i32
  }
  func.func @transform_8(%arg0: i32) -> (i32, i32) {
    %c0_i32 = arith.constant 0 : i32
    %c0_i32_0 = arith.constant 0 : i32
    return %c0_i32, %arg0 : i32, i32
  }
}

</mosaic_0001>

<llo_original>
// kernel: tpu_custom_call.1
$region0: #{tpu_custom_call.1}
  #allocation0 [shape = 'u32[]', space=smem, size = 0x4, offset = 0x4, fixed_abs, tag = 'smem constant byte address 0x4 - core index']
  #allocation1 [shape = 'u32[72,128]{1,0:T(1,128)}', space=vmem, size = 0x9000, scoped, tag = 'internal scratch']
  #allocation2 [shape = 'f32[80,1024]{1,0:T(8,128)}', space=vmem, size = 0x50000, scoped, tag = 'scratch operand']
  %s0 = inlined_call_operand.vmem [shape: f32[4,2048], index: 0, kind: input, shape index: {}]
  %s1 = inlined_call_operand.hbm [shape: f32[32,80], index: 1, kind: input, shape index: {}]
  %s2 = inlined_call_operand.hbm [shape: f32[32,32], index: 2, kind: input, shape index: {}]
  %s3 = inlined_call_operand.vmem [shape: f32[32,1], index: 3, kind: input, shape index: {}]
  %s4 = inlined_call_operand.hbm [shape: f32[32,32], index: 4, kind: input, shape index: {}]
  %s5 = inlined_call_operand.vmem [shape: f32[32,1], index: 5, kind: input, shape index: {}]
  %s6 = inlined_call_operand.vmem [shape: f32[8,32], index: 6, kind: input, shape index: {}]
  %s7 = inlined_call_operand.vmem [shape: f32[8,1], index: 7, kind: input, shape index: {}]
  %s8 = inlined_call_operand.hbm [shape: f32[8,2048], index: 8, kind: output, shape index: {}]
  %s9 = sld [smem:[#allocation0]]
  $region77: #{tpu_custom_call.1} parent=0
    _
  %s11 = ssub.s32 1, %s9
  %s12 = scalar_select 0, %s11, %s9
  $region1: #{tpu_custom_call.1} parent=0
    #allocation3 [shape = 'u8[16384]{0}', space=vmem, size = 0x4000, scoped, tag = 'input window, operand 1, single buffered']
    #allocation4 [shape = 's32[2]{0}', space=sflag, size = 0x8, scoped, tag = 'scoped memory for tpu_custom_call.1']
    #allocation5 [shape = 's32[2]{0}', space=sflag, size = 0x8, scoped, tag = 'scoped memory for tpu_custom_call.1']
    #allocation6 [shape = 'u8[16384]{0}', space=vmem, size = 0x4000, scoped, tag = 'input window, operand 2, single buffered']
    #allocation7 [shape = 's32[1]{0}', space=sflag, size = 0x4, scoped, tag = 'scoped memory for tpu_custom_call.1']
    #allocation8 [shape = 'u8[16384]{0}', space=vmem, size = 0x4000, scoped, tag = 'input window, operand 4, single buffered']
    #allocation9 [shape = 'u8[65536]{0}', space=vmem, size = 0x10000, scoped, tag = 'output window, operand 0']
    %13 = vsyncpa [#allocation4], 0
    %14 = vsyncpa [#allocation7], 0
    %15 = vsyncpa [#allocation5], 0
    %s16 = scalar_lea.sflag [#allocation5], 1
    %17 = vsyncpa %s16, 0
    loop: start=0, step=1, limit=4
    $region2: #{tpu_custom_call.1} parent=1 // loop_pre_header
      _
    $region3: #{tpu_custom_call.1} parent=1 // loop_header
      %s19 = sphi 0, %s23
      %p20 = scmp.ge.s32.totalorder %s19, 4
      %s29 = sphi 0, %s31
      %s32 = sphi 0, %s29
      %s33 = sphi 0, %s32
      %s49 = sphi 0, %s33
      %s53 = sphi 0, %s53
      %s55 = sphi 0, %s53
      %s56 = sphi 0, %s55
      %s70 = sphi 0, %s56
      %s74 = sphi 0, %s74
      %s76 = sphi 0, %s74
      %s77 = sphi 0, %s76
      %s91 = sphi 0, %s77
      %s95 = sphi 0, %s95
      %s97 = sphi 0, %s95
      %s98 = sphi 0, %s97
      %s112 = sphi 0, %s98
      %s116 = sphi 0, %s116
      %s118 = sphi 0, %s116
      %s119 = sphi 0, %s118
      %s133 = sphi 0, %s119
      %s137 = sphi 0, %s137
      %s139 = sphi 0, %s137
      %s140 = sphi 0, %s139
      %s154 = sphi 0, %s140
      %s158 = sphi 0, %s158
      %s160 = sphi 0, %s158
      %s161 = sphi 0, %s160
      %s175 = sphi 0, %s161
      %s179 = sphi 0, %s179
      %s181 = sphi 0, %s179
      %s182 = sphi 0, %s181
      %s196 = sphi 0, %s182
      %s202 = sphi 0, %s204
      %s205 = sphi 0, %s202
      %s206 = sphi 0, %s205
      %s222 = sphi 0, %s206
    $region4: #{tpu_custom_call.1} parent=1 // loop_header_branch
      %22 = sbr.rel (%p20) target = $region8
    $region5: #{tpu_custom_call.1} parent=1 // loop_body
      %s24 = ssub.s32 %s19, 1
      %s25 = ssub.s32 %s19, 2
      %s26 = sadd.s32 %s19, 1
      %s27 = ssub.s32 %s19, %s26
      %p28 = scmp.eq.s32.totalorder %s27, 0
      %s30 = sadd.s32 %s29, 1
      %s31 = scalar_select %p28, %s29, %s30
      %p34 = pneg %p28
      %p35 = scmp.eq.s32.totalorder %s19, 1
      %p36 = por %p34, %p35
      %p37 = scmp.ne.s32.totalorder %s29, %s32
      %p38 = scmp.eq.s32.totalorder %s19, 0
      %p39 = por %p37, %p38
      %p40 = scmp.ne.s32.totalorder %s29, %s32
      %p41 = scmp.eq.s32.totalorder %s24, 1
      %p42 = por %p40, %p41
      %p43 = scmp.ne.s32.totalorder %s32, %s33
      %p44 = scmp.eq.s32.totalorder %s24, 0
      %p45 = por %p43, %p44
      %p46 = scmp.ne.s32.totalorder %s32, %s33
      %p47 = scmp.eq.s32.totalorder %s25, 1
      %p48 = por %p46, %p47
      %p50 = scmp.ne.s32.totalorder %s33, %s49
      %p51 = scmp.eq.s32.totalorder %s25, 0
      %p52 = por %p50, %p51
      %s54 = sadd.s32 %s53, 1
      %p57 = scmp.eq.s32.totalorder %s19, 1
      %p58 = scmp.ne.s32.totalorder %s53, %s55
      %p59 = scmp.eq.s32.totalorder %s19, 0
      %p60 = por %p58, %p59
      %p61 = scmp.ne.s32.totalorder %s53, %s55
      %p62 = scmp.eq.s32.totalorder %s24, 1
      %p63 = por %p61, %p62
      %p64 = scmp.ne.s32.totalorder %s55, %s56
      %p65 = scmp.eq.s32.totalorder %s24, 0
      %p66 = por %p64, %p65
      %p67 = scmp.ne.s32.totalorder %s55, %s56
      %p68 = scmp.eq.s32.totalorder %s25, 1
      %p69 = por %p67, %p68
      %p71 = scmp.ne.s32.totalorder %s56, %s70
      %p72 = scmp.eq.s32.totalorder %s25, 0
      %p73 = por %p71, %p72
      %s75 = sadd.s32 %s74, 1
      %p78 = scmp.eq.s32.totalorder %s19, 1
      %p79 = scmp.ne.s32.totalorder %s74, %s76
      %p80 = scmp.eq.s32.totalorder %s19, 0
      %p81 = por %p79, %p80
      %p82 = scmp.ne.s32.totalorder %s74, %s76
      %p83 = scmp.eq.s32.totalorder %s24, 1
      %p84 = por %p82, %p83
      %p85 = scmp.ne.s32.totalorder %s76, %s77
      %p86 = scmp.eq.s32.totalorder %s24, 0
      %p87 = por %p85, %p86
      %p88 = scmp.ne.s32.totalorder %s76, %s77
      %p89 = scmp.eq.s32.totalorder %s25, 1
      %p90 = por %p88, %p89
      %p92 = scmp.ne.s32.totalorder %s77, %s91
      %p93 = scmp.eq.s32.totalorder %s25, 0
      %p94 = por %p92, %p93
      %s96 = sadd.s32 %s95, 1
      %p99 = scmp.eq.s32.totalorder %s19, 1
      %p100 = scmp.ne.s32.totalorder %s95, %s97
      %p101 = scmp.eq.s32.totalorder %s19, 0
      %p102 = por %p100, %p101
      %p103 = scmp.ne.s32.totalorder %s95, %s97
      %p104 = scmp.eq.s32.totalorder %s24, 1
      %p105 = por %p103, %p104
      %p106 = scmp.ne.s32.totalorder %s97, %s98
      %p107 = scmp.eq.s32.totalorder %s24, 0
      %p108 = por %p106, %p107
      %p109 = scmp.ne.s32.totalorder %s97, %s98
      %p110 = scmp.eq.s32.totalorder %s25, 1
      %p111 = por %p109, %p110
      %p113 = scmp.ne.s32.totalorder %s98, %s112
      %p114 = scmp.eq.s32.totalorder %s25, 0
      %p115 = por %p113, %p114
      %s117 = sadd.s32 %s116, 1
      %p120 = scmp.eq.s32.totalorder %s19, 1
      %p121 = scmp.ne.s32.totalorder %s116, %s118
      %p122 = scmp.eq.s32.totalorder %s19, 0
      %p123 = por %p121, %p122
      %p124 = scmp.ne.s32.totalorder %s116, %s118
      %p125 = scmp.eq.s32.totalorder %s24, 1
      %p126 = por %p124, %p125
      %p127 = scmp.ne.s32.totalorder %s118, %s119
      %p128 = scmp.eq.s32.totalorder %s24, 0
      %p129 = por %p127, %p128
      %p130 = scmp.ne.s32.totalorder %s118, %s119
      %p131 = scmp.eq.s32.totalorder %s25, 1
      %p132 = por %p130, %p131
      %p134 = scmp.ne.s32.totalorder %s119, %s133
      %p135 = scmp.eq.s32.totalorder %s25, 0
      %p136 = por %p134, %p135
      %s138 = sadd.s32 %s137, 1
      %p141 = scmp.eq.s32.totalorder %s19, 1
      %p142 = scmp.ne.s32.totalorder %s137, %s139
      %p143 = scmp.eq.s32.totalorder %s19, 0
      %p144 = por %p142, %p143
      %p145 = scmp.ne.s32.totalorder %s137, %s139
      %p146 = scmp.eq.s32.totalorder %s24, 1
      %p147 = por %p145, %p146
      %p148 = scmp.ne.s32.totalorder %s139, %s140
      %p149 = scmp.eq.s32.totalorder %s24, 0
      %p150 = por %p148, %p149
      %p151 = scmp.ne.s32.totalorder %s139, %s140
      %p152 = scmp.eq.s32.totalorder %s25, 1
      %p153 = por %p151, %p152
      %p155 = scmp.ne.s32.totalorder %s140, %s154
      %p156 = scmp.eq.s32.totalorder %s25, 0
      %p157 = por %p155, %p156
      %s159 = sadd.s32 %s158, 1
      %p162 = scmp.eq.s32.totalorder %s19, 1
      %p163 = scmp.ne.s32.totalorder %s158, %s160
      %p164 = scmp.eq.s32.totalorder %s19, 0
      %p165 = por %p163, %p164
      %p166 = scmp.ne.s32.totalorder %s158, %s160
      %p167 = scmp.eq.s32.totalorder %s24, 1
      %p168 = por %p166, %p167
      %p169 = scmp.ne.s32.totalorder %s160, %s161
      %p170 = scmp.eq.s32.totalorder %s24, 0
      %p171 = por %p169, %p170
      %p172 = scmp.ne.s32.totalorder %s160, %s161
      %p173 = scmp.eq.s32.totalorder %s25, 1
      %p174 = por %p172, %p173
      %p176 = scmp.ne.s32.totalorder %s161, %s175
      %p177 = scmp.eq.s32.totalorder %s25, 0
      %p178 = por %p176, %p177
      %s180 = sadd.s32 %s179, 1
      %p183 = scmp.eq.s32.totalorder %s19, 1
      %p184 = scmp.ne.s32.totalorder %s179, %s181
      %p185 = scmp.eq.s32.totalorder %s19, 0
      %p186 = por %p184, %p185
      %p187 = scmp.ne.s32.totalorder %s179, %s181
      %p188 = scmp.eq.s32.totalorder %s24, 1
      %p189 = por %p187, %p188
      %p190 = scmp.ne.s32.totalorder %s181, %s182
      %p191 = scmp.eq.s32.totalorder %s24, 0
      %p192 = por %p190, %p191
      %p193 = scmp.ne.s32.totalorder %s181, %s182
      %p194 = scmp.eq.s32.totalorder %s25, 1
      %p195 = por %p193, %p194
      %p197 = scmp.ne.s32.totalorder %s182, %s196
      %p198 = scmp.eq.s32.totalorder %s25, 0
      %p199 = por %p197, %p198
      %s200 = ssub.s32 %s19, %s26
      %p201 = scmp.eq.s32.totalorder %s200, 0
      %s203 = sadd.s32 %s202, 1
      %s204 = scalar_select %p201, %s202, %s203
      %p207 = pneg %p201
      %p208 = scmp.eq.s32.totalorder %s19, 1
      %p209 = por %p207, %p208
      %p210 = scmp.ne.s32.totalorder %s202, %s205
      %p211 = scmp.eq.s32.totalorder %s19, 0
      %p212 = por %p210, %p211
      %p213 = scmp.ne.s32.totalorder %s202, %s205
      %p214 = scmp.eq.s32.totalorder %s24, 1
      %p215 = por %p213, %p214
      %p216 = scmp.ne.s32.totalorder %s205, %s206
      %p217 = scmp.eq.s32.totalorder %s24, 0
      %p218 = por %p216, %p217
      %p219 = scmp.ne.s32.totalorder %s205, %s206
      %p220 = scmp.eq.s32.totalorder %s25, 1
      %p221 = por %p219, %p220
      %p223 = scmp.ne.s32.totalorder %s206, %s222
      %p224 = scmp.eq.s32.totalorder %s25, 0
      %p225 = por %p223, %p224
      %p226 = scmp.le.s32.totalorder 1, %s19
      %p227 = scmp.lt.s32.totalorder %s19, 3
      %p228 = pnand %p226, %p227
      %p229 = pneg %p228
      // Predicated region
      $region9: #{tpu_custom_call.1} parent=5 // pred_check
        _
      $region10: #{tpu_custom_call.1} parent=5 // pred_check_branch
        %231 = sbr.rel (%p228) target = $region12
      $region11: #{tpu_custom_call.1} parent=5 // pred_region
        %s232 = ssub.s32 %s19, 1
        // Predicated region
        $region13: #{tpu_custom_call.1} parent=11 // pred_check
          %p233 = pneg %p66
        $region14: #{tpu_custom_call.1} parent=11 // pred_check_branch
          %235 = sbr.rel (%p233) target = $region16
        $region15: #{tpu_custom_call.1} parent=11 // pred_region
          %237 = vsyncadd [#allocation4], 0
          %s238 = sshll.u32 %s1, 4
          %s239 = int_to_ptr.hbm [resolvable:$true] %s238
          %s240 = sshll.u32 [#allocation3], 4
          %s241 = int_to_ptr.vmem [resolvable:$true] %s240
          %246 = dma.hbm_to_vmem [thread:$0]  %s239, 512, %s241, [#allocation4], 128, 128, 8
        $region16: #{tpu_custom_call.1} parent=11 // pred_fallthru
          _
        // Predicated region
        $region17: #{tpu_custom_call.1} parent=11 // pred_check
          %p247 = pneg %p87
        $region18: #{tpu_custom_call.1} parent=11 // pred_check_branch
          %249 = sbr.rel (%p247) target = $region20
        $region19: #{tpu_custom_call.1} parent=11 // pred_region
          %251 = vsyncadd [#allocation7], 0
          %s252 = sshll.u32 %s2, 4
          %s253 = int_to_ptr.hbm [resolvable:$true] %s252
          %s254 = sshll.u32 [#allocation6], 4
          %s255 = int_to_ptr.vmem [resolvable:$true] %s254
          %260 = dma.hbm_to_vmem [thread:$0]  %s253, 512, %s255, [#allocation7], 128, 128, 8
        $region20: #{tpu_custom_call.1} parent=11 // pred_fallthru
          _
        // Predicated region
        $region21: #{tpu_custom_call.1} parent=11 // pred_check
          %p261 = pneg %p108
        $region22: #{tpu_custom_call.1} parent=11 // pred_check_branch
          %263 = sbr.rel (%p261) target = $region24
        $region23: #{tpu_custom_call.1} parent=11 // pred_region
          _
        $region24: #{tpu_custom_call.1} parent=11 // pred_fallthru
          _
        // Predicated region
        $region25: #{tpu_custom_call.1} parent=11 // pred_check
          %p264 = pneg %p129
        $region26: #{tpu_custom_call.1} parent=11 // pred_check_branch
          %266 = sbr.rel (%p264) target = $region28
        $region27: #{tpu_custom_call.1} parent=11 // pred_region
          %268 = vsyncadd [#allocation7], 0
          %s269 = sshll.u32 %s4, 4
          %s270 = int_to_ptr.hbm [resolvable:$true] %s269
          %s271 = sshll.u32 [#allocation8], 4
          %s272 = int_to_ptr.vmem [resolvable:$true] %s271
          %277 = dma.hbm_to_vmem [thread:$0]  %s270, 512, %s272, [#allocation7], 128, 128, 8
        $region28: #{tpu_custom_call.1} parent=11 // pred_fallthru
          _
        // Predicated region
        $region29: #{tpu_custom_call.1} parent=11 // pred_check
          %p278 = pneg %p150
        $region30: #{tpu_custom_call.1} parent=11 // pred_check_branch
          %280 = sbr.rel (%p278) target = $region32
        $region31: #{tpu_custom_call.1} parent=11 // pred_region
          _
        $region32: #{tpu_custom_call.1} parent=11 // pred_fallthru
          _
        // Predicated region
        $region33: #{tpu_custom_call.1} parent=11 // pred_check
          %p281 = pneg %p171
        $region34: #{tpu_custom_call.1} parent=11 // pred_check_branch
          %283 = sbr.rel (%p281) target = $region36
        $region35: #{tpu_custom_call.1} parent=11 // pred_region
          _
        $region36: #{tpu_custom_call.1} parent=11 // pred_fallthru
          _
        // Predicated region
        $region37: #{tpu_custom_call.1} parent=11 // pred_check
          %p284 = pneg %p192
        $region38: #{tpu_custom_call.1} parent=11 // pred_check_branch
          %286 = sbr.rel (%p284) target = $region40
        $region39: #{tpu_custom_call.1} parent=11 // pred_region
          _
        $region40: #{tpu_custom_call.1} parent=11 // pred_fallthru
          _
      $region12: #{tpu_custom_call.1} parent=5 // pred_fallthru
        _
      %p287 = scmp.lt.s32.totalorder %s19, 2
      // Predicated region
      $region41: #{tpu_custom_call.1} parent=5 // pred_check
        %p288 = pneg %p287
      $region42: #{tpu_custom_call.1} parent=5 // pred_check_branch
        %290 = sbr.rel (%p288) target = $region44
      $region43: #{tpu_custom_call.1} parent=5 // pred_region
        // Predicated region
        $region45: #{tpu_custom_call.1} parent=43 // pred_check
          %p291 = pneg %p39
        $region46: #{tpu_custom_call.1} parent=43 // pred_check_branch
          %293 = sbr.rel (%p291) target = $region48
        $region47: #{tpu_custom_call.1} parent=43 // pred_region
          %s294 = smul.u32 8, %s19
          %p295 = scmp.lt.s32.totalorder %s294, 15
          %s296 = scalar_select %p295, %s294, 15
          %s297 = smul.addr %s296, 4
          %s298 = scalar_lea.vmem %s0, %s297
          %s299 = smul.u32 8, %s19
        $region48: #{tpu_custom_call.1} parent=43 // pred_fallthru
          _
      $region44: #{tpu_custom_call.1} parent=5 // pred_fallthru
        _
      %p300 = scmp.le.s32.totalorder 1, %s19
      %p301 = scmp.lt.s32.totalorder %s19, 3
      %p302 = pnand %p300, %p301
      %p303 = pneg %p302
      // Predicated region
      $region49: #{tpu_custom_call.1} parent=5 // pred_check
        _
      $region50: #{tpu_custom_call.1} parent=5 // pred_check_branch
        %305 = sbr.rel (%p302) target = $region52
      $region51: #{tpu_custom_call.1} parent=5 // pred_region
        %s306 = ssub.s32 %s19, 1
        // Predicated region
        $region53: #{tpu_custom_call.1} parent=51 // pred_check
          %p307 = pneg %p66
        $region54: #{tpu_custom_call.1} parent=51 // pred_check_branch
          %309 = sbr.rel (%p307) target = $region56
        $region55: #{tpu_custom_call.1} parent=51 // pred_region
          %311 = dma.done [#allocation4], 512
        $region56: #{tpu_custom_call.1} parent=51 // pred_fallthru
          _
        // Predicated region
        $region57: #{tpu_custom_call.1} parent=51 // pred_check
          %p312 = pneg %p87
        $region58: #{tpu_custom_call.1} parent=51 // pred_check_branch
          %314 = sbr.rel (%p312) target = $region60
        $region59: #{tpu_custom_call.1} parent=51 // pred_region
          %316 = dma.done [#allocation7], 512
        $region60: #{tpu_custom_call.1} parent=51 // pred_fallthru
          _
        // Predicated region
        $region61: #{tpu_custom_call.1} parent=51 // pred_check
          %p317 = pneg %p129
        $region62: #{tpu_custom_call.1} parent=51 // pred_check_branch
          %319 = sbr.rel (%p317) target = $region64
        $region63: #{tpu_custom_call.1} parent=51 // pred_region
          %321 = dma.done [#allocation7], 512
        $region64: #{tpu_custom_call.1} parent=51 // pred_fallthru
          _
        %s322 = smul.u32 8, %s24
        %p323 = scmp.lt.s32.totalorder %s322, 15
        %s324 = scalar_select %p323, %s322, 15
        %s325 = smul.addr %s324, 4
        %s326 = scalar_lea.vmem %s0, %s325
        %p327 = pneg %p45
        %p328 = pneg %p42
        %p329 = pneg %p66
        %p330 = pneg %p63
        %p331 = pneg %p87
        %p332 = pneg %p84
        %p333 = pneg %p108
        %p334 = pneg %p105
        %p335 = pneg %p129
        %p336 = pneg %p126
        %p337 = pneg %p150
        %p338 = pneg %p147
        %p339 = pneg %p171
        %p340 = pneg %p168
        %p341 = pneg %p192
        %p342 = pneg %p189
        %p343 = pneg %p218
        %p344 = pneg %p215
        %s345 = sand.u32 %s205, 1
        %s346 = scalar_lea.sflag [#allocation5], %s345
        %s347 = sand.u32 %s205, 1
        %s348 = smul.addr %s347, 64
        %s349 = scalar_lea.vmem [#allocation9], %s348
        %s350 = smul.u32 8, %s24
        %p351 = scmp.lt.s32.totalorder %s350, 15
        %s352 = scalar_select %p351, %s350, 15
        %s353 = smul.addr %s352, 4
        %s354 = scalar_lea.vmem %s0, %s353
        %s355 = smul.u32 8, %s24
        %s356 = smul.u32 8, %s24
        %v357 = vld [vmem:[%s354] sm:$0xff]
        %v358 = vld [vmem:[%s354 + $0x8] sm:$0xff]
        %v359 = vld [vmem:[%s354 + $0x10] sm:$0xff]
        %v360 = vld [vmem:[%s354 + $0x18] sm:$0xff]
        %361 = vst [vmem:[#allocation2] sm:$0xff] 0.0
        %362 = vst [vmem:[#allocation2 + $0x8] sm:$0xff] 0.0
        %363 = vst [vmem:[#allocation2 + $0x10] sm:$0xff] 0.0
        %364 = vst [vmem:[#allocation2 + $0x18] sm:$0xff] 0.0
        %365 = vst [vmem:[#allocation2 + $0x20] sm:$0xff] 0.0
        %366 = vst [vmem:[#allocation2 + $0x28] sm:$0xff] 0.0
        %367 = vst [vmem:[#allocation2 + $0x30] sm:$0xff] 0.0
        %368 = vst [vmem:[#allocation2 + $0x38] sm:$0xff] 0.0
        %369 = vst [vmem:[#allocation2 + $0x40] sm:$0xff] 0.0
        %370 = vst [vmem:[#allocation2 + $0x48] sm:$0xff] 0.0
        %371 = vst [vmem:[#allocation2 + $0x50] sm:$0xff] 0.0
        %372 = vst [vmem:[#allocation2 + $0x58] sm:$0xff] 0.0
        %373 = vst [vmem:[#allocation2 + $0x60] sm:$0xff] 0.0
        %374 = vst [vmem:[#allocation2 + $0x68] sm:$0xff] 0.0
        %375 = vst [vmem:[#allocation2 + $0x70] sm:$0xff] 0.0
        %376 = vst [vmem:[#allocation2 + $0x78] sm:$0xff] 0.0
        %377 = vst [vmem:[#allocation2 + $0x80] sm:$0xff] 0.0
        %378 = vst [vmem:[#allocation2 + $0x88] sm:$0xff] 0.0
        %379 = vst [vmem:[#allocation2 + $0x90] sm:$0xff] 0.0
        %380 = vst [vmem:[#allocation2 + $0x98] sm:$0xff] 0.0
        %381 = vst [vmem:[#allocation2 + $0xa0] sm:$0xff] 0.0
        %382 = vst [vmem:[#allocation2 + $0xa8] sm:$0xff] 0.0
        %383 = vst [vmem:[#allocation2 + $0xb0] sm:$0xff] 0.0
        %384 = vst [vmem:[#allocation2 + $0xb8] sm:$0xff] 0.0
        %385 = vst [vmem:[#allocation2 + $0xc0] sm:$0xff] 0.0
        %386 = vst [vmem:[#allocation2 + $0xc8] sm:$0xff] 0.0
        %387 = vst [vmem:[#allocation2 + $0xd0] sm:$0xff] 0.0
        %388 = vst [vmem:[#allocation2 + $0xd8] sm:$0xff] 0.0
        %389 = vst [vmem:[#allocation2 + $0xe0] sm:$0xff] 0.0
        %390 = vst [vmem:[#allocation2 + $0xe8] sm:$0xff] 0.0
        %391 = vst [vmem:[#allocation2 + $0xf0] sm:$0xff] 0.0
        %392 = vst [vmem:[#allocation2 + $0xf8] sm:$0xff] 0.0
        %393 = vst [vmem:[#allocation2 + $0x100] sm:$0xff] 0.0
        %394 = vst [vmem:[#allocation2 + $0x108] sm:$0xff] 0.0
        %395 = vst [vmem:[#allocation2 + $0x110] sm:$0xff] 0.0
        %396 = vst [vmem:[#allocation2 + $0x118] sm:$0xff] 0.0
        %397 = vst [vmem:[#allocation2 + $0x120] sm:$0xff] 0.0
        %398 = vst [vmem:[#allocation2 + $0x128] sm:$0xff] 0.0
        %399 = vst [vmem:[#allocation2 + $0x130] sm:$0xff] 0.0
        %400 = vst [vmem:[#allocation2 + $0x138] sm:$0xff] 0.0
        %401 = vst [vmem:[#allocation2 + $0x140] sm:$0xff] 0.0
        %402 = vst [vmem:[#allocation2 + $0x148] sm:$0xff] 0.0
        %403 = vst [vmem:[#allocation2 + $0x150] sm:$0xff] 0.0
        %404 = vst [vmem:[#allocation2 + $0x158] sm:$0xff] 0.0
        %405 = vst [vmem:[#allocation2 + $0x160] sm:$0xff] 0.0
        %406 = vst [vmem:[#allocation2 + $0x168] sm:$0xff] 0.0
        %407 = vst [vmem:[#allocation2 + $0x170] sm:$0xff] 0.0
        %408 = vst [vmem:[#allocation2 + $0x178] sm:$0xff] 0.0
        %409 = vst [vmem:[#allocation2 + $0x180] sm:$0xff] 0.0
        %410 = vst [vmem:[#allocation2 + $0x188] sm:$0xff] 0.0
        %411 = vst [vmem:[#allocation2 + $0x190] sm:$0xff] 0.0
        %412 = vst [vmem:[#allocation2 + $0x198] sm:$0xff] 0.0
        %413 = vst [vmem:[#allocation2 + $0x1a0] sm:$0xff] 0.0
        %414 = vst [vmem:[#allocation2 + $0x1a8] sm:$0xff] 0.0
        %415 = vst [vmem:[#allocation2 + $0x1b0] sm:$0xff] 0.0
        %416 = vst [vmem:[#allocation2 + $0x1b8] sm:$0xff] 0.0
        %417 = vst [vmem:[#allocation2 + $0x1c0] sm:$0xff] 0.0
        %418 = vst [vmem:[#allocation2 + $0x1c8] sm:$0xff] 0.0
        %419 = vst [vmem:[#allocation2 + $0x1d0] sm:$0xff] 0.0
        %420 = vst [vmem:[#allocation2 + $0x1d8] sm:$0xff] 0.0
        %421 = vst [vmem:[#allocation2 + $0x1e0] sm:$0xff] 0.0
        %422 = vst [vmem:[#allocation2 + $0x1e8] sm:$0xff] 0.0
        %423 = vst [vmem:[#allocation2 + $0x1f0] sm:$0xff] 0.0
        %424 = vst [vmem:[#allocation2 + $0x1f8] sm:$0xff] 0.0
        %425 = vst [vmem:[#allocation2 + $0x200] sm:$0xff] 0.0
        %426 = vst [vmem:[#allocation2 + $0x208] sm:$0xff] 0.0
        %427 = vst [vmem:[#allocation2 + $0x210] sm:$0xff] 0.0
        %428 = vst [vmem:[#allocation2 + $0x218] sm:$0xff] 0.0
        %429 = vst [vmem:[#allocation2 + $0x220] sm:$0xff] 0.0
        %430 = vst [vmem:[#allocation2 + $0x228] sm:$0xff] 0.0
        %431 = vst [vmem:[#allocation2 + $0x230] sm:$0xff] 0.0
        %432 = vst [vmem:[#allocation2 + $0x238] sm:$0xff] 0.0
        %433 = vst [vmem:[#allocation2 + $0x240] sm:$0xff] 0.0
        %434 = vst [vmem:[#allocation2 + $0x248] sm:$0xff] 0.0
        %435 = vst [vmem:[#allocation2 + $0x250] sm:$0xff] 0.0
        %436 = vst [vmem:[#allocation2 + $0x258] sm:$0xff] 0.0
        %437 = vst [vmem:[#allocation2 + $0x260] sm:$0xff] 0.0
        %438 = vst [vmem:[#allocation2 + $0x268] sm:$0xff] 0.0
        %439 = vst [vmem:[#allocation2 + $0x270] sm:$0xff] 0.0
        %440 = vst [vmem:[#allocation2 + $0x278] sm:$0xff] 0.0
        %441 = vst [vmem:[#allocation2] ss:$8 sm:$0xf] 1.0
        %442 = vst [vmem:[#allocation2] ss:$8 sm:$0xf0] 1.0
        %447 = vst [vmem:[#allocation1] ss:$2 sm:$0xff] %v357
        %s448 = scalar_lea.vmem [#allocation1], 16
        %449 = vst [vmem:[%s448] ss:$2 sm:$0xff] %v358
        %s450 = scalar_lea.vmem [#allocation1], 32
        %451 = vst [vmem:[%s450] ss:$2 sm:$0xff] %v359
        %s452 = scalar_lea.vmem [#allocation1], 48
        %453 = vst [vmem:[%s452] ss:$2 sm:$0xff] %v360
        %v454 = vld.sshfl [vmem:[#allocation1] sm:$0xff pattern:$0x75316420]
        %v455 = vld.sshfl [vmem:[#allocation1 + $0x8] sm:$0xff pattern:$0x75316420]
        %v456 = vld.sshfl [vmem:[#allocation1 + $0x10] sm:$0xff pattern:$0x75316420]
        %v457 = vld.sshfl [vmem:[#allocation1 + $0x18] sm:$0xff pattern:$0x75316420]
        %v458 = vld.sshfl [vmem:[#allocation1 + $0x20] sm:$0xff pattern:$0x75316420]
        %v459 = vld.sshfl [vmem:[#allocation1 + $0x28] sm:$0xff pattern:$0x75316420]
        %v460 = vld.sshfl [vmem:[#allocation1 + $0x30] sm:$0xff pattern:$0x75316420]
        %v461 = vld.sshfl [vmem:[#allocation1 + $0x38] sm:$0xff pattern:$0x75316420]
        %470 = vst [vmem:[#allocation2 + $0x40] sm:$0xf] %v454
        %471 = vst [vmem:[#allocation2 + $0x48] sm:$0xf] %v455
        %472 = vst [vmem:[#allocation2 + $0x50] sm:$0xf] %v456
        %473 = vst [vmem:[#allocation2 + $0x58] sm:$0xf] %v457
        %474 = vst [vmem:[#allocation2 + $0x60] sm:$0xf] %v458
        %475 = vst [vmem:[#allocation2 + $0x68] sm:$0xf] %v459
        %476 = vst [vmem:[#allocation2 + $0x70] sm:$0xf] %v460
        %477 = vst [vmem:[#allocation2 + $0x78] sm:$0xf] %v461
        %v478 = vand.u32 2147483647, %v357
        %vm479 = vcmp.le.f32.partialorder %v478, 0.7853982
        %vm480 = vcmp.lt.s32.totalorder %v357, 0
        %v481 = vand.u32 %v357, 2139095040
        %v482 = vshrl.u32 %v481, 23
        %v483 = vsub.s32 %v482, 127
        %v484 = vand.u32 2147483647, %v357
        %v485 = vand.u32 %v484, 8388607
        %v486 = vor.u32 %v485, 8388608
        %v487 = vsub.s32 0, %v486
        %v488 = vadd.s32 %v483, 1
        %vm489 = vcmp.gt.s32.totalorder %v488, 0
        %v490 = vsel %vm489, %v488, 0
        %v491 = vshrl.u32 %v490, 5
        %v492 = vand.u32 %v490, 31
        %v493 = vsub.s32 32, %v492
        %v494 = vshrl.u32 683565275, %v493
        %v495 = vshll.u32 683565275, %v492
        %v496 = vshrl.u32 2475754826, %v493
        %v497 = vor.u32 %v495, %v496
        %v498 = vshll.u32 2475754826, %v492
        %v499 = vshrl.u32 2131351028, %v493
        %v500 = vor.u32 %v498, %v499
        %v501 = vshll.u32 2131351028, %v492
        %v502 = vshrl.u32 2102212464, %v493
        %v503 = vor.u32 %v501, %v502
        %v504 = vshll.u32 2102212464, %v492
        %v505 = vshrl.u32 920167782, %v493
        %v506 = vor.u32 %v504, %v505
        %v507 = vshll.u32 920167782, %v492
        %v508 = vshrl.u32 1326507024, %v493
        %v509 = vor.u32 %v507, %v508
        %vm510 = vcmp.lt.s32.totalorder %v491, 1
        %vm511 = vcmp.lt.s32.totalorder %v491, 2
        %vm512 = vcmp.lt.s32.totalorder %v491, 3
        %vm513 = vcmp.lt.s32.totalorder %v491, 4
        %v514 = vsel %vm510, %v494, %v497
        %v515 = vsel %vm513, %v503, 2102212464
        %v516 = vsel %vm512, %v500, %v515
        %v517 = vsel %vm511, %v514, %v516
        %v518 = vsel %vm510, %v497, %v500
        %v519 = vsel %vm513, %v506, 920167782
        %v520 = vsel %vm512, %v503, %v519
        %v521 = vsel %vm511, %v518, %v520
        %v522 = vsel %vm510, %v500, %v503
        %v523 = vsel %vm513, %v509, 1326507024
        %v524 = vsel %vm512, %v506, %v523
        %v525 = vsel %vm511, %v522, %v524
        %v526 = vshll.u32 %v486, 8
        %v527 = vand.u32 %v526, 65535
        %v528 = vshrl.u32 %v526, 16
        %v529 = vand.u32 %v525, 65535
        %v530 = vshrl.u32 %v525, 16
        %v531 = vmul.u32 %v527, %v529
        %v532 = vmul.u32 %v527, %v530
        %v533 = vmul.u32 %v528, %v529
        %v534 = vmul.u32 %v528, %v530
        %v535 = vshll.u32 %v532, 16
        %v536 = vshrl.u32 %v532, 16
        %v537 = vshll.u32 %v533, 16
        %v538 = vshrl.u32 %v533, 16
        %vm539 = vc.u32 %v531, %v535
        %v540 = vsel %vm539, 1, 0
        %v541 = vadd.s32 %v531, %v535
        %v542 = vadd.s32 %v534, %v540
        %vm543 = vc.u32 %v541, %v537
        %v544 = vsel %vm543, 1, 0
        %v545 = vadd.s32 %v541, %v537
        %v546 = vadd.s32 %v542, %v544
        %v547 = vadd.s32 %v546, %v536
        %v548 = vadd.s32 %v547, %v538
        %v549 = vand.u32 %v526, 65535
        %v550 = vshrl.u32 %v526, 16
        %v551 = vand.u32 %v521, 65535
        %v552 = vshrl.u32 %v521, 16
        %v553 = vmul.u32 %v549, %v551
        %v554 = vmul.u32 %v549, %v552
        %v555 = vmul.u32 %v550, %v551
        %v556 = vmul.u32 %v550, %v552
        %v557 = vshll.u32 %v554, 16
        %v558 = vshrl.u32 %v554, 16
        %v559 = vshll.u32 %v555, 16
        %v560 = vshrl.u32 %v555, 16
        %vm561 = vc.u32 %v553, %v557
        %v562 = vsel %vm561, 1, 0
        %v563 = vadd.s32 %v553, %v557
        %v564 = vadd.s32 %v556, %v562
        %vm565 = vc.u32 %v563, %v559
        %v566 = vsel %vm565, 1, 0
        %v567 = vadd.s32 %v563, %v559
        %v568 = vadd.s32 %v564, %v566
        %v569 = vadd.s32 %v568, %v558
        %v570 = vadd.s32 %v569, %v560
        %v571 = vmul.u32 %v526, %v517
        %v572 = vadd.s32 %v548, %v567
        %vm573 = vc.u32 %v548, %v567
        %v574 = vadd.s32 %v570, 1
        %v575 = vsel %vm573, %v574, %v570
        %v576 = vadd.s32 %v571, %v575
        %v577 = vadd.s32 %v576, 536870912
        %v578 = vshrl.u32 %v577, 30
        %v579 = vshll.u32 %v578, 30
        %v580 = vsub.s32 %v576, %v579
        %vm581 = vcmp.lt.s32.totalorder %v580, 0
        %v582 = vsub.s32 0, %v580
        %v583 = vsel %vm581, %v582, %v580
        %v584 = vclz %v583
        %v585 = vsub.s32 %v584, 2
        %vm586 = vcmp.gt.s32.totalorder 0, %v585
        %v587 = vsel %vm586, 0, %v585
        %v588 = vsub.s32 32, %v587
        %v589 = vshll.u32 %v580, %v587
        %v590 = vshrl.u32 %v572, %v588
        %v591 = vor.u32 %v589, %v590
        %v592 = vsub.s32 4294967266, %v587
        %v593 = vadd.s32 %v592, 127
        %v594 = vshll.u32 %v593, 23
        %v595 = vor.u32 4788187, %v594
        %v596 = vand.u32 2147483647, %v595
        %v598 = vcvt.s32.f32 %v591
        %v599 = vmul.f32 %v598, %v596
        %v600 = vxor.u32 %v599, 2147483648
        %v601 = vsel %vm480, %v600, %v599
        %v602 = vsub.s32 4, %v578
        %v603 = vsel %vm480, %v602, %v578
        %v604 = vsel %vm479, %v357, %v601
        %v605 = vsel %vm479, 0, %v603
        %v606 = vmul.f32 %v604, %v604
        %v607 = vmul.f32 %v606, -0.001358992
        %v608 = vadd.f32 %v607, 0.041655596
        %v609 = vmul.f32 %v606, %v608
        %v610 = vadd.f32 %v609, -0.4999988
        %v611 = vmul.f32 %v606, %v610
        %v612 = vadd.f32 1.0, %v611
        %v613 = vmul.f32 %v604, %v604
        %v614 = vmul.f32 %v613, -0.00019511016
        %v615 = vadd.f32 %v614, 0.008332121
        %v616 = vmul.f32 %v613, %v615
        %v617 = vadd.f32 %v616, -0.16666654
        %v618 = vmul.f32 %v613, %v617
        %v619 = vadd.f32 %v618, 1.0
        %v620 = vmul.f32 %v619, %v604
        %vm621 = vweird.f32 %v357
        %v622 = vadd.s32 %v605, 3
        %v623 = vand.u32 %v622, 3
        %vm624 = vcmp.lt.s32.totalorder %v623, 2
        %vm625 = vcmp.eq.s32.totalorder %v623, 0
        %v626 = vxor.u32 %v620, 2147483648
        %v627 = vsel %vm625, %v612, %v626
        %vm628 = vcmp.eq.s32.totalorder %v623, 2
        %v629 = vxor.u32 %v612, 2147483648
        %v630 = vsel %vm628, %v629, %v620
        %v631 = vsel %vm624, %v627, %v630
        %v632 = vsel %vm621, nan, %v631
        %v633 = vand.u32 2147483647, %v358
        %vm634 = vcmp.le.f32.partialorder %v633, 0.7853982
        %vm635 = vcmp.lt.s32.totalorder %v358, 0
        %v636 = vand.u32 %v358, 2139095040
        %v637 = vshrl.u32 %v636, 23
        %v638 = vsub.s32 %v637, 127
        %v639 = vand.u32 2147483647, %v358
        %v640 = vand.u32 %v639, 8388607
        %v641 = vor.u32 %v640, 8388608
        %v642 = vsub.s32 0, %v641
        %v643 = vadd.s32 %v638, 1
        %vm644 = vcmp.gt.s32.totalorder %v643, 0
        %v645 = vsel %vm644, %v643, 0
        %v646 = vshrl.u32 %v645, 5
        %v647 = vand.u32 %v645, 31
        %v648 = vsub.s32 32, %v647
        %v649 = vshrl.u32 683565275, %v648
        %v650 = vshll.u32 683565275, %v647
        %v651 = vshrl.u32 2475754826, %v648
        %v652 = vor.u32 %v650, %v651
        %v653 = vshll.u32 2475754826, %v647
        %v654 = vshrl.u32 2131351028, %v648
        %v655 = vor.u32 %v653, %v654
        %v656 = vshll.u32 2131351028, %v647
        %v657 = vshrl.u32 2102212464, %v648
        %v658 = vor.u32 %v656, %v657
        %v659 = vshll.u32 2102212464, %v647
        %v660 = vshrl.u32 920167782, %v648
        %v661 = vor.u32 %v659, %v660
        %v662 = vshll.u32 920167782, %v647
        %v663 = vshrl.u32 1326507024, %v648
        %v664 = vor.u32 %v662, %v663
        %vm665 = vcmp.lt.s32.totalorder %v646, 1
        %vm666 = vcmp.lt.s32.totalorder %v646, 2
        %vm667 = vcmp.lt.s32.totalorder %v646, 3
        %vm668 = vcmp.lt.s32.totalorder %v646, 4
        %v669 = vsel %vm665, %v649, %v652
        %v670 = vsel %vm668, %v658, 2102212464
        %v671 = vsel %vm667, %v655, %v670
        %v672 = vsel %vm666, %v669, %v671
        %v673 = vsel %vm665, %v652, %v655
        %v674 = vsel %vm668, %v661, 920167782
        %v675 = vsel %vm667, %v658, %v674
        %v676 = vsel %vm666, %v673, %v675
        %v677 = vsel %vm665, %v655, %v658
        %v678 = vsel %vm668, %v664, 1326507024
        %v679 = vsel %vm667, %v661, %v678
        %v680 = vsel %vm666, %v677, %v679
        %v681 = vshll.u32 %v641, 8
        %v682 = vand.u32 %v681, 65535
        %v683 = vshrl.u32 %v681, 16
        %v684 = vand.u32 %v680, 65535
        %v685 = vshrl.u32 %v680, 16
        %v686 = vmul.u32 %v682, %v684
        %v687 = vmul.u32 %v682, %v685
        %v688 = vmul.u32 %v683, %v684
        %v689 = vmul.u32 %v683, %v685
        %v690 = vshll.u32 %v687, 16
        %v691 = vshrl.u32 %v687, 16
        %v692 = vshll.u32 %v688, 16
        %v693 = vshrl.u32 %v688, 16
        %vm694 = vc.u32 %v686, %v690
        %v695 = vsel %vm694, 1, 0
        %v696 = vadd.s32 %v686, %v690
        %v697 = vadd.s32 %v689, %v695
        %vm698 = vc.u32 %v696, %v692
        %v699 = vsel %vm698, 1, 0
        %v700 = vadd.s32 %v696, %v692
        %v701 = vadd.s32 %v697, %v699
        %v702 = vadd.s32 %v701, %v691
        %v703 = vadd.s32 %v702, %v693
        %v704 = vand.u32 %v681, 65535
        %v705 = vshrl.u32 %v681, 16
        %v706 = vand.u32 %v676, 65535
        %v707 = vshrl.u32 %v676, 16
        %v708 = vmul.u32 %v704, %v706
        %v709 = vmul.u32 %v704, %v707
        %v710 = vmul.u32 %v705, %v706
        %v711 = vmul.u32 %v705, %v707
        %v712 = vshll.u32 %v709, 16
        %v713 = vshrl.u32 %v709, 16
        %v714 = vshll.u32 %v710, 16
        %v715 = vshrl.u32 %v710, 16
        %vm716 = vc.u32 %v708, %v712
        %v717 = vsel %vm716, 1, 0
        %v718 = vadd.s32 %v708, %v712
        %v719 = vadd.s32 %v711, %v717
        %vm720 = vc.u32 %v718, %v714
        %v721 = vsel %vm720, 1, 0
        %v722 = vadd.s32 %v718, %v714
        %v723 = vadd.s32 %v719, %v721
        %v724 = vadd.s32 %v723, %v713
        %v725 = vadd.s32 %v724, %v715
        %v726 = vmul.u32 %v681, %v672
        %v727 = vadd.s32 %v703, %v722
        %vm728 = vc.u32 %v703, %v722
        %v729 = vadd.s32 %v725, 1
        %v730 = vsel %vm728, %v729, %v725
        %v731 = vadd.s32 %v726, %v730
        %v732 = vadd.s32 %v731, 536870912
        %v733 = vshrl.u32 %v732, 30
        %v734 = vshll.u32 %v733, 30
        %v735 = vsub.s32 %v731, %v734
        %vm736 = vcmp.lt.s32.totalorder %v735, 0
        %v737 = vsub.s32 0, %v735
        %v738 = vsel %vm736, %v737, %v735
        %v739 = vclz %v738
        %v740 = vsub.s32 %v739, 2
        %vm741 = vcmp.gt.s32.totalorder 0, %v740
        %v742 = vsel %vm741, 0, %v740
        %v743 = vsub.s32 32, %v742
        %v744 = vshll.u32 %v735, %v742
        %v745 = vshrl.u32 %v727, %v743
        %v746 = vor.u32 %v744, %v745
        %v747 = vsub.s32 4294967266, %v742
        %v748 = vadd.s32 %v747, 127
        %v749 = vshll.u32 %v748, 23
        %v750 = vor.u32 4788187, %v749
        %v751 = vand.u32 2147483647, %v750
        %v753 = vcvt.s32.f32 %v746
        %v754 = vmul.f32 %v753, %v751
        %v755 = vxor.u32 %v754, 2147483648
        %v756 = vsel %vm635, %v755, %v754
        %v757 = vsub.s32 4, %v733
        %v758 = vsel %vm635, %v757, %v733
        %v759 = vsel %vm634, %v358, %v756
        %v760 = vsel %vm634, 0, %v758
        %v761 = vmul.f32 %v759, %v759
        %v762 = vmul.f32 %v761, -0.001358992
        %v763 = vadd.f32 %v762, 0.041655596
        %v764 = vmul.f32 %v761, %v763
        %v765 = vadd.f32 %v764, -0.4999988
        %v766 = vmul.f32 %v761, %v765
        %v767 = vadd.f32 1.0, %v766
        %v768 = vmul.f32 %v759, %v759
        %v769 = vmul.f32 %v768, -0.00019511016
        %v770 = vadd.f32 %v769, 0.008332121
        %v771 = vmul.f32 %v768, %v770
        %v772 = vadd.f32 %v771, -0.16666654
        %v773 = vmul.f32 %v768, %v772
        %v774 = vadd.f32 %v773, 1.0
        %v775 = vmul.f32 %v774, %v759
        %vm776 = vweird.f32 %v358
        %v777 = vadd.s32 %v760, 3
        %v778 = vand.u32 %v777, 3
        %vm779 = vcmp.lt.s32.totalorder %v778, 2
        %vm780 = vcmp.eq.s32.totalorder %v778, 0
        %v781 = vxor.u32 %v775, 2147483648
        %v782 = vsel %vm780, %v767, %v781
        %vm783 = vcmp.eq.s32.totalorder %v778, 2
        %v784 = vxor.u32 %v767, 2147483648
        %v785 = vsel %vm783, %v784, %v775
        %v786 = vsel %vm779, %v782, %v785
        %v787 = vsel %vm776, nan, %v786
        %v788 = vand.u32 2147483647, %v359
        %vm789 = vcmp.le.f32.partialorder %v788, 0.7853982
        %vm790 = vcmp.lt.s32.totalorder %v359, 0
        %v791 = vand.u32 %v359, 2139095040
        %v792 = vshrl.u32 %v791, 23
        %v793 = vsub.s32 %v792, 127
        %v794 = vand.u32 2147483647, %v359
        %v795 = vand.u32 %v794, 8388607
        %v796 = vor.u32 %v795, 8388608
        %v797 = vsub.s32 0, %v796
        %v798 = vadd.s32 %v793, 1
        %vm799 = vcmp.gt.s32.totalorder %v798, 0
        %v800 = vsel %vm799, %v798, 0
        %v801 = vshrl.u32 %v800, 5
        %v802 = vand.u32 %v800, 31
        %v803 = vsub.s32 32, %v802
        %v804 = vshrl.u32 683565275, %v803
        %v805 = vshll.u32 683565275, %v802
        %v806 = vshrl.u32 2475754826, %v803
        %v807 = vor.u32 %v805, %v806
        %v808 = vshll.u32 2475754826, %v802
        %v809 = vshrl.u32 2131351028, %v803
        %v810 = vor.u32 %v808, %v809
        %v811 = vshll.u32 2131351028, %v802
        %v812 = vshrl.u32 2102212464, %v803
        %v813 = vor.u32 %v811, %v812
        %v814 = vshll.u32 2102212464, %v802
        %v815 = vshrl.u32 920167782, %v803
        %v816 = vor.u32 %v814, %v815
        %v817 = vshll.u32 920167782, %v802
        %v818 = vshrl.u32 1326507024, %v803
        %v819 = vor.u32 %v817, %v818
        %vm820 = vcmp.lt.s32.totalorder %v801, 1
        %vm821 = vcmp.lt.s32.totalorder %v801, 2
        %vm822 = vcmp.lt.s32.totalorder %v801, 3
        %vm823 = vcmp.lt.s32.totalorder %v801, 4
        %v824 = vsel %vm820, %v804, %v807
        %v825 = vsel %vm823, %v813, 2102212464
        %v826 = vsel %vm822, %v810, %v825
        %v827 = vsel %vm821, %v824, %v826
        %v828 = vsel %vm820, %v807, %v810
        %v829 = vsel %vm823, %v816, 920167782
        %v830 = vsel %vm822, %v813, %v829
        %v831 = vsel %vm821, %v828, %v830
        %v832 = vsel %vm820, %v810, %v813
        %v833 = vsel %vm823, %v819, 1326507024
        %v834 = vsel %vm822, %v816, %v833
        %v835 = vsel %vm821, %v832, %v834
        %v836 = vshll.u32 %v796, 8
        %v837 = vand.u32 %v836, 65535
        %v838 = vshrl.u32 %v836, 16
        %v839 = vand.u32 %v835, 65535
        %v840 = vshrl.u32 %v835, 16
        %v841 = vmul.u32 %v837, %v839
        %v842 = vmul.u32 %v837, %v840
        %v843 = vmul.u32 %v838, %v839
        %v844 = vmul.u32 %v838, %v840
        %v845 = vshll.u32 %v842, 16
        %v846 = vshrl.u32 %v842, 16
        %v847 = vshll.u32 %v843, 16
        %v848 = vshrl.u32 %v843, 16
        %vm849 = vc.u32 %v841, %v845
        %v850 = vsel %vm849, 1, 0
        %v851 = vadd.s32 %v841, %v845
        %v852 = vadd.s32 %v844, %v850
        %vm853 = vc.u32 %v851, %v847
        %v854 = vsel %vm853, 1, 0
        %v855 = vadd.s32 %v851, %v847
        %v856 = vadd.s32 %v852, %v854
        %v857 = vadd.s32 %v856, %v846
        %v858 = vadd.s32 %v857, %v848
        %v859 = vand.u32 %v836, 65535
        %v860 = vshrl.u32 %v836, 16
        %v861 = vand.u32 %v831, 65535
        %v862 = vshrl.u32 %v831, 16
        %v863 = vmul.u32 %v859, %v861
        %v864 = vmul.u32 %v859, %v862
        %v865 = vmul.u32 %v860, %v861
        %v866 = vmul.u32 %v860, %v862
        %v867 = vshll.u32 %v864, 16
        %v868 = vshrl.u32 %v864, 16
        %v869 = vshll.u32 %v865, 16
        %v870 = vshrl.u32 %v865, 16
        %vm871 = vc.u32 %v863, %v867
        %v872 = vsel %vm871, 1, 0
        %v873 = vadd.s32 %v863, %v867
        %v874 = vadd.s32 %v866, %v872
        %vm875 = vc.u32 %v873, %v869
        %v876 = vsel %vm875, 1, 0
        %v877 = vadd.s32 %v873, %v869
        %v878 = vadd.s32 %v874, %v876
        %v879 = vadd.s32 %v878, %v868
        %v880 = vadd.s32 %v879, %v870
        %v881 = vmul.u32 %v836, %v827
        %v882 = vadd.s32 %v858, %v877
        %vm883 = vc.u32 %v858, %v877
        %v884 = vadd.s32 %v880, 1
        %v885 = vsel %vm883, %v884, %v880
        %v886 = vadd.s32 %v881, %v885
        %v887 = vadd.s32 %v886, 536870912
        %v888 = vshrl.u32 %v887, 30
        %v889 = vshll.u32 %v888, 30
        %v890 = vsub.s32 %v886, %v889
        %vm891 = vcmp.lt.s32.totalorder %v890, 0
        %v892 = vsub.s32 0, %v890
        %v893 = vsel %vm891, %v892, %v890
        %v894 = vclz %v893
        %v895 = vsub.s32 %v894, 2
        %vm896 = vcmp.gt.s32.totalorder 0, %v895
        %v897 = vsel %vm896, 0, %v895
        %v898 = vsub.s32 32, %v897
        %v899 = vshll.u32 %v890, %v897
        %v900 = vshrl.u32 %v882, %v898
        %v901 = vor.u32 %v899, %v900
        %v902 = vsub.s32 4294967266, %v897
        %v903 = vadd.s32 %v902, 127
        %v904 = vshll.u32 %v903, 23
        %v905 = vor.u32 4788187, %v904
        %v906 = vand.u32 2147483647, %v905
        %v908 = vcvt.s32.f32 %v901
        %v909 = vmul.f32 %v908, %v906
        %v910 = vxor.u32 %v909, 2147483648
        %v911 = vsel %vm790, %v910, %v909
        %v912 = vsub.s32 4, %v888
        %v913 = vsel %vm790, %v912, %v888
        %v914 = vsel %vm789, %v359, %v911
        %v915 = vsel %vm789, 0, %v913
        %v916 = vmul.f32 %v914, %v914
        %v917 = vmul.f32 %v916, -0.001358992
        %v918 = vadd.f32 %v917, 0.041655596
        %v919 = vmul.f32 %v916, %v918
        %v920 = vadd.f32 %v919, -0.4999988
        %v921 = vmul.f32 %v916, %v920
        %v922 = vadd.f32 1.0, %v921
        %v923 = vmul.f32 %v914, %v914
        %v924 = vmul.f32 %v923, -0.00019511016
        %v925 = vadd.f32 %v924, 0.008332121
        %v926 = vmul.f32 %v923, %v925
        %v927 = vadd.f32 %v926, -0.16666654
        %v928 = vmul.f32 %v923, %v927
        %v929 = vadd.f32 %v928, 1.0
        %v930 = vmul.f32 %v929, %v914
        %vm931 = vweird.f32 %v359
        %v932 = vadd.s32 %v915, 3
        %v933 = vand.u32 %v932, 3
        %vm934 = vcmp.lt.s32.totalorder %v933, 2
        %vm935 = vcmp.eq.s32.totalorder %v933, 0
        %v936 = vxor.u32 %v930, 2147483648
        %v937 = vsel %vm935, %v922, %v936
        %vm938 = vcmp.eq.s32.totalorder %v933, 2
        %v939 = vxor.u32 %v922, 2147483648
        %v940 = vsel %vm938, %v939, %v930
        %v941 = vsel %vm934, %v937, %v940
        %v942 = vsel %vm931, nan, %v941
        %v943 = vand.u32 2147483647, %v360
        %vm944 = vcmp.le.f32.partialorder %v943, 0.7853982
        %vm945 = vcmp.lt.s32.totalorder %v360, 0
        %v946 = vand.u32 %v360, 2139095040
        %v947 = vshrl.u32 %v946, 23
        %v948 = vsub.s32 %v947, 127
        %v949 = vand.u32 2147483647, %v360
        %v950 = vand.u32 %v949, 8388607
        %v951 = vor.u32 %v950, 8388608
        %v952 = vsub.s32 0, %v951
        %v953 = vadd.s32 %v948, 1
        %vm954 = vcmp.gt.s32.totalorder %v953, 0
        %v955 = vsel %vm954, %v953, 0
        %v956 = vshrl.u32 %v955, 5
        %v957 = vand.u32 %v955, 31
        %v958 = vsub.s32 32, %v957
        %v959 = vshrl.u32 683565275, %v958
        %v960 = vshll.u32 683565275, %v957
        %v961 = vshrl.u32 2475754826, %v958
        %v962 = vor.u32 %v960, %v961
        %v963 = vshll.u32 2475754826, %v957
        %v964 = vshrl.u32 2131351028, %v958
        %v965 = vor.u32 %v963, %v964
        %v966 = vshll.u32 2131351028, %v957
        %v967 = vshrl.u32 2102212464, %v958
        %v968 = vor.u32 %v966, %v967
        %v969 = vshll.u32 2102212464, %v957
        %v970 = vshrl.u32 920167782, %v958
        %v971 = vor.u32 %v969, %v970
        %v972 = vshll.u32 920167782, %v957
        %v973 = vshrl.u32 1326507024, %v958
        %v974 = vor.u32 %v972, %v973
        %vm975 = vcmp.lt.s32.totalorder %v956, 1
        %vm976 = vcmp.lt.s32.totalorder %v956, 2
        %vm977 = vcmp.lt.s32.totalorder %v956, 3
        %vm978 = vcmp.lt.s32.totalorder %v956, 4
        %v979 = vsel %vm975, %v959, %v962
        %v980 = vsel %vm978, %v968, 2102212464
        %v981 = vsel %vm977, %v965, %v980
        %v982 = vsel %vm976, %v979, %v981
        %v983 = vsel %vm975, %v962, %v965
        %v984 = vsel %vm978, %v971, 920167782
        %v985 = vsel %vm977, %v968, %v984
        %v986 = vsel %vm976, %v983, %v985
        %v987 = vsel %vm975, %v965, %v968
        %v988 = vsel %vm978, %v974, 1326507024
        %v989 = vsel %vm977, %v971, %v988
        %v990 = vsel %vm976, %v987, %v989
        %v991 = vshll.u32 %v951, 8
        %v992 = vand.u32 %v991, 65535
        %v993 = vshrl.u32 %v991, 16
        %v994 = vand.u32 %v990, 65535
        %v995 = vshrl.u32 %v990, 16
        %v996 = vmul.u32 %v992, %v994
        %v997 = vmul.u32 %v992, %v995
        %v998 = vmul.u32 %v993, %v994
        %v999 = vmul.u32 %v993, %v995
        %v1000 = vshll.u32 %v997, 16
        %v1001 = vshrl.u32 %v997, 16
        %v1002 = vshll.u32 %v998, 16
        %v1003 = vshrl.u32 %v998, 16
        %vm1004 = vc.u32 %v996, %v1000
        %v1005 = vsel %vm1004, 1, 0
        %v1006 = vadd.s32 %v996, %v1000
        %v1007 = vadd.s32 %v999, %v1005
        %vm1008 = vc.u32 %v1006, %v1002
        %v1009 = vsel %vm1008, 1, 0
        %v1010 = vadd.s32 %v1006, %v1002
        %v1011 = vadd.s32 %v1007, %v1009
        %v1012 = vadd.s32 %v1011, %v1001
        %v1013 = vadd.s32 %v1012, %v1003
        %v1014 = vand.u32 %v991, 65535
        %v1015 = vshrl.u32 %v991, 16
        %v1016 = vand.u32 %v986, 65535
        %v1017 = vshrl.u32 %v986, 16
        %v1018 = vmul.u32 %v1014, %v1016
        %v1019 = vmul.u32 %v1014, %v1017
        %v1020 = vmul.u32 %v1015, %v1016
        %v1021 = vmul.u32 %v1015, %v1017
        %v1022 = vshll.u32 %v1019, 16
        %v1023 = vshrl.u32 %v1019, 16
        %v1024 = vshll.u32 %v1020, 16
        %v1025 = vshrl.u32 %v1020, 16
        %vm1026 = vc.u32 %v1018, %v1022
        %v1027 = vsel %vm1026, 1, 0
        %v1028 = vadd.s32 %v1018, %v1022
        %v1029 = vadd.s32 %v1021, %v1027
        %vm1030 = vc.u32 %v1028, %v1024
        %v1031 = vsel %vm1030, 1, 0
        %v1032 = vadd.s32 %v1028, %v1024
        %v1033 = vadd.s32 %v1029, %v1031
        %v1034 = vadd.s32 %v1033, %v1023
        %v1035 = vadd.s32 %v1034, %v1025
        %v1036 = vmul.u32 %v991, %v982
        %v1037 = vadd.s32 %v1013, %v1032
        %vm1038 = vc.u32 %v1013, %v1032
        %v1039 = vadd.s32 %v1035, 1
        %v1040 = vsel %vm1038, %v1039, %v1035
        %v1041 = vadd.s32 %v1036, %v1040
        %v1042 = vadd.s32 %v1041, 536870912
        %v1043 = vshrl.u32 %v1042, 30
        %v1044 = vshll.u32 %v1043, 30
        %v1045 = vsub.s32 %v1041, %v1044
        %vm1046 = vcmp.lt.s32.totalorder %v1045, 0
        %v1047 = vsub.s32 0, %v1045
        %v1048 = vsel %vm1046, %v1047, %v1045
        %v1049 = vclz %v1048
        %v1050 = vsub.s32 %v1049, 2
        %vm1051 = vcmp.gt.s32.totalorder 0, %v1050
        %v1052 = vsel %vm1051, 0, %v1050
        %v1053 = vsub.s32 32, %v1052
        %v1054 = vshll.u32 %v1045, %v1052
        %v1055 = vshrl.u32 %v1037, %v1053
        %v1056 = vor.u32 %v1054, %v1055
        %v1057 = vsub.s32 4294967266, %v1052
        %v1058 = vadd.s32 %v1057, 127
        %v1059 = vshll.u32 %v1058, 23
        %v1060 = vor.u32 4788187, %v1059
        %v1061 = vand.u32 2147483647, %v1060
        %v1063 = vcvt.s32.f32 %v1056
        %v1064 = vmul.f32 %v1063, %v1061
        %v1065 = vxor.u32 %v1064, 2147483648
        %v1066 = vsel %vm945, %v1065, %v1064
        %v1067 = vsub.s32 4, %v1043
        %v1068 = vsel %vm945, %v1067, %v1043
        %v1069 = vsel %vm944, %v360, %v1066
        %v1070 = vsel %vm944, 0, %v1068
        %v1071 = vmul.f32 %v1069, %v1069
        %v1072 = vmul.f32 %v1071, -0.001358992
        %v1073 = vadd.f32 %v1072, 0.041655596
        %v1074 = vmul.f32 %v1071, %v1073
        %v1075 = vadd.f32 %v1074, -0.4999988
        %v1076 = vmul.f32 %v1071, %v1075
        %v1077 = vadd.f32 1.0, %v1076
        %v1078 = vmul.f32 %v1069, %v1069
        %v1079 = vmul.f32 %v1078, -0.00019511016
        %v1080 = vadd.f32 %v1079, 0.008332121
        %v1081 = vmul.f32 %v1078, %v1080
        %v1082 = vadd.f32 %v1081, -0.16666654
        %v1083 = vmul.f32 %v1078, %v1082
        %v1084 = vadd.f32 %v1083, 1.0
        %v1085 = vmul.f32 %v1084, %v1069
        %vm1086 = vweird.f32 %v360
        %v1087 = vadd.s32 %v1070, 3
        %v1088 = vand.u32 %v1087, 3
        %vm1089 = vcmp.lt.s32.totalorder %v1088, 2
        %vm1090 = vcmp.eq.s32.totalorder %v1088, 0
        %v1091 = vxor.u32 %v1085, 2147483648
        %v1092 = vsel %vm1090, %v1077, %v1091
        %vm1093 = vcmp.eq.s32.totalorder %v1088, 2
        %v1094 = vxor.u32 %v1077, 2147483648
        %v1095 = vsel %vm1093, %v1094, %v1085
        %v1096 = vsel %vm1089, %v1092, %v1095
        %v1097 = vsel %vm1086, nan, %v1096
        %v1098 = vand.u32 2147483647, %v357
        %vm1099 = vcmp.le.f32.partialorder %v1098, 0.7853982
        %vm1100 = vcmp.lt.s32.totalorder %v357, 0
        %v1101 = vand.u32 %v357, 2139095040
        %v1102 = vshrl.u32 %v1101, 23
        %v1103 = vsub.s32 %v1102, 127
        %v1104 = vand.u32 2147483647, %v357
        %v1105 = vand.u32 %v1104, 8388607
        %v1106 = vor.u32 %v1105, 8388608
        %v1107 = vsub.s32 0, %v1106
        %v1108 = vadd.s32 %v1103, 1
        %vm1109 = vcmp.gt.s32.totalorder %v1108, 0
        %v1110 = vsel %vm1109, %v1108, 0
        %v1111 = vshrl.u32 %v1110, 5
        %v1112 = vand.u32 %v1110, 31
        %v1113 = vsub.s32 32, %v1112
        %v1114 = vshrl.u32 683565275, %v1113
        %v1115 = vshll.u32 683565275, %v1112
        %v1116 = vshrl.u32 2475754826, %v1113
        %v1117 = vor.u32 %v1115, %v1116
        %v1118 = vshll.u32 2475754826, %v1112
        %v1119 = vshrl.u32 2131351028, %v1113
        %v1120 = vor.u32 %v1118, %v1119
        %v1121 = vshll.u32 2131351028, %v1112
        %v1122 = vshrl.u32 2102212464, %v1113
        %v1123 = vor.u32 %v1121, %v1122
        %v1124 = vshll.u32 2102212464, %v1112
        %v1125 = vshrl.u32 920167782, %v1113
        %v1126 = vor.u32 %v1124, %v1125
        %v1127 = vshll.u32 920167782, %v1112
        %v1128 = vshrl.u32 1326507024, %v1113
        %v1129 = vor.u32 %v1127, %v1128
        %vm1130 = vcmp.lt.s32.totalorder %v1111, 1
        %vm1131 = vcmp.lt.s32.totalorder %v1111, 2
        %vm1132 = vcmp.lt.s32.totalorder %v1111, 3
        %vm1133 = vcmp.lt.s32.totalorder %v1111, 4
        %v1134 = vsel %vm1130, %v1114, %v1117
        %v1135 = vsel %vm1133, %v1123, 2102212464
        %v1136 = vsel %vm1132, %v1120, %v1135
        %v1137 = vsel %vm1131, %v1134, %v1136
        %v1138 = vsel %vm1130, %v1117, %v1120
        %v1139 = vsel %vm1133, %v1126, 920167782
        %v1140 = vsel %vm1132, %v1123, %v1139
        %v1141 = vsel %vm1131, %v1138, %v1140
        %v1142 = vsel %vm1130, %v1120, %v1123
        %v1143 = vsel %vm1133, %v1129, 1326507024
        %v1144 = vsel %vm1132, %v1126, %v1143
        %v1145 = vsel %vm1131, %v1142, %v1144
        %v1146 = vshll.u32 %v1106, 8
        %v1147 = vand.u32 %v1146, 65535
        %v1148 = vshrl.u32 %v1146, 16
        %v1149 = vand.u32 %v1145, 65535
        %v1150 = vshrl.u32 %v1145, 16
        %v1151 = vmul.u32 %v1147, %v1149
        %v1152 = vmul.u32 %v1147, %v1150
        %v1153 = vmul.u32 %v1148, %v1149
        %v1154 = vmul.u32 %v1148, %v1150
        %v1155 = vshll.u32 %v1152, 16
        %v1156 = vshrl.u32 %v1152, 16
        %v1157 = vshll.u32 %v1153, 16
        %v1158 = vshrl.u32 %v1153, 16
        %vm1159 = vc.u32 %v1151, %v1155
        %v1160 = vsel %vm1159, 1, 0
        %v1161 = vadd.s32 %v1151, %v1155
        %v1162 = vadd.s32 %v1154, %v1160
        %vm1163 = vc.u32 %v1161, %v1157
        %v1164 = vsel %vm1163, 1, 0
        %v1165 = vadd.s32 %v1161, %v1157
        %v1166 = vadd.s32 %v1162, %v1164
        %v1167 = vadd.s32 %v1166, %v1156
        %v1168 = vadd.s32 %v1167, %v1158
        %v1169 = vand.u32 %v1146, 65535
        %v1170 = vshrl.u32 %v1146, 16
        %v1171 = vand.u32 %v1141, 65535
        %v1172 = vshrl.u32 %v1141, 16
        %v1173 = vmul.u32 %v1169, %v1171
        %v1174 = vmul.u32 %v1169, %v1172
        %v1175 = vmul.u32 %v1170, %v1171
        %v1176 = vmul.u32 %v1170, %v1172
        %v1177 = vshll.u32 %v1174, 16
        %v1178 = vshrl.u32 %v1174, 16
        %v1179 = vshll.u32 %v1175, 16
        %v1180 = vshrl.u32 %v1175, 16
        %vm1181 = vc.u32 %v1173, %v1177
        %v1182 = vsel %vm1181, 1, 0
        %v1183 = vadd.s32 %v1173, %v1177
        %v1184 = vadd.s32 %v1176, %v1182
        %vm1185 = vc.u32 %v1183, %v1179
        %v1186 = vsel %vm1185, 1, 0
        %v1187 = vadd.s32 %v1183, %v1179
        %v1188 = vadd.s32 %v1184, %v1186
        %v1189 = vadd.s32 %v1188, %v1178
        %v1190 = vadd.s32 %v1189, %v1180
        %v1191 = vmul.u32 %v1146, %v1137
        %v1192 = vadd.s32 %v1168, %v1187
        %vm1193 = vc.u32 %v1168, %v1187
        %v1194 = vadd.s32 %v1190, 1
        %v1195 = vsel %vm1193, %v1194, %v1190
        %v1196 = vadd.s32 %v1191, %v1195
        %v1197 = vadd.s32 %v1196, 536870912
        %v1198 = vshrl.u32 %v1197, 30
        %v1199 = vshll.u32 %v1198, 30
        %v1200 = vsub.s32 %v1196, %v1199
        %vm1201 = vcmp.lt.s32.totalorder %v1200, 0
        %v1202 = vsub.s32 0, %v1200
        %v1203 = vsel %vm1201, %v1202, %v1200
        %v1204 = vclz %v1203
        %v1205 = vsub.s32 %v1204, 2
        %vm1206 = vcmp.gt.s32.totalorder 0, %v1205
        %v1207 = vsel %vm1206, 0, %v1205
        %v1208 = vsub.s32 32, %v1207
        %v1209 = vshll.u32 %v1200, %v1207
        %v1210 = vshrl.u32 %v1192, %v1208
        %v1211 = vor.u32 %v1209, %v1210
        %v1212 = vsub.s32 4294967266, %v1207
        %v1213 = vadd.s32 %v1212, 127
        %v1214 = vshll.u32 %v1213, 23
        %v1215 = vor.u32 4788187, %v1214
        %v1216 = vand.u32 2147483647, %v1215
        %v1218 = vcvt.s32.f32 %v1211
        %v1219 = vmul.f32 %v1218, %v1216
        %v1220 = vxor.u32 %v1219, 2147483648
        %v1221 = vsel %vm1100, %v1220, %v1219
        %v1222 = vsub.s32 4, %v1198
        %v1223 = vsel %vm1100, %v1222, %v1198
        %v1224 = vsel %vm1099, %v357, %v1221
        %v1225 = vsel %vm1099, 0, %v1223
        %v1226 = vmul.f32 %v1224, %v1224
        %v1227 = vmul.f32 %v1226, -0.001358992
        %v1228 = vadd.f32 %v1227, 0.041655596
        %v1229 = vmul.f32 %v1226, %v1228
        %v1230 = vadd.f32 %v1229, -0.4999988
        %v1231 = vmul.f32 %v1226, %v1230
        %v1232 = vadd.f32 1.0, %v1231
        %v1233 = vmul.f32 %v1224, %v1224
        %v1234 = vmul.f32 %v1233, -0.00019511016
        %v1235 = vadd.f32 %v1234, 0.008332121
        %v1236 = vmul.f32 %v1233, %v1235
        %v1237 = vadd.f32 %v1236, -0.16666654
        %v1238 = vmul.f32 %v1233, %v1237
        %v1239 = vadd.f32 %v1238, 1.0
        %v1240 = vmul.f32 %v1239, %v1224
        %vm1241 = vweird.f32 %v357
        %v1242 = vand.u32 %v1225, 3
        %vm1243 = vcmp.lt.s32.totalorder %v1242, 2
        %vm1244 = vcmp.eq.s32.totalorder %v1242, 0
        %v1245 = vxor.u32 %v1240, 2147483648
        %v1246 = vsel %vm1244, %v1232, %v1245
        %vm1247 = vcmp.eq.s32.totalorder %v1242, 2
        %v1248 = vxor.u32 %v1232, 2147483648
        %v1249 = vsel %vm1247, %v1248, %v1240
        %v1250 = vsel %vm1243, %v1246, %v1249
        %v1251 = vsel %vm1241, nan, %v1250
        %v1252 = vand.u32 2147483647, %v358
        %vm1253 = vcmp.le.f32.partialorder %v1252, 0.7853982
        %vm1254 = vcmp.lt.s32.totalorder %v358, 0
        %v1255 = vand.u32 %v358, 2139095040
        %v1256 = vshrl.u32 %v1255, 23
        %v1257 = vsub.s32 %v1256, 127
        %v1258 = vand.u32 2147483647, %v358
        %v1259 = vand.u32 %v1258, 8388607
        %v1260 = vor.u32 %v1259, 8388608
        %v1261 = vsub.s32 0, %v1260
        %v1262 = vadd.s32 %v1257, 1
        %vm1263 = vcmp.gt.s32.totalorder %v1262, 0
        %v1264 = vsel %vm1263, %v1262, 0
        %v1265 = vshrl.u32 %v1264, 5
        %v1266 = vand.u32 %v1264, 31
        %v1267 = vsub.s32 32, %v1266
        %v1268 = vshrl.u32 683565275, %v1267
        %v1269 = vshll.u32 683565275, %v1266
        %v1270 = vshrl.u32 2475754826, %v1267
        %v1271 = vor.u32 %v1269, %v1270
        %v1272 = vshll.u32 2475754826, %v1266
        %v1273 = vshrl.u32 2131351028, %v1267
        %v1274 = vor.u32 %v1272, %v1273
        %v1275 = vshll.u32 2131351028, %v1266
        %v1276 = vshrl.u32 2102212464, %v1267
        %v1277 = vor.u32 %v1275, %v1276
        %v1278 = vshll.u32 2102212464, %v1266
        %v1279 = vshrl.u32 920167782, %v1267
        %v1280 = vor.u32 %v1278, %v1279
        %v1281 = vshll.u32 920167782, %v1266
        %v1282 = vshrl.u32 1326507024, %v1267
        %v1283 = vor.u32 %v1281, %v1282
        %vm1284 = vcmp.lt.s32.totalorder %v1265, 1
        %vm1285 = vcmp.lt.s32.totalorder %v1265, 2
        %vm1286 = vcmp.lt.s32.totalorder %v1265, 3
        %vm1287 = vcmp.lt.s32.totalorder %v1265, 4
        %v1288 = vsel %vm1284, %v1268, %v1271
        %v1289 = vsel %vm1287, %v1277, 2102212464
        %v1290 = vsel %vm1286, %v1274, %v1289
        %v1291 = vsel %vm1285, %v1288, %v1290
        %v1292 = vsel %vm1284, %v1271, %v1274
        %v1293 = vsel %vm1287, %v1280, 920167782
        %v1294 = vsel %vm1286, %v1277, %v1293
        %v1295 = vsel %vm1285, %v1292, %v1294
        %v1296 = vsel %vm1284, %v1274, %v1277
        %v1297 = vsel %vm1287, %v1283, 1326507024
        %v1298 = vsel %vm1286, %v1280, %v1297
        %v1299 = vsel %vm1285, %v1296, %v1298
        %v1300 = vshll.u32 %v1260, 8
        %v1301 = vand.u32 %v1300, 65535
        %v1302 = vshrl.u32 %v1300, 16
        %v1303 = vand.u32 %v1299, 65535
        %v1304 = vshrl.u32 %v1299, 16
        %v1305 = vmul.u32 %v1301, %v1303
        %v1306 = vmul.u32 %v1301, %v1304
        %v1307 = vmul.u32 %v1302, %v1303
        %v1308 = vmul.u32 %v1302, %v1304
        %v1309 = vshll.u32 %v1306, 16
        %v1310 = vshrl.u32 %v1306, 16
        %v1311 = vshll.u32 %v1307, 16
        %v1312 = vshrl.u32 %v1307, 16
        %vm1313 = vc.u32 %v1305, %v1309
        %v1314 = vsel %vm1313, 1, 0
        %v1315 = vadd.s32 %v1305, %v1309
        %v1316 = vadd.s32 %v1308, %v1314
        %vm1317 = vc.u32 %v1315, %v1311
        %v1318 = vsel %vm1317, 1, 0
        %v1319 = vadd.s32 %v1315, %v1311
        %v1320 = vadd.s32 %v1316, %v1318
        %v1321 = vadd.s32 %v1320, %v1310
        %v1322 = vadd.s32 %v1321, %v1312
        %v1323 = vand.u32 %v1300, 65535
        %v1324 = vshrl.u32 %v1300, 16
        %v1325 = vand.u32 %v1295, 65535
        %v1326 = vshrl.u32 %v1295, 16
        %v1327 = vmul.u32 %v1323, %v1325
        %v1328 = vmul.u32 %v1323, %v1326
        %v1329 = vmul.u32 %v1324, %v1325
        %v1330 = vmul.u32 %v1324, %v1326
        %v1331 = vshll.u32 %v1328, 16
        %v1332 = vshrl.u32 %v1328, 16
        %v1333 = vshll.u32 %v1329, 16
        %v1334 = vshrl.u32 %v1329, 16
        %vm1335 = vc.u32 %v1327, %v1331
        %v1336 = vsel %vm1335, 1, 0
        %v1337 = vadd.s32 %v1327, %v1331
        %v1338 = vadd.s32 %v1330, %v1336
        %vm1339 = vc.u32 %v1337, %v1333
        %v1340 = vsel %vm1339, 1, 0
        %v1341 = vadd.s32 %v1337, %v1333
        %v1342 = vadd.s32 %v1338, %v1340
        %v1343 = vadd.s32 %v1342, %v1332
        %v1344 = vadd.s32 %v1343, %v1334
        %v1345 = vmul.u32 %v1300, %v1291
        %v1346 = vadd.s32 %v1322, %v1341
        %vm1347 = vc.u32 %v1322, %v1341
        %v1348 = vadd.s32 %v1344, 1
        %v1349 = vsel %vm1347, %v1348, %v1344
        %v1350 = vadd.s32 %v1345, %v1349
        %v1351 = vadd.s32 %v1350, 536870912
        %v1352 = vshrl.u32 %v1351, 30
        %v1353 = vshll.u32 %v1352, 30
        %v1354 = vsub.s32 %v1350, %v1353
        %vm1355 = vcmp.lt.s32.totalorder %v1354, 0
        %v1356 = vsub.s32 0, %v1354
        %v1357 = vsel %vm1355, %v1356, %v1354
        %v1358 = vclz %v1357
        %v1359 = vsub.s32 %v1358, 2
        %vm1360 = vcmp.gt.s32.totalorder 0, %v1359
        %v1361 = vsel %vm1360, 0, %v1359
        %v1362 = vsub.s32 32, %v1361
        %v1363 = vshll.u32 %v1354, %v1361
        %v1364 = vshrl.u32 %v1346, %v1362
        %v1365 = vor.u32 %v1363, %v1364
        %v1366 = vsub.s32 4294967266, %v1361
        %v1367 = vadd.s32 %v1366, 127
        %v1368 = vshll.u32 %v1367, 23
        %v1369 = vor.u32 4788187, %v1368
        %v1370 = vand.u32 2147483647, %v1369
        %v1372 = vcvt.s32.f32 %v1365
        %v1373 = vmul.f32 %v1372, %v1370
        %v1374 = vxor.u32 %v1373, 2147483648
        %v1375 = vsel %vm1254, %v1374, %v1373
        %v1376 = vsub.s32 4, %v1352
        %v1377 = vsel %vm1254, %v1376, %v1352
        %v1378 = vsel %vm1253, %v358, %v1375
        %v1379 = vsel %vm1253, 0, %v1377
        %v1380 = vmul.f32 %v1378, %v1378
        %v1381 = vmul.f32 %v1380, -0.001358992
        %v1382 = vadd.f32 %v1381, 0.041655596
        %v1383 = vmul.f32 %v1380, %v1382
        %v1384 = vadd.f32 %v1383, -0.4999988
        %v1385 = vmul.f32 %v1380, %v1384
        %v1386 = vadd.f32 1.0, %v1385
        %v1387 = vmul.f32 %v1378, %v1378
        %v1388 = vmul.f32 %v1387, -0.00019511016
        %v1389 = vadd.f32 %v1388, 0.008332121
        %v1390 = vmul.f32 %v1387, %v1389
        %v1391 = vadd.f32 %v1390, -0.16666654
        %v1392 = vmul.f32 %v1387, %v1391
        %v1393 = vadd.f32 %v1392, 1.0
        %v1394 = vmul.f32 %v1393, %v1378
        %vm1395 = vweird.f32 %v358
        %v1396 = vand.u32 %v1379, 3
        %vm1397 = vcmp.lt.s32.totalorder %v1396, 2
        %vm1398 = vcmp.eq.s32.totalorder %v1396, 0
        %v1399 = vxor.u32 %v1394, 2147483648
        %v1400 = vsel %vm1398, %v1386, %v1399
        %vm1401 = vcmp.eq.s32.totalorder %v1396, 2
        %v1402 = vxor.u32 %v1386, 2147483648
        %v1403 = vsel %vm1401, %v1402, %v1394
        %v1404 = vsel %vm1397, %v1400, %v1403
        %v1405 = vsel %vm1395, nan, %v1404
        %v1406 = vand.u32 2147483647, %v359
        %vm1407 = vcmp.le.f32.partialorder %v1406, 0.7853982
        %vm1408 = vcmp.lt.s32.totalorder %v359, 0
        %v1409 = vand.u32 %v359, 2139095040
        %v1410 = vshrl.u32 %v1409, 23
        %v1411 = vsub.s32 %v1410, 127
        %v1412 = vand.u32 2147483647, %v359
        %v1413 = vand.u32 %v1412, 8388607
        %v1414 = vor.u32 %v1413, 8388608
        %v1415 = vsub.s32 0, %v1414
        %v1416 = vadd.s32 %v1411, 1
        %vm1417 = vcmp.gt.s32.totalorder %v1416, 0
        %v1418 = vsel %vm1417, %v1416, 0
        %v1419 = vshrl.u32 %v1418, 5
        %v1420 = vand.u32 %v1418, 31
        %v1421 = vsub.s32 32, %v1420
        %v1422 = vshrl.u32 683565275, %v1421
        %v1423 = vshll.u32 683565275, %v1420
        %v1424 = vshrl.u32 2475754826, %v1421
        %v1425 = vor.u32 %v1423, %v1424
        %v1426 = vshll.u32 2475754826, %v1420
        %v1427 = vshrl.u32 2131351028, %v1421
        %v1428 = vor.u32 %v1426, %v1427
        %v1429 = vshll.u32 2131351028, %v1420
        %v1430 = vshrl.u32 2102212464, %v1421
        %v1431 = vor.u32 %v1429, %v1430
        %v1432 = vshll.u32 2102212464, %v1420
        %v1433 = vshrl.u32 920167782, %v1421
        %v1434 = vor.u32 %v1432, %v1433
        %v1435 = vshll.u32 920167782, %v1420
        %v1436 = vshrl.u32 1326507024, %v1421
        %v1437 = vor.u32 %v1435, %v1436
        %vm1438 = vcmp.lt.s32.totalorder %v1419, 1
        %vm1439 = vcmp.lt.s32.totalorder %v1419, 2
        %vm1440 = vcmp.lt.s32.totalorder %v1419, 3
        %vm1441 = vcmp.lt.s32.totalorder %v1419, 4
        %v1442 = vsel %vm1438, %v1422, %v1425
        %v1443 = vsel %vm1441, %v1431, 2102212464
        %v1444 = vsel %vm1440, %v1428, %v1443
        %v1445 = vsel %vm1439, %v1442, %v1444
        %v1446 = vsel %vm1438, %v1425, %v1428
        %v1447 = vsel %vm1441, %v1434, 920167782
        %v1448 = vsel %vm1440, %v1431, %v1447
        %v1449 = vsel %vm1439, %v1446, %v1448
        %v1450 = vsel %vm1438, %v1428, %v1431
        %v1451 = vsel %vm1441, %v1437, 1326507024
        %v1452 = vsel %vm1440, %v1434, %v1451
        %v1453 = vsel %vm1439, %v1450, %v1452
        %v1454 = vshll.u32 %v1414, 8
        %v1455 = vand.u32 %v1454, 65535
        %v1456 = vshrl.u32 %v1454, 16
        %v1457 = vand.u32 %v1453, 65535
        %v1458 = vshrl.u32 %v1453, 16
        %v1459 = vmul.u32 %v1455, %v1457
        %v1460 = vmul.u32 %v1455, %v1458
        %v1461 = vmul.u32 %v1456, %v1457
        %v1462 = vmul.u32 %v1456, %v1458
        %v1463 = vshll.u32 %v1460, 16
        %v1464 = vshrl.u32 %v1460, 16
        %v1465 = vshll.u32 %v1461, 16
        %v1466 = vshrl.u32 %v1461, 16
        %vm1467 = vc.u32 %v1459, %v1463
        %v1468 = vsel %vm1467, 1, 0
        %v1469 = vadd.s32 %v1459, %v1463
        %v1470 = vadd.s32 %v1462, %v1468
        %vm1471 = vc.u32 %v1469, %v1465
        %v1472 = vsel %vm1471, 1, 0
        %v1473 = vadd.s32 %v1469, %v1465
        %v1474 = vadd.s32 %v1470, %v1472
        %v1475 = vadd.s32 %v1474, %v1464
        %v1476 = vadd.s32 %v1475, %v1466
        %v1477 = vand.u32 %v1454, 65535
        %v1478 = vshrl.u32 %v1454, 16
        %v1479 = vand.u32 %v1449, 65535
        %v1480 = vshrl.u32 %v1449, 16
        %v1481 = vmul.u32 %v1477, %v1479
        %v1482 = vmul.u32 %v1477, %v1480
        %v1483 = vmul.u32 %v1478, %v1479
        %v1484 = vmul.u32 %v1478, %v1480
        %v1485 = vshll.u32 %v1482, 16
        %v1486 = vshrl.u32 %v1482, 16
        %v1487 = vshll.u32 %v1483, 16
        %v1488 = vshrl.u32 %v1483, 16
        %vm1489 = vc.u32 %v1481, %v1485
        %v1490 = vsel %vm1489, 1, 0
        %v1491 = vadd.s32 %v1481, %v1485
        %v1492 = vadd.s32 %v1484, %v1490
        %vm1493 = vc.u32 %v1491, %v1487
        %v1494 = vsel %vm1493, 1, 0
        %v1495 = vadd.s32 %v1491, %v1487
        %v1496 = vadd.s32 %v1492, %v1494
        %v1497 = vadd.s32 %v1496, %v1486
        %v1498 = vadd.s32 %v1497, %v1488
        %v1499 = vmul.u32 %v1454, %v1445
        %v1500 = vadd.s32 %v1476, %v1495
        %vm1501 = vc.u32 %v1476, %v1495
        %v1502 = vadd.s32 %v1498, 1
        %v1503 = vsel %vm1501, %v1502, %v1498
        %v1504 = vadd.s32 %v1499, %v1503
        %v1505 = vadd.s32 %v1504, 536870912
        %v1506 = vshrl.u32 %v1505, 30
        %v1507 = vshll.u32 %v1506, 30
        %v1508 = vsub.s32 %v1504, %v1507
        %vm1509 = vcmp.lt.s32.totalorder %v1508, 0
        %v1510 = vsub.s32 0, %v1508
        %v1511 = vsel %vm1509, %v1510, %v1508
        %v1512 = vclz %v1511
        %v1513 = vsub.s32 %v1512, 2
        %vm1514 = vcmp.gt.s32.totalorder 0, %v1513
        %v1515 = vsel %vm1514, 0, %v1513
        %v1516 = vsub.s32 32, %v1515
        %v1517 = vshll.u32 %v1508, %v1515
        %v1518 = vshrl.u32 %v1500, %v1516
        %v1519 = vor.u32 %v1517, %v1518
        %v1520 = vsub.s32 4294967266, %v1515
        %v1521 = vadd.s32 %v1520, 127
        %v1522 = vshll.u32 %v1521, 23
        %v1523 = vor.u32 4788187, %v1522
        %v1524 = vand.u32 2147483647, %v1523
        %v1526 = vcvt.s32.f32 %v1519
        %v1527 = vmul.f32 %v1526, %v1524
        %v1528 = vxor.u32 %v1527, 2147483648
        %v1529 = vsel %vm1408, %v1528, %v1527
        %v1530 = vsub.s32 4, %v1506
        %v1531 = vsel %vm1408, %v1530, %v1506
        %v1532 = vsel %vm1407, %v359, %v1529
        %v1533 = vsel %vm1407, 0, %v1531
        %v1534 = vmul.f32 %v1532, %v1532
        %v1535 = vmul.f32 %v1534, -0.001358992
        %v1536 = vadd.f32 %v1535, 0.041655596
        %v1537 = vmul.f32 %v1534, %v1536
        %v1538 = vadd.f32 %v1537, -0.4999988
        %v1539 = vmul.f32 %v1534, %v1538
        %v1540 = vadd.f32 1.0, %v1539
        %v1541 = vmul.f32 %v1532, %v1532
        %v1542 = vmul.f32 %v1541, -0.00019511016
        %v1543 = vadd.f32 %v1542, 0.008332121
        %v1544 = vmul.f32 %v1541, %v1543
        %v1545 = vadd.f32 %v1544, -0.16666654
        %v1546 = vmul.f32 %v1541, %v1545
        %v1547 = vadd.f32 %v1546, 1.0
        %v1548 = vmul.f32 %v1547, %v1532
        %vm1549 = vweird.f32 %v359
        %v1550 = vand.u32 %v1533, 3
        %vm1551 = vcmp.lt.s32.totalorder %v1550, 2
        %vm1552 = vcmp.eq.s32.totalorder %v1550, 0
        %v1553 = vxor.u32 %v1548, 2147483648
        %v1554 = vsel %vm1552, %v1540, %v1553
        %vm1555 = vcmp.eq.s32.totalorder %v1550, 2
        %v1556 = vxor.u32 %v1540, 2147483648
        %v1557 = vsel %vm1555, %v1556, %v1548
        %v1558 = vsel %vm1551, %v1554, %v1557
        %v1559 = vsel %vm1549, nan, %v1558
        %v1560 = vand.u32 2147483647, %v360
        %vm1561 = vcmp.le.f32.partialorder %v1560, 0.7853982
        %vm1562 = vcmp.lt.s32.totalorder %v360, 0
        %v1563 = vand.u32 %v360, 2139095040
        %v1564 = vshrl.u32 %v1563, 23
        %v1565 = vsub.s32 %v1564, 127
        %v1566 = vand.u32 2147483647, %v360
        %v1567 = vand.u32 %v1566, 8388607
        %v1568 = vor.u32 %v1567, 8388608
        %v1569 = vsub.s32 0, %v1568
        %v1570 = vadd.s32 %v1565, 1
        %vm1571 = vcmp.gt.s32.totalorder %v1570, 0
        %v1572 = vsel %vm1571, %v1570, 0
        %v1573 = vshrl.u32 %v1572, 5
        %v1574 = vand.u32 %v1572, 31
        %v1575 = vsub.s32 32, %v1574
        %v1576 = vshrl.u32 683565275, %v1575
        %v1577 = vshll.u32 683565275, %v1574
        %v1578 = vshrl.u32 2475754826, %v1575
        %v1579 = vor.u32 %v1577, %v1578
        %v1580 = vshll.u32 2475754826, %v1574
        %v1581 = vshrl.u32 2131351028, %v1575
        %v1582 = vor.u32 %v1580, %v1581
        %v1583 = vshll.u32 2131351028, %v1574
        %v1584 = vshrl.u32 2102212464, %v1575
        %v1585 = vor.u32 %v1583, %v1584
        %v1586 = vshll.u32 2102212464, %v1574
        %v1587 = vshrl.u32 920167782, %v1575
        %v1588 = vor.u32 %v1586, %v1587
        %v1589 = vshll.u32 920167782, %v1574
        %v1590 = vshrl.u32 1326507024, %v1575
        %v1591 = vor.u32 %v1589, %v1590
        %vm1592 = vcmp.lt.s32.totalorder %v1573, 1
        %vm1593 = vcmp.lt.s32.totalorder %v1573, 2
        %vm1594 = vcmp.lt.s32.totalorder %v1573, 3
        %vm1595 = vcmp.lt.s32.totalorder %v1573, 4
        %v1596 = vsel %vm1592, %v1576, %v1579
        %v1597 = vsel %vm1595, %v1585, 2102212464
        %v1598 = vsel %vm1594, %v1582, %v1597
        %v1599 = vsel %vm1593, %v1596, %v1598
        %v1600 = vsel %vm1592, %v1579, %v1582
        %v1601 = vsel %vm1595, %v1588, 920167782
        %v1602 = vsel %vm1594, %v1585, %v1601
        %v1603 = vsel %vm1593, %v1600, %v1602
        %v1604 = vsel %vm1592, %v1582, %v1585
        %v1605 = vsel %vm1595, %v1591, 1326507024
        %v1606 = vsel %vm1594, %v1588, %v1605
        %v1607 = vsel %vm1593, %v1604, %v1606
        %v1608 = vshll.u32 %v1568, 8
        %v1609 = vand.u32 %v1608, 65535
        %v1610 = vshrl.u32 %v1608, 16
        %v1611 = vand.u32 %v1607, 65535
        %v1612 = vshrl.u32 %v1607, 16
        %v1613 = vmul.u32 %v1609, %v1611
        %v1614 = vmul.u32 %v1609, %v1612
        %v1615 = vmul.u32 %v1610, %v1611
        %v1616 = vmul.u32 %v1610, %v1612
        %v1617 = vshll.u32 %v1614, 16
        %v1618 = vshrl.u32 %v1614, 16
        %v1619 = vshll.u32 %v1615, 16
        %v1620 = vshrl.u32 %v1615, 16
        %vm1621 = vc.u32 %v1613, %v1617
        %v1622 = vsel %vm1621, 1, 0
        %v1623 = vadd.s32 %v1613, %v1617
        %v1624 = vadd.s32 %v1616, %v1622
        %vm1625 = vc.u32 %v1623, %v1619
        %v1626 = vsel %vm1625, 1, 0
        %v1627 = vadd.s32 %v1623, %v1619
        %v1628 = vadd.s32 %v1624, %v1626
        %v1629 = vadd.s32 %v1628, %v1618
        %v1630 = vadd.s32 %v1629, %v1620
        %v1631 = vand.u32 %v1608, 65535
        %v1632 = vshrl.u32 %v1608, 16
        %v1633 = vand.u32 %v1603, 65535
        %v1634 = vshrl.u32 %v1603, 16
        %v1635 = vmul.u32 %v1631, %v1633
        %v1636 = vmul.u32 %v1631, %v1634
        %v1637 = vmul.u32 %v1632, %v1633
        %v1638 = vmul.u32 %v1632, %v1634
        %v1639 = vshll.u32 %v1636, 16
        %v1640 = vshrl.u32 %v1636, 16
        %v1641 = vshll.u32 %v1637, 16
        %v1642 = vshrl.u32 %v1637, 16
        %vm1643 = vc.u32 %v1635, %v1639
        %v1644 = vsel %vm1643, 1, 0
        %v1645 = vadd.s32 %v1635, %v1639
        %v1646 = vadd.s32 %v1638, %v1644
        %vm1647 = vc.u32 %v1645, %v1641
        %v1648 = vsel %vm1647, 1, 0
        %v1649 = vadd.s32 %v1645, %v1641
        %v1650 = vadd.s32 %v1646, %v1648
        %v1651 = vadd.s32 %v1650, %v1640
        %v1652 = vadd.s32 %v1651, %v1642
        %v1653 = vmul.u32 %v1608, %v1599
        %v1654 = vadd.s32 %v1630, %v1649
        %vm1655 = vc.u32 %v1630, %v1649
        %v1656 = vadd.s32 %v1652, 1
        %v1657 = vsel %vm1655, %v1656, %v1652
        %v1658 = vadd.s32 %v1653, %v1657
        %v1659 = vadd.s32 %v1658, 536870912
        %v1660 = vshrl.u32 %v1659, 30
        %v1661 = vshll.u32 %v1660, 30
        %v1662 = vsub.s32 %v1658, %v1661
        %vm1663 = vcmp.lt.s32.totalorder %v1662, 0
        %v1664 = vsub.s32 0, %v1662
        %v1665 = vsel %vm1663, %v1664, %v1662
        %v1666 = vclz %v1665
        %v1667 = vsub.s32 %v1666, 2
        %vm1668 = vcmp.gt.s32.totalorder 0, %v1667
        %v1669 = vsel %vm1668, 0, %v1667
        %v1670 = vsub.s32 32, %v1669
        %v1671 = vshll.u32 %v1662, %v1669
        %v1672 = vshrl.u32 %v1654, %v1670
        %v1673 = vor.u32 %v1671, %v1672
        %v1674 = vsub.s32 4294967266, %v1669
        %v1675 = vadd.s32 %v1674, 127
        %v1676 = vshll.u32 %v1675, 23
        %v1677 = vor.u32 4788187, %v1676
        %v1678 = vand.u32 2147483647, %v1677
        %v1680 = vcvt.s32.f32 %v1673
        %v1681 = vmul.f32 %v1680, %v1678
        %v1682 = vxor.u32 %v1681, 2147483648
        %v1683 = vsel %vm1562, %v1682, %v1681
        %v1684 = vsub.s32 4, %v1660
        %v1685 = vsel %vm1562, %v1684, %v1660
        %v1686 = vsel %vm1561, %v360, %v1683
        %v1687 = vsel %vm1561, 0, %v1685
        %v1688 = vmul.f32 %v1686, %v1686
        %v1689 = vmul.f32 %v1688, -0.001358992
        %v1690 = vadd.f32 %v1689, 0.041655596
        %v1691 = vmul.f32 %v1688, %v1690
        %v1692 = vadd.f32 %v1691, -0.4999988
        %v1693 = vmul.f32 %v1688, %v1692
        %v1694 = vadd.f32 1.0, %v1693
        %v1695 = vmul.f32 %v1686, %v1686
        %v1696 = vmul.f32 %v1695, -0.00019511016
        %v1697 = vadd.f32 %v1696, 0.008332121
        %v1698 = vmul.f32 %v1695, %v1697
        %v1699 = vadd.f32 %v1698, -0.16666654
        %v1700 = vmul.f32 %v1695, %v1699
        %v1701 = vadd.f32 %v1700, 1.0
        %v1702 = vmul.f32 %v1701, %v1686
        %vm1703 = vweird.f32 %v360
        %v1704 = vand.u32 %v1687, 3
        %vm1705 = vcmp.lt.s32.totalorder %v1704, 2
        %vm1706 = vcmp.eq.s32.totalorder %v1704, 0
        %v1707 = vxor.u32 %v1702, 2147483648
        %v1708 = vsel %vm1706, %v1694, %v1707
        %vm1709 = vcmp.eq.s32.totalorder %v1704, 2
        %v1710 = vxor.u32 %v1694, 2147483648
        %v1711 = vsel %vm1709, %v1710, %v1702
        %v1712 = vsel %vm1705, %v1708, %v1711
        %v1713 = vsel %vm1703, nan, %v1712
        %1718 = vst [vmem:[#allocation1] ss:$2 sm:$0xff] %v632
        %s1719 = scalar_lea.vmem [#allocation1], 16
        %1720 = vst [vmem:[%s1719] ss:$2 sm:$0xff] %v787
        %s1721 = scalar_lea.vmem [#allocation1], 32
        %1722 = vst [vmem:[%s1721] ss:$2 sm:$0xff] %v942
        %s1723 = scalar_lea.vmem [#allocation1], 48
        %1724 = vst [vmem:[%s1723] ss:$2 sm:$0xff] %v1097
        %v1725 = vld.sshfl [vmem:[#allocation1] sm:$0xff pattern:$0x75316420]
        %v1726 = vld.sshfl [vmem:[#allocation1 + $0x8] sm:$0xff pattern:$0x75316420]
        %v1727 = vld.sshfl [vmem:[#allocation1 + $0x10] sm:$0xff pattern:$0x75316420]
        %v1728 = vld.sshfl [vmem:[#allocation1 + $0x18] sm:$0xff pattern:$0x75316420]
        %v1729 = vld.sshfl [vmem:[#allocation1 + $0x20] sm:$0xff pattern:$0x75316420]
        %v1730 = vld.sshfl [vmem:[#allocation1 + $0x28] sm:$0xff pattern:$0x75316420]
        %v1731 = vld.sshfl [vmem:[#allocation1 + $0x30] sm:$0xff pattern:$0x75316420]
        %v1732 = vld.sshfl [vmem:[#allocation1 + $0x38] sm:$0xff pattern:$0x75316420]
        %1741 = vst [vmem:[#allocation2 + $0x80] sm:$0xf] %v1725
        %1742 = vst [vmem:[#allocation2 + $0x88] sm:$0xf] %v1726
        %1743 = vst [vmem:[#allocation2 + $0x90] sm:$0xf] %v1727
        %1744 = vst [vmem:[#allocation2 + $0x98] sm:$0xf] %v1728
        %1745 = vst [vmem:[#allocation2 + $0xa0] sm:$0xf] %v1729
        %1746 = vst [vmem:[#allocation2 + $0xa8] sm:$0xf] %v1730
        %1747 = vst [vmem:[#allocation2 + $0xb0] sm:$0xf] %v1731
        %1748 = vst [vmem:[#allocation2 + $0xb8] sm:$0xf] %v1732
        %1753 = vst [vmem:[#allocation1] ss:$2 sm:$0xff] %v1251
        %s1754 = scalar_lea.vmem [#allocation1], 16
        %1755 = vst [vmem:[%s1754] ss:$2 sm:$0xff] %v1405
        %s1756 = scalar_lea.vmem [#allocation1], 32
        %1757 = vst [vmem:[%s1756] ss:$2 sm:$0xff] %v1559
        %s1758 = scalar_lea.vmem [#allocation1], 48
        %1759 = vst [vmem:[%s1758] ss:$2 sm:$0xff] %v1713
        %v1760 = vld.sshfl [vmem:[#allocation1] sm:$0xff pattern:$0x75316420]
        %v1761 = vld.sshfl [vmem:[#allocation1 + $0x8] sm:$0xff pattern:$0x75316420]
        %v1762 = vld.sshfl [vmem:[#allocation1 + $0x10] sm:$0xff pattern:$0x75316420]
        %v1763 = vld.sshfl [vmem:[#allocation1 + $0x18] sm:$0xff pattern:$0x75316420]
        %v1764 = vld.sshfl [vmem:[#allocation1 + $0x20] sm:$0xff pattern:$0x75316420]
        %v1765 = vld.sshfl [vmem:[#allocation1 + $0x28] sm:$0xff pattern:$0x75316420]
        %v1766 = vld.sshfl [vmem:[#allocation1 + $0x30] sm:$0xff pattern:$0x75316420]
        %v1767 = vld.sshfl [vmem:[#allocation1 + $0x38] sm:$0xff pattern:$0x75316420]
        %1776 = vst [vmem:[#allocation2 + $0xc0] sm:$0xf] %v1760
        %1777 = vst [vmem:[#allocation2 + $0xc8] sm:$0xf] %v1761
        %1778 = vst [vmem:[#allocation2 + $0xd0] sm:$0xf] %v1762
        %1779 = vst [vmem:[#allocation2 + $0xd8] sm:$0xf] %v1763
        %1780 = vst [vmem:[#allocation2 + $0xe0] sm:$0xf] %v1764
        %1781 = vst [vmem:[#allocation2 + $0xe8] sm:$0xf] %v1765
        %1782 = vst [vmem:[#allocation2 + $0xf0] sm:$0xf] %v1766
        %1783 = vst [vmem:[#allocation2 + $0xf8] sm:$0xf] %v1767
        %v1784 = vmul.f32 %v632, 2.0
        %v1785 = vmul.f32 %v787, 2.0
        %v1786 = vmul.f32 %v942, 2.0
        %v1787 = vmul.f32 %v1097, 2.0
        %v1788 = vmul.f32 %v1784, %v1251
        %v1789 = vmul.f32 %v1785, %v1405
        %v1790 = vmul.f32 %v1786, %v1559
        %v1791 = vmul.f32 %v1787, %v1713
        %v1792 = vmul.f32 %v1251, 2.0
        %v1793 = vmul.f32 %v1405, 2.0
        %v1794 = vmul.f32 %v1559, 2.0
        %v1795 = vmul.f32 %v1713, 2.0
        %v1796 = vmul.f32 %v1792, %v1251
        %v1797 = vmul.f32 %v1793, %v1405
        %v1798 = vmul.f32 %v1794, %v1559
        %v1799 = vmul.f32 %v1795, %v1713
        %v1800 = vsub.f32 %v1796, 1.0
        %v1801 = vsub.f32 %v1797, 1.0
        %v1802 = vsub.f32 %v1798, 1.0
        %v1803 = vsub.f32 %v1799, 1.0
        %1808 = vst [vmem:[#allocation1] ss:$2 sm:$0xff] %v1788
        %s1809 = scalar_lea.vmem [#allocation1], 16
        %1810 = vst [vmem:[%s1809] ss:$2 sm:$0xff] %v1789
        %s1811 = scalar_lea.vmem [#allocation1], 32
        %1812 = vst [vmem:[%s1811] ss:$2 sm:$0xff] %v1790
        %s1813 = scalar_lea.vmem [#allocation1], 48
        %1814 = vst [vmem:[%s1813] ss:$2 sm:$0xff] %v1791
        %v1815 = vld.sshfl [vmem:[#allocation1] sm:$0xff pattern:$0x75316420]
        %v1816 = vld.sshfl [vmem:[#allocation1 + $0x8] sm:$0xff pattern:$0x75316420]
        %v1817 = vld.sshfl [vmem:[#allocation1 + $0x10] sm:$0xff pattern:$0x75316420]
        %v1818 = vld.sshfl [vmem:[#allocation1 + $0x18] sm:$0xff pattern:$0x75316420]
        %v1819 = vld.sshfl [vmem:[#allocation1 + $0x20] sm:$0xff pattern:$0x75316420]
        %v1820 = vld.sshfl [vmem:[#allocation1 + $0x28] sm:$0xff pattern:$0x75316420]
        %v1821 = vld.sshfl [vmem:[#allocation1 + $0x30] sm:$0xff pattern:$0x75316420]
        %v1822 = vld.sshfl [vmem:[#allocation1 + $0x38] sm:$0xff pattern:$0x75316420]
        %1831 = vst [vmem:[#allocation2 + $0x100] sm:$0xf] %v1815
        %1832 = vst [vmem:[#allocation2 + $0x108] sm:$0xf] %v1816
        %1833 = vst [vmem:[#allocation2 + $0x110] sm:$0xf] %v1817
        %1834 = vst [vmem:[#allocation2 + $0x118] sm:$0xf] %v1818
        %1835 = vst [vmem:[#allocation2 + $0x120] sm:$0xf] %v1819
        %1836 = vst [vmem:[#allocation2 + $0x128] sm:$0xf] %v1820
        %1837 = vst [vmem:[#allocation2 + $0x130] sm:$0xf] %v1821
        %1838 = vst [vmem:[#allocation2 + $0x138] sm:$0xf] %v1822
        %1843 = vst [vmem:[#allocation1] ss:$2 sm:$0xff] %v1800
        %s1844 = scalar_lea.vmem [#allocation1], 16
        %1845 = vst [vmem:[%s1844] ss:$2 sm:$0xff] %v1801
        %s1846 = scalar_lea.vmem [#allocation1], 32
        %1847 = vst [vmem:[%s1846] ss:$2 sm:$0xff] %v1802
        %s1848 = scalar_lea.vmem [#allocation1], 48
        %1849 = vst [vmem:[%s1848] ss:$2 sm:$0xff] %v1803
        %v1850 = vld.sshfl [vmem:[#allocation1] sm:$0xff pattern:$0x75316420]
        %v1851 = vld.sshfl [vmem:[#allocation1 + $0x8] sm:$0xff pattern:$0x75316420]
        %v1852 = vld.sshfl [vmem:[#allocation1 + $0x10] sm:$0xff pattern:$0x75316420]
        %v1853 = vld.sshfl [vmem:[#allocation1 + $0x18] sm:$0xff pattern:$0x75316420]
        %v1854 = vld.sshfl [vmem:[#allocation1 + $0x20] sm:$0xff pattern:$0x75316420]
        %v1855 = vld.sshfl [vmem:[#allocation1 + $0x28] sm:$0xff pattern:$0x75316420]
        %v1856 = vld.sshfl [vmem:[#allocation1 + $0x30] sm:$0xff pattern:$0x75316420]
        %v1857 = vld.sshfl [vmem:[#allocation1 + $0x38] sm:$0xff pattern:$0x75316420]
        %1866 = vst [vmem:[#allocation2 + $0x140] sm:$0xf] %v1850
        %1867 = vst [vmem:[#allocation2 + $0x148] sm:$0xf] %v1851
        %1868 = vst [vmem:[#allocation2 + $0x150] sm:$0xf] %v1852
        %1869 = vst [vmem:[#allocation2 + $0x158] sm:$0xf] %v1853
        %1870 = vst [vmem:[#allocation2 + $0x160] sm:$0xf] %v1854
        %1871 = vst [vmem:[#allocation2 + $0x168] sm:$0xf] %v1855
        %1872 = vst [vmem:[#allocation2 + $0x170] sm:$0xf] %v1856
        %1873 = vst [vmem:[#allocation2 + $0x178] sm:$0xf] %v1857
        %v1874 = vmul.f32 %v1788, 2.0
        %v1875 = vmul.f32 %v1789, 2.0
        %v1876 = vmul.f32 %v1790, 2.0
        %v1877 = vmul.f32 %v1791, 2.0
        %v1878 = vmul.f32 %v1874, %v1800
        %v1879 = vmul.f32 %v1875, %v1801
        %v1880 = vmul.f32 %v1876, %v1802
        %v1881 = vmul.f32 %v1877, %v1803
        %v1882 = vmul.f32 %v1800, 2.0
        %v1883 = vmul.f32 %v1801, 2.0
        %v1884 = vmul.f32 %v1802, 2.0
        %v1885 = vmul.f32 %v1803, 2.0
        %v1886 = vmul.f32 %v1882, %v1800
        %v1887 = vmul.f32 %v1883, %v1801
        %v1888 = vmul.f32 %v1884, %v1802
        %v1889 = vmul.f32 %v1885, %v1803
        %v1890 = vsub.f32 %v1886, 1.0
        %v1891 = vsub.f32 %v1887, 1.0
        %v1892 = vsub.f32 %v1888, 1.0
        %v1893 = vsub.f32 %v1889, 1.0
        %1898 = vst [vmem:[#allocation1] ss:$2 sm:$0xff] %v1878
        %s1899 = scalar_lea.vmem [#allocation1], 16
        %1900 = vst [vmem:[%s1899] ss:$2 sm:$0xff] %v1879
        %s1901 = scalar_lea.vmem [#allocation1], 32
        %1902 = vst [vmem:[%s1901] ss:$2 sm:$0xff] %v1880
        %s1903 = scalar_lea.vmem [#allocation1], 48
        %1904 = vst [vmem:[%s1903] ss:$2 sm:$0xff] %v1881
        %v1905 = vld.sshfl [vmem:[#allocation1] sm:$0xff pattern:$0x75316420]
        %v1906 = vld.sshfl [vmem:[#allocation1 + $0x8] sm:$0xff pattern:$0x75316420]
        %v1907 = vld.sshfl [vmem:[#allocation1 + $0x10] sm:$0xff pattern:$0x75316420]
        %v1908 = vld.sshfl [vmem:[#allocation1 + $0x18] sm:$0xff pattern:$0x75316420]
        %v1909 = vld.sshfl [vmem:[#allocation1 + $0x20] sm:$0xff pattern:$0x75316420]
        %v1910 = vld.sshfl [vmem:[#allocation1 + $0x28] sm:$0xff pattern:$0x75316420]
        %v1911 = vld.sshfl [vmem:[#allocation1 + $0x30] sm:$0xff pattern:$0x75316420]
        %v1912 = vld.sshfl [vmem:[#allocation1 + $0x38] sm:$0xff pattern:$0x75316420]
        %1921 = vst [vmem:[#allocation2 + $0x180] sm:$0xf] %v1905
        %1922 = vst [vmem:[#allocation2 + $0x188] sm:$0xf] %v1906
        %1923 = vst [vmem:[#allocation2 + $0x190] sm:$0xf] %v1907
        %1924 = vst [vmem:[#allocation2 + $0x198] sm:$0xf] %v1908
        %1925 = vst [vmem:[#allocation2 + $0x1a0] sm:$0xf] %v1909
        %1926 = vst [vmem:[#allocation2 + $0x1a8] sm:$0xf] %v1910
        %1927 = vst [vmem:[#allocation2 + $0x1b0] sm:$0xf] %v1911
        %1928 = vst [vmem:[#allocation2 + $0x1b8] sm:$0xf] %v1912
        %1933 = vst [vmem:[#allocation1] ss:$2 sm:$0xff] %v1890
        %s1934 = scalar_lea.vmem [#allocation1], 16
        %1935 = vst [vmem:[%s1934] ss:$2 sm:$0xff] %v1891
        %s1936 = scalar_lea.vmem [#allocation1], 32
        %1937 = vst [vmem:[%s1936] ss:$2 sm:$0xff] %v1892
        %s1938 = scalar_lea.vmem [#allocation1], 48
        %1939 = vst [vmem:[%s1938] ss:$2 sm:$0xff] %v1893
        %v1940 = vld.sshfl [vmem:[#allocation1] sm:$0xff pattern:$0x75316420]
        %v1941 = vld.sshfl [vmem:[#allocation1 + $0x8] sm:$0xff pattern:$0x75316420]
        %v1942 = vld.sshfl [vmem:[#allocation1 + $0x10] sm:$0xff pattern:$0x75316420]
        %v1943 = vld.sshfl [vmem:[#allocation1 + $0x18] sm:$0xff pattern:$0x75316420]
        %v1944 = vld.sshfl [vmem:[#allocation1 + $0x20] sm:$0xff pattern:$0x75316420]
        %v1945 = vld.sshfl [vmem:[#allocation1 + $0x28] sm:$0xff pattern:$0x75316420]
        %v1946 = vld.sshfl [vmem:[#allocation1 + $0x30] sm:$0xff pattern:$0x75316420]
        %v1947 = vld.sshfl [vmem:[#allocation1 + $0x38] sm:$0xff pattern:$0x75316420]
        %1956 = vst [vmem:[#allocation2 + $0x1c0] sm:$0xf] %v1940
        %1957 = vst [vmem:[#allocation2 + $0x1c8] sm:$0xf] %v1941
        %1958 = vst [vmem:[#allocation2 + $0x1d0] sm:$0xf] %v1942
        %1959 = vst [vmem:[#allocation2 + $0x1d8] sm:$0xf] %v1943
        %1960 = vst [vmem:[#allocation2 + $0x1e0] sm:$0xf] %v1944
        %1961 = vst [vmem:[#allocation2 + $0x1e8] sm:$0xf] %v1945
        %1962 = vst [vmem:[#allocation2 + $0x1f0] sm:$0xf] %v1946
        %1963 = vst [vmem:[#allocation2 + $0x1f8] sm:$0xf] %v1947
        %v1964 = vmul.f32 %v1878, 2.0
        %v1965 = vmul.f32 %v1879, 2.0
        %v1966 = vmul.f32 %v1880, 2.0
        %v1967 = vmul.f32 %v1881, 2.0
        %v1968 = vmul.f32 %v1964, %v1890
        %v1969 = vmul.f32 %v1965, %v1891
        %v1970 = vmul.f32 %v1966, %v1892
        %v1971 = vmul.f32 %v1967, %v1893
        %v1972 = vmul.f32 %v1890, 2.0
        %v1973 = vmul.f32 %v1891, 2.0
        %v1974 = vmul.f32 %v1892, 2.0
        %v1975 = vmul.f32 %v1893, 2.0
        %v1976 = vmul.f32 %v1972, %v1890
        %v1977 = vmul.f32 %v1973, %v1891
        %v1978 = vmul.f32 %v1974, %v1892
        %v1979 = vmul.f32 %v1975, %v1893
        %v1980 = vsub.f32 %v1976, 1.0
        %v1981 = vsub.f32 %v1977, 1.0
        %v1982 = vsub.f32 %v1978, 1.0
        %v1983 = vsub.f32 %v1979, 1.0
        %1988 = vst [vmem:[#allocation1] ss:$2 sm:$0xff] %v1968
        %s1989 = scalar_lea.vmem [#allocation1], 16
        %1990 = vst [vmem:[%s1989] ss:$2 sm:$0xff] %v1969
        %s1991 = scalar_lea.vmem [#allocation1], 32
        %1992 = vst [vmem:[%s1991] ss:$2 sm:$0xff] %v1970
        %s1993 = scalar_lea.vmem [#allocation1], 48
        %1994 = vst [vmem:[%s1993] ss:$2 sm:$0xff] %v1971
        %v1995 = vld.sshfl [vmem:[#allocation1] sm:$0xff pattern:$0x75316420]
        %v1996 = vld.sshfl [vmem:[#allocation1 + $0x8] sm:$0xff pattern:$0x75316420]
        %v1997 = vld.sshfl [vmem:[#allocation1 + $0x10] sm:$0xff pattern:$0x75316420]
        %v1998 = vld.sshfl [vmem:[#allocation1 + $0x18] sm:$0xff pattern:$0x75316420]
        %v1999 = vld.sshfl [vmem:[#allocation1 + $0x20] sm:$0xff pattern:$0x75316420]
        %v2000 = vld.sshfl [vmem:[#allocation1 + $0x28] sm:$0xff pattern:$0x75316420]
        %v2001 = vld.sshfl [vmem:[#allocation1 + $0x30] sm:$0xff pattern:$0x75316420]
        %v2002 = vld.sshfl [vmem:[#allocation1 + $0x38] sm:$0xff pattern:$0x75316420]
        %2011 = vst [vmem:[#allocation2 + $0x200] sm:$0xf] %v1995
        %2012 = vst [vmem:[#allocation2 + $0x208] sm:$0xf] %v1996
        %2013 = vst [vmem:[#allocation2 + $0x210] sm:$0xf] %v1997
        %2014 = vst [vmem:[#allocation2 + $0x218] sm:$0xf] %v1998
        %2015 = vst [vmem:[#allocation2 + $0x220] sm:$0xf] %v1999
        %2016 = vst [vmem:[#allocation2 + $0x228] sm:$0xf] %v2000
        %2017 = vst [vmem:[#allocation2 + $0x230] sm:$0xf] %v2001
        %2018 = vst [vmem:[#allocation2 + $0x238] sm:$0xf] %v2002
        %2023 = vst [vmem:[#allocation1] ss:$2 sm:$0xff] %v1980
        %s2024 = scalar_lea.vmem [#allocation1], 16
        %2025 = vst [vmem:[%s2024] ss:$2 sm:$0xff] %v1981
        %s2026 = scalar_lea.vmem [#allocation1], 32
        %2027 = vst [vmem:[%s2026] ss:$2 sm:$0xff] %v1982
        %s2028 = scalar_lea.vmem [#allocation1], 48
        %2029 = vst [vmem:[%s2028] ss:$2 sm:$0xff] %v1983
        %v2030 = vld.sshfl [vmem:[#allocation1] sm:$0xff pattern:$0x75316420]
        %v2031 = vld.sshfl [vmem:[#allocation1 + $0x8] sm:$0xff pattern:$0x75316420]
        %v2032 = vld.sshfl [vmem:[#allocation1 + $0x10] sm:$0xff pattern:$0x75316420]
        %v2033 = vld.sshfl [vmem:[#allocation1 + $0x18] sm:$0xff pattern:$0x75316420]
        %v2034 = vld.sshfl [vmem:[#allocation1 + $0x20] sm:$0xff pattern:$0x75316420]
        %v2035 = vld.sshfl [vmem:[#allocation1 + $0x28] sm:$0xff pattern:$0x75316420]
        %v2036 = vld.sshfl [vmem:[#allocation1 + $0x30] sm:$0xff pattern:$0x75316420]
        %v2037 = vld.sshfl [vmem:[#allocation1 + $0x38] sm:$0xff pattern:$0x75316420]
        %2046 = vst [vmem:[#allocation2 + $0x240] sm:$0xf] %v2030
        %2047 = vst [vmem:[#allocation2 + $0x248] sm:$0xf] %v2031
        %2048 = vst [vmem:[#allocation2 + $0x250] sm:$0xf] %v2032
        %2049 = vst [vmem:[#allocation2 + $0x258] sm:$0xf] %v2033
        %2050 = vst [vmem:[#allocation2 + $0x260] sm:$0xf] %v2034
        %2051 = vst [vmem:[#allocation2 + $0x268] sm:$0xf] %v2035
        %2052 = vst [vmem:[#allocation2 + $0x270] sm:$0xf] %v2036
        %2053 = vst [vmem:[#allocation2 + $0x278] sm:$0xf] %v2037
        %v2054 = vld [vmem:[#allocation3] sm:$0xff]
        %v2055 = vld [vmem:[#allocation3 + $0x8] sm:$0xff]
        %v2056 = vld [vmem:[#allocation3 + $0x10] sm:$0xff]
        %v2057 = vld [vmem:[#allocation3 + $0x18] sm:$0xff]
        %v2058 = vld [vmem:[#allocation2] sm:$0xff]
        %v2059 = vld [vmem:[#allocation2 + $0x8] sm:$0xff]
        %v2060 = vld [vmem:[#allocation2 + $0x10] sm:$0xff]
        %v2061 = vld [vmem:[#allocation2 + $0x18] sm:$0xff]
        %v2062 = vld [vmem:[#allocation2 + $0x20] sm:$0xff]
        %v2063 = vld [vmem:[#allocation2 + $0x28] sm:$0xff]
        %v2064 = vld [vmem:[#allocation2 + $0x30] sm:$0xff]
        %v2065 = vld [vmem:[#allocation2 + $0x38] sm:$0xff]
        %v2066 = vld [vmem:[#allocation2 + $0x40] sm:$0xff]
        %v2067 = vld [vmem:[#allocation2 + $0x48] sm:$0xff]
        %v2068 = vld [vmem:[#allocation2 + $0x50] sm:$0xff]
        %v2069 = vld [vmem:[#allocation2 + $0x58] sm:$0xff]
        %v2070 = vld [vmem:[#allocation2 + $0x60] sm:$0xff]
        %v2071 = vld [vmem:[#allocation2 + $0x68] sm:$0xff]
        %v2072 = vld [vmem:[#allocation2 + $0x70] sm:$0xff]
        %v2073 = vld [vmem:[#allocation2 + $0x78] sm:$0xff]
        %v2074 = vld [vmem:[#allocation2 + $0x80] sm:$0xff]
        %v2075 = vld [vmem:[#allocation2 + $0x88] sm:$0xff]
        %v2076 = vld [vmem:[#allocation2 + $0x90] sm:$0xff]
        %v2077 = vld [vmem:[#allocation2 + $0x98] sm:$0xff]
        %v2078 = vld [vmem:[#allocation2 + $0xa0] sm:$0xff]
        %v2079 = vld [vmem:[#allocation2 + $0xa8] sm:$0xff]
        %v2080 = vld [vmem:[#allocation2 + $0xb0] sm:$0xff]
        %v2081 = vld [vmem:[#allocation2 + $0xb8] sm:$0xff]
        %v2082 = vld [vmem:[#allocation2 + $0xc0] sm:$0xff]
        %v2083 = vld [vmem:[#allocation2 + $0xc8] sm:$0xff]
        %v2084 = vld [vmem:[#allocation2 + $0xd0] sm:$0xff]
        %v2085 = vld [vmem:[#allocation2 + $0xd8] sm:$0xff]
        %v2086 = vld [vmem:[#allocation2 + $0xe0] sm:$0xff]
        %v2087 = vld [vmem:[#allocation2 + $0xe8] sm:$0xff]
        %v2088 = vld [vmem:[#allocation2 + $0xf0] sm:$0xff]
        %v2089 = vld [vmem:[#allocation2 + $0xf8] sm:$0xff]
        %v2090 = vld [vmem:[#allocation2 + $0x100] sm:$0xff]
        %v2091 = vld [vmem:[#allocation2 + $0x108] sm:$0xff]
        %v2092 = vld [vmem:[#allocation2 + $0x110] sm:$0xff]
        %v2093 = vld [vmem:[#allocation2 + $0x118] sm:$0xff]
        %v2094 = vld [vmem:[#allocation2 + $0x120] sm:$0xff]
        %v2095 = vld [vmem:[#allocation2 + $0x128] sm:$0xff]
        %v2096 = vld [vmem:[#allocation2 + $0x130] sm:$0xff]
        %v2097 = vld [vmem:[#allocation2 + $0x138] sm:$0xff]
        %v2098 = vld [vmem:[#allocation2 + $0x140] sm:$0xff]
        %v2099 = vld [vmem:[#allocation2 + $0x148] sm:$0xff]
        %v2100 = vld [vmem:[#allocation2 + $0x150] sm:$0xff]
        %v2101 = vld [vmem:[#allocation2 + $0x158] sm:$0xff]
        %v2102 = vld [vmem:[#allocation2 + $0x160] sm:$0xff]
        %v2103 = vld [vmem:[#allocation2 + $0x168] sm:$0xff]
        %v2104 = vld [vmem:[#allocation2 + $0x170] sm:$0xff]
        %v2105 = vld [vmem:[#allocation2 + $0x178] sm:$0xff]
        %v2106 = vld [vmem:[#allocation2 + $0x180] sm:$0xff]
        %v2107 = vld [vmem:[#allocation2 + $0x188] sm:$0xff]
        %v2108 = vld [vmem:[#allocation2 + $0x190] sm:$0xff]
        %v2109 = vld [vmem:[#allocation2 + $0x198] sm:$0xff]
        %v2110 = vld [vmem:[#allocation2 + $0x1a0] sm:$0xff]
        %v2111 = vld [vmem:[#allocation2 + $0x1a8] sm:$0xff]
        %v2112 = vld [vmem:[#allocation2 + $0x1b0] sm:$0xff]
        %v2113 = vld [vmem:[#allocation2 + $0x1b8] sm:$0xff]
        %v2114 = vld [vmem:[#allocation2 + $0x1c0] sm:$0xff]
        %v2115 = vld [vmem:[#allocation2 + $0x1c8] sm:$0xff]
        %v2116 = vld [vmem:[#allocation2 + $0x1d0] sm:$0xff]
        %v2117 = vld [vmem:[#allocation2 + $0x1d8] sm:$0xff]
        %v2118 = vld [vmem:[#allocation2 + $0x1e0] sm:$0xff]
        %v2119 = vld [vmem:[#allocation2 + $0x1e8] sm:$0xff]
        %v2120 = vld [vmem:[#allocation2 + $0x1f0] sm:$0xff]
        %v2121 = vld [vmem:[#allocation2 + $0x1f8] sm:$0xff]
        %v2122 = vld [vmem:[#allocation2 + $0x200] sm:$0xff]
        %v2123 = vld [vmem:[#allocation2 + $0x208] sm:$0xff]
        %v2124 = vld [vmem:[#allocation2 + $0x210] sm:$0xff]
        %v2125 = vld [vmem:[#allocation2 + $0x218] sm:$0xff]
        %v2126 = vld [vmem:[#allocation2 + $0x220] sm:$0xff]
        %v2127 = vld [vmem:[#allocation2 + $0x228] sm:$0xff]
        %v2128 = vld [vmem:[#allocation2 + $0x230] sm:$0xff]
        %v2129 = vld [vmem:[#allocation2 + $0x238] sm:$0xff]
        %v2130 = vld [vmem:[#allocation2 + $0x240] sm:$0xff]
        %v2131 = vld [vmem:[#allocation2 + $0x248] sm:$0xff]
        %v2132 = vld [vmem:[#allocation2 + $0x250] sm:$0xff]
        %v2133 = vld [vmem:[#allocation2 + $0x258] sm:$0xff]
        %v2134 = vld [vmem:[#allocation2 + $0x260] sm:$0xff]
        %v2135 = vld [vmem:[#allocation2 + $0x268] sm:$0xff]
        %v2136 = vld [vmem:[#allocation2 + $0x270] sm:$0xff]
        %v2137 = vld [vmem:[#allocation2 + $0x278] sm:$0xff]
        %vm2138 = vcmask 654336
        %v2140 = vsel %vm2138, %v2054, 0
        %v2143 = vsel %vm2138, %v2055, 0
        %v2146 = vsel %vm2138, %v2056, 0
        %v2149 = vsel %vm2138, %v2057, 0
        %2151 = vmatpush.msra.mxu0 0.0
        %2152 = vmatpush.msra.mxu0 0.0
        %2153 = vmatpush.msra.mxu0 0.0
        %2154 = vmatpush.msra.mxu0 0.0
        %2155 = vmatpush.msra.mxu0 0.0
        %2156 = vmatpush.msra.mxu0 0.0
        %2157 = vmatpush.msra.mxu0 %v2130
        %2158 = vmatpush.msra.mxu0 %v2122
        %2159 = vmatpush.msra.mxu0 %v2114
        %2160 = vmatpush.msra.mxu0 %v2106
        %2161 = vmatpush.msra.mxu0 %v2098
        %2162 = vmatpush.msra.mxu0 %v2090
        %2163 = vmatpush.msra.mxu0 %v2082
        %2164 = vmatpush.msra.mxu0 %v2074
        %2165 = vmatpush.msra.mxu0 %v2066
        %2166 = vmatpush.msra.mxu0 %v2058
        %2167 = vmatmul.f32.gmra.mxu0 %v2140
        %v2168 = vpop.f32.mrf.mxu0
        %v2169 = vadd.f32 0.0, %v2168
        %2170 = vmatmul.f32.gmra.mxu0 %v2143
        %v2171 = vpop.f32.mrf.mxu0
        %v2172 = vadd.f32 0.0, %v2171
        %2173 = vmatmul.f32.gmra.mxu0 %v2146
        %v2174 = vpop.f32.mrf.mxu0
        %v2175 = vadd.f32 0.0, %v2174
        %2176 = vmatmul.f32.gmra.mxu0 %v2149
        %v2177 = vpop.f32.mrf.mxu0
        %v2178 = vadd.f32 0.0, %v2177
        %2179 = vdwg.mxu0
        %2180 = vmatpush.msra.mxu0 0.0
        %2181 = vmatpush.msra.mxu0 0.0
        %2182 = vmatpush.msra.mxu0 0.0
        %2183 = vmatpush.msra.mxu0 0.0
        %2184 = vmatpush.msra.mxu0 0.0
        %2185 = vmatpush.msra.mxu0 0.0
        %2186 = vmatpush.msra.mxu0 %v2131
        %2187 = vmatpush.msra.mxu0 %v2123
        %2188 = vmatpush.msra.mxu0 %v2115
        %2189 = vmatpush.msra.mxu0 %v2107
        %2190 = vmatpush.msra.mxu0 %v2099
        %2191 = vmatpush.msra.mxu0 %v2091
        %2192 = vmatpush.msra.mxu0 %v2083
        %2193 = vmatpush.msra.mxu0 %v2075
        %2194 = vmatpush.msra.mxu0 %v2067
        %2195 = vmatpush.msra.mxu0 %v2059
        %2196 = vmatmul.f32.gmra.mxu0 %v2140
        %v2197 = vpop.f32.mrf.mxu0
        %v2198 = vadd.f32 0.0, %v2197
        %2199 = vmatmul.f32.gmra.mxu0 %v2143
        %v2200 = vpop.f32.mrf.mxu0
        %v2201 = vadd.f32 0.0, %v2200
        %2202 = vmatmul.f32.gmra.mxu0 %v2146
        %v2203 = vpop.f32.mrf.mxu0
        %v2204 = vadd.f32 0.0, %v2203
        %2205 = vmatmul.f32.gmra.mxu0 %v2149
        %v2206 = vpop.f32.mrf.mxu0
        %v2207 = vadd.f32 0.0, %v2206
        %2208 = vdwg.mxu0
        %2209 = vmatpush.msra.mxu0 0.0
        %2210 = vmatpush.msra.mxu0 0.0
        %2211 = vmatpush.msra.mxu0 0.0
        %2212 = vmatpush.msra.mxu0 0.0
        %2213 = vmatpush.msra.mxu0 0.0
        %2214 = vmatpush.msra.mxu0 0.0
        %2215 = vmatpush.msra.mxu0 %v2132
        %2216 = vmatpush.msra.mxu0 %v2124
        %2217 = vmatpush.msra.mxu0 %v2116
        %2218 = vmatpush.msra.mxu0 %v2108
        %2219 = vmatpush.msra.mxu0 %v2100
        %2220 = vmatpush.msra.mxu0 %v2092
        %2221 = vmatpush.msra.mxu0 %v2084
        %2222 = vmatpush.msra.mxu0 %v2076
        %2223 = vmatpush.msra.mxu0 %v2068
        %2224 = vmatpush.msra.mxu0 %v2060
        %2225 = vmatmul.f32.gmra.mxu0 %v2140
        %v2226 = vpop.f32.mrf.mxu0
        %v2227 = vadd.f32 0.0, %v2226
        %2228 = vmatmul.f32.gmra.mxu0 %v2143
        %v2229 = vpop.f32.mrf.mxu0
        %v2230 = vadd.f32 0.0, %v2229
        %2231 = vmatmul.f32.gmra.mxu0 %v2146
        %v2232 = vpop.f32.mrf.mxu0
        %v2233 = vadd.f32 0.0, %v2232
        %2234 = vmatmul.f32.gmra.mxu0 %v2149
        %v2235 = vpop.f32.mrf.mxu0
        %v2236 = vadd.f32 0.0, %v2235
        %2237 = vdwg.mxu0
        %2238 = vmatpush.msra.mxu0 0.0
        %2239 = vmatpush.msra.mxu0 0.0
        %2240 = vmatpush.msra.mxu0 0.0
        %2241 = vmatpush.msra.mxu0 0.0
        %2242 = vmatpush.msra.mxu0 0.0
        %2243 = vmatpush.msra.mxu0 0.0
        %2244 = vmatpush.msra.mxu0 %v2133
        %2245 = vmatpush.msra.mxu0 %v2125
        %2246 = vmatpush.msra.mxu0 %v2117
        %2247 = vmatpush.msra.mxu0 %v2109
        %2248 = vmatpush.msra.mxu0 %v2101
        %2249 = vmatpush.msra.mxu0 %v2093
        %2250 = vmatpush.msra.mxu0 %v2085
        %2251 = vmatpush.msra.mxu0 %v2077
        %2252 = vmatpush.msra.mxu0 %v2069
        %2253 = vmatpush.msra.mxu0 %v2061
        %2254 = vmatmul.f32.gmra.mxu0 %v2140
        %v2255 = vpop.f32.mrf.mxu0
        %v2256 = vadd.f32 0.0, %v2255
        %2257 = vmatmul.f32.gmra.mxu0 %v2143
        %v2258 = vpop.f32.mrf.mxu0
        %v2259 = vadd.f32 0.0, %v2258
        %2260 = vmatmul.f32.gmra.mxu0 %v2146
        %v2261 = vpop.f32.mrf.mxu0
        %v2262 = vadd.f32 0.0, %v2261
        %2263 = vmatmul.f32.gmra.mxu0 %v2149
        %v2264 = vpop.f32.mrf.mxu0
        %v2265 = vadd.f32 0.0, %v2264
        %2266 = vdwg.mxu0
        %2267 = vmatpush.msra.mxu0 0.0
        %2268 = vmatpush.msra.mxu0 0.0
        %2269 = vmatpush.msra.mxu0 0.0
        %2270 = vmatpush.msra.mxu0 0.0
        %2271 = vmatpush.msra.mxu0 0.0
        %2272 = vmatpush.msra.mxu0 0.0
        %2273 = vmatpush.msra.mxu0 %v2134
        %2274 = vmatpush.msra.mxu0 %v2126
        %2275 = vmatpush.msra.mxu0 %v2118
        %2276 = vmatpush.msra.mxu0 %v2110
        %2277 = vmatpush.msra.mxu0 %v2102
        %2278 = vmatpush.msra.mxu0 %v2094
        %2279 = vmatpush.msra.mxu0 %v2086
        %2280 = vmatpush.msra.mxu0 %v2078
        %2281 = vmatpush.msra.mxu0 %v2070
        %2282 = vmatpush.msra.mxu0 %v2062
        %2283 = vmatmul.f32.gmra.mxu0 %v2140
        %v2284 = vpop.f32.mrf.mxu0
        %v2285 = vadd.f32 0.0, %v2284
        %2286 = vmatmul.f32.gmra.mxu0 %v2143
        %v2287 = vpop.f32.mrf.mxu0
        %v2288 = vadd.f32 0.0, %v2287
        %2289 = vmatmul.f32.gmra.mxu0 %v2146
        %v2290 = vpop.f32.mrf.mxu0
        %v2291 = vadd.f32 0.0, %v2290
        %2292 = vmatmul.f32.gmra.mxu0 %v2149
        %v2293 = vpop.f32.mrf.mxu0
        %v2294 = vadd.f32 0.0, %v2293
        %2295 = vdwg.mxu0
        %2296 = vmatpush.msra.mxu0 0.0
        %2297 = vmatpush.msra.mxu0 0.0
        %2298 = vmatpush.msra.mxu0 0.0
        %2299 = vmatpush.msra.mxu0 0.0
        %2300 = vmatpush.msra.mxu0 0.0
        %2301 = vmatpush.msra.mxu0 0.0
        %2302 = vmatpush.msra.mxu0 %v2135
        %2303 = vmatpush.msra.mxu0 %v2127
        %2304 = vmatpush.msra.mxu0 %v2119
        %2305 = vmatpush.msra.mxu0 %v2111
        %2306 = vmatpush.msra.mxu0 %v2103
        %2307 = vmatpush.msra.mxu0 %v2095
        %2308 = vmatpush.msra.mxu0 %v2087
        %2309 = vmatpush.msra.mxu0 %v2079
        %2310 = vmatpush.msra.mxu0 %v2071
        %2311 = vmatpush.msra.mxu0 %v2063
        %2312 = vmatmul.f32.gmra.mxu0 %v2140
        %v2313 = vpop.f32.mrf.mxu0
        %v2314 = vadd.f32 0.0, %v2313
        %2315 = vmatmul.f32.gmra.mxu0 %v2143
        %v2316 = vpop.f32.mrf.mxu0
        %v2317 = vadd.f32 0.0, %v2316
        %2318 = vmatmul.f32.gmra.mxu0 %v2146
        %v2319 = vpop.f32.mrf.mxu0
        %v2320 = vadd.f32 0.0, %v2319
        %2321 = vmatmul.f32.gmra.mxu0 %v2149
        %v2322 = vpop.f32.mrf.mxu0
        %v2323 = vadd.f32 0.0, %v2322
        %2324 = vdwg.mxu0
        %2325 = vmatpush.msra.mxu0 0.0
        %2326 = vmatpush.msra.mxu0 0.0
        %2327 = vmatpush.msra.mxu0 0.0
        %2328 = vmatpush.msra.mxu0 0.0
        %2329 = vmatpush.msra.mxu0 0.0
        %2330 = vmatpush.msra.mxu0 0.0
        %2331 = vmatpush.msra.mxu0 %v2136
        %2332 = vmatpush.msra.mxu0 %v2128
        %2333 = vmatpush.msra.mxu0 %v2120
        %2334 = vmatpush.msra.mxu0 %v2112
        %2335 = vmatpush.msra.mxu0 %v2104
        %2336 = vmatpush.msra.mxu0 %v2096
        %2337 = vmatpush.msra.mxu0 %v2088
        %2338 = vmatpush.msra.mxu0 %v2080
        %2339 = vmatpush.msra.mxu0 %v2072
        %2340 = vmatpush.msra.mxu0 %v2064
        %2341 = vmatmul.f32.gmra.mxu0 %v2140
        %v2342 = vpop.f32.mrf.mxu0
        %v2343 = vadd.f32 0.0, %v2342
        %2344 = vmatmul.f32.gmra.mxu0 %v2143
        %v2345 = vpop.f32.mrf.mxu0
        %v2346 = vadd.f32 0.0, %v2345
        %2347 = vmatmul.f32.gmra.mxu0 %v2146
        %v2348 = vpop.f32.mrf.mxu0
        %v2349 = vadd.f32 0.0, %v2348
        %2350 = vmatmul.f32.gmra.mxu0 %v2149
        %v2351 = vpop.f32.mrf.mxu0
        %v2352 = vadd.f32 0.0, %v2351
        %2353 = vdwg.mxu0
        %2354 = vmatpush.msra.mxu0 0.0
        %2355 = vmatpush.msra.mxu0 0.0
        %2356 = vmatpush.msra.mxu0 0.0
        %2357 = vmatpush.msra.mxu0 0.0
        %2358 = vmatpush.msra.mxu0 0.0
        %2359 = vmatpush.msra.mxu0 0.0
        %2360 = vmatpush.msra.mxu0 %v2137
        %2361 = vmatpush.msra.mxu0 %v2129
        %2362 = vmatpush.msra.mxu0 %v2121
        %2363 = vmatpush.msra.mxu0 %v2113
        %2364 = vmatpush.msra.mxu0 %v2105
        %2365 = vmatpush.msra.mxu0 %v2097
        %2366 = vmatpush.msra.mxu0 %v2089
        %2367 = vmatpush.msra.mxu0 %v2081
        %2368 = vmatpush.msra.mxu0 %v2073
        %2369 = vmatpush.msra.mxu0 %v2065
        %2370 = vmatmul.f32.gmra.mxu0 %v2140
        %v2371 = vpop.f32.mrf.mxu0
        %v2372 = vadd.f32 0.0, %v2371
        %2373 = vmatmul.f32.gmra.mxu0 %v2143
        %v2374 = vpop.f32.mrf.mxu0
        %v2375 = vadd.f32 0.0, %v2374
        %2376 = vmatmul.f32.gmra.mxu0 %v2146
        %v2377 = vpop.f32.mrf.mxu0
        %v2378 = vadd.f32 0.0, %v2377
        %2379 = vmatmul.f32.gmra.mxu0 %v2149
        %v2380 = vpop.f32.mrf.mxu0
        %v2381 = vadd.f32 0.0, %v2380
        %2382 = vdwg.mxu0
        %v2383 = vmax.f32 %v2169, 0.0
        %v2384 = vmax.f32 %v2198, 0.0
        %v2385 = vmax.f32 %v2227, 0.0
        %v2386 = vmax.f32 %v2256, 0.0
        %v2387 = vmax.f32 %v2285, 0.0
        %v2388 = vmax.f32 %v2314, 0.0
        %v2389 = vmax.f32 %v2343, 0.0
        %v2390 = vmax.f32 %v2372, 0.0
        %v2391 = vmax.f32 %v2172, 0.0
        %v2392 = vmax.f32 %v2201, 0.0
        %v2393 = vmax.f32 %v2230, 0.0
        %v2394 = vmax.f32 %v2259, 0.0
        %v2395 = vmax.f32 %v2288, 0.0
        %v2396 = vmax.f32 %v2317, 0.0
        %v2397 = vmax.f32 %v2346, 0.0
        %v2398 = vmax.f32 %v2375, 0.0
        %v2399 = vmax.f32 %v2175, 0.0
        %v2400 = vmax.f32 %v2204, 0.0
        %v2401 = vmax.f32 %v2233, 0.0
        %v2402 = vmax.f32 %v2262, 0.0
        %v2403 = vmax.f32 %v2291, 0.0
        %v2404 = vmax.f32 %v2320, 0.0
        %v2405 = vmax.f32 %v2349, 0.0
        %v2406 = vmax.f32 %v2378, 0.0
        %v2407 = vmax.f32 %v2178, 0.0
        %v2408 = vmax.f32 %v2207, 0.0
        %v2409 = vmax.f32 %v2236, 0.0
        %v2410 = vmax.f32 %v2265, 0.0
        %v2411 = vmax.f32 %v2294, 0.0
        %v2412 = vmax.f32 %v2323, 0.0
        %v2413 = vmax.f32 %v2352, 0.0
        %v2414 = vmax.f32 %v2381, 0.0
        %v2415 = vld [vmem:[#allocation6] sm:$0xff]
        %v2416 = vld [vmem:[#allocation6 + $0x8] sm:$0xff]
        %v2417 = vld [vmem:[#allocation6 + $0x10] sm:$0xff]
        %v2418 = vld [vmem:[#allocation6 + $0x18] sm:$0xff]
        %v2419 = vld [vmem:[%s3] sm:$0xff]
        %v2420 = vld [vmem:[%s3 + $0x8] sm:$0xff]
        %v2421 = vld [vmem:[%s3 + $0x10] sm:$0xff]
        %v2422 = vld [vmem:[%s3 + $0x18] sm:$0xff]
        %2424 = vset.pattern.permute.xlu0 0
        %2425 = vperm.xlu0 %2424, %v2419
        %v2426 = vpop.permute.xlu0 %2425
        %2429 = vset.pattern.permute.xlu0 0
        %2430 = vperm.xlu0 %2429, %v2420
        %v2431 = vpop.permute.xlu0 %2430
        %2434 = vset.pattern.permute.xlu0 0
        %2435 = vperm.xlu0 %2434, %v2421
        %v2436 = vpop.permute.xlu0 %2435
        %2439 = vset.pattern.permute.xlu0 0
        %2440 = vperm.xlu0 %2439, %v2422
        %v2441 = vpop.permute.xlu0 %2440
        %vm2443 = vcmask 261120
        %v2445 = vsel %vm2443, %v2415, 0
        %v2448 = vsel %vm2443, %v2416, 0
        %v2451 = vsel %vm2443, %v2417, 0
        %v2454 = vsel %vm2443, %v2418, 0
        %2456 = vmatpush.msra.mxu0 0.0
        %2457 = vmatpush.msra.mxu0 0.0
        %2458 = vmatpush.msra.mxu0 0.0
        %2459 = vmatpush.msra.mxu0 0.0
        %2460 = vmatpush.msra.mxu0 0.0
        %2461 = vmatpush.msra.mxu0 0.0
        %2462 = vmatpush.msra.mxu0 0.0
        %2463 = vmatpush.msra.mxu0 0.0
        %2464 = vmatpush.msra.mxu0 0.0
        %2465 = vmatpush.msra.mxu0 0.0
        %2466 = vmatpush.msra.mxu0 0.0
        %2467 = vmatpush.msra.mxu0 0.0
        %2468 = vmatpush.msra.mxu0 %v2407
        %2469 = vmatpush.msra.mxu0 %v2399
        %2470 = vmatpush.msra.mxu0 %v2391
        %2471 = vmatpush.msra.mxu0 %v2383
        %2472 = vmatmul.f32.gmra.mxu0 %v2445
        %v2473 = vpop.f32.mrf.mxu0
        %v2474 = vadd.f32 %v2426, %v2473
        %2475 = vmatmul.f32.gmra.mxu0 %v2448
        %v2476 = vpop.f32.mrf.mxu0
        %v2477 = vadd.f32 %v2431, %v2476
        %2478 = vmatmul.f32.gmra.mxu0 %v2451
        %v2479 = vpop.f32.mrf.mxu0
        %v2480 = vadd.f32 %v2436, %v2479
        %2481 = vmatmul.f32.gmra.mxu0 %v2454
        %v2482 = vpop.f32.mrf.mxu0
        %v2483 = vadd.f32 %v2441, %v2482
        %2484 = vdwg.mxu0
        %2485 = vmatpush.msra.mxu0 0.0
        %2486 = vmatpush.msra.mxu0 0.0
        %2487 = vmatpush.msra.mxu0 0.0
        %2488 = vmatpush.msra.mxu0 0.0
        %2489 = vmatpush.msra.mxu0 0.0
        %2490 = vmatpush.msra.mxu0 0.0
        %2491 = vmatpush.msra.mxu0 0.0
        %2492 = vmatpush.msra.mxu0 0.0
        %2493 = vmatpush.msra.mxu0 0.0
        %2494 = vmatpush.msra.mxu0 0.0
        %2495 = vmatpush.msra.mxu0 0.0
        %2496 = vmatpush.msra.mxu0 0.0
        %2497 = vmatpush.msra.mxu0 %v2408
        %2498 = vmatpush.msra.mxu0 %v2400
        %2499 = vmatpush.msra.mxu0 %v2392
        %2500 = vmatpush.msra.mxu0 %v2384
        %2501 = vmatmul.f32.gmra.mxu0 %v2445
        %v2502 = vpop.f32.mrf.mxu0
        %v2503 = vadd.f32 %v2426, %v2502
        %2504 = vmatmul.f32.gmra.mxu0 %v2448
        %v2505 = vpop.f32.mrf.mxu0
        %v2506 = vadd.f32 %v2431, %v2505
        %2507 = vmatmul.f32.gmra.mxu0 %v2451
        %v2508 = vpop.f32.mrf.mxu0
        %v2509 = vadd.f32 %v2436, %v2508
        %2510 = vmatmul.f32.gmra.mxu0 %v2454
        %v2511 = vpop.f32.mrf.mxu0
        %v2512 = vadd.f32 %v2441, %v2511
        %2513 = vdwg.mxu0
        %2514 = vmatpush.msra.mxu0 0.0
        %2515 = vmatpush.msra.mxu0 0.0
        %2516 = vmatpush.msra.mxu0 0.0
        %2517 = vmatpush.msra.mxu0 0.0
        %2518 = vmatpush.msra.mxu0 0.0
        %2519 = vmatpush.msra.mxu0 0.0
        %2520 = vmatpush.msra.mxu0 0.0
        %2521 = vmatpush.msra.mxu0 0.0
        %2522 = vmatpush.msra.mxu0 0.0
        %2523 = vmatpush.msra.mxu0 0.0
        %2524 = vmatpush.msra.mxu0 0.0
        %2525 = vmatpush.msra.mxu0 0.0
        %2526 = vmatpush.msra.mxu0 %v2409
        %2527 = vmatpush.msra.mxu0 %v2401
        %2528 = vmatpush.msra.mxu0 %v2393
        %2529 = vmatpush.msra.mxu0 %v2385
        %2530 = vmatmul.f32.gmra.mxu0 %v2445
        %v2531 = vpop.f32.mrf.mxu0
        %v2532 = vadd.f32 %v2426, %v2531
        %2533 = vmatmul.f32.gmra.mxu0 %v2448
        %v2534 = vpop.f32.mrf.mxu0
        %v2535 = vadd.f32 %v2431, %v2534
        %2536 = vmatmul.f32.gmra.mxu0 %v2451
        %v2537 = vpop.f32.mrf.mxu0
        %v2538 = vadd.f32 %v2436, %v2537
        %2539 = vmatmul.f32.gmra.mxu0 %v2454
        %v2540 = vpop.f32.mrf.mxu0
        %v2541 = vadd.f32 %v2441, %v2540
        %2542 = vdwg.mxu0
        %2543 = vmatpush.msra.mxu0 0.0
        %2544 = vmatpush.msra.mxu0 0.0
        %2545 = vmatpush.msra.mxu0 0.0
        %2546 = vmatpush.msra.mxu0 0.0
        %2547 = vmatpush.msra.mxu0 0.0
        %2548 = vmatpush.msra.mxu0 0.0
        %2549 = vmatpush.msra.mxu0 0.0
        %2550 = vmatpush.msra.mxu0 0.0
        %2551 = vmatpush.msra.mxu0 0.0
        %2552 = vmatpush.msra.mxu0 0.0
        %2553 = vmatpush.msra.mxu0 0.0
        %2554 = vmatpush.msra.mxu0 0.0
        %2555 = vmatpush.msra.mxu0 %v2410
        %2556 = vmatpush.msra.mxu0 %v2402
        %2557 = vmatpush.msra.mxu0 %v2394
        %2558 = vmatpush.msra.mxu0 %v2386
        %2559 = vmatmul.f32.gmra.mxu0 %v2445
        %v2560 = vpop.f32.mrf.mxu0
        %v2561 = vadd.f32 %v2426, %v2560
        %2562 = vmatmul.f32.gmra.mxu0 %v2448
        %v2563 = vpop.f32.mrf.mxu0
        %v2564 = vadd.f32 %v2431, %v2563
        %2565 = vmatmul.f32.gmra.mxu0 %v2451
        %v2566 = vpop.f32.mrf.mxu0
        %v2567 = vadd.f32 %v2436, %v2566
        %2568 = vmatmul.f32.gmra.mxu0 %v2454
        %v2569 = vpop.f32.mrf.mxu0
        %v2570 = vadd.f32 %v2441, %v2569
        %2571 = vdwg.mxu0
        %2572 = vmatpush.msra.mxu0 0.0
        %2573 = vmatpush.msra.mxu0 0.0
        %2574 = vmatpush.msra.mxu0 0.0
        %2575 = vmatpush.msra.mxu0 0.0
        %2576 = vmatpush.msra.mxu0 0.0
        %2577 = vmatpush.msra.mxu0 0.0
        %2578 = vmatpush.msra.mxu0 0.0
        %2579 = vmatpush.msra.mxu0 0.0
        %2580 = vmatpush.msra.mxu0 0.0
        %2581 = vmatpush.msra.mxu0 0.0
        %2582 = vmatpush.msra.mxu0 0.0
        %2583 = vmatpush.msra.mxu0 0.0
        %2584 = vmatpush.msra.mxu0 %v2411
        %2585 = vmatpush.msra.mxu0 %v2403
        %2586 = vmatpush.msra.mxu0 %v2395
        %2587 = vmatpush.msra.mxu0 %v2387
        %2588 = vmatmul.f32.gmra.mxu0 %v2445
        %v2589 = vpop.f32.mrf.mxu0
        %v2590 = vadd.f32 %v2426, %v2589
        %2591 = vmatmul.f32.gmra.mxu0 %v2448
        %v2592 = vpop.f32.mrf.mxu0
        %v2593 = vadd.f32 %v2431, %v2592
        %2594 = vmatmul.f32.gmra.mxu0 %v2451
        %v2595 = vpop.f32.mrf.mxu0
        %v2596 = vadd.f32 %v2436, %v2595
        %2597 = vmatmul.f32.gmra.mxu0 %v2454
        %v2598 = vpop.f32.mrf.mxu0
        %v2599 = vadd.f32 %v2441, %v2598
        %2600 = vdwg.mxu0
        %2601 = vmatpush.msra.mxu0 0.0
        %2602 = vmatpush.msra.mxu0 0.0
        %2603 = vmatpush.msra.mxu0 0.0
        %2604 = vmatpush.msra.mxu0 0.0
        %2605 = vmatpush.msra.mxu0 0.0
        %2606 = vmatpush.msra.mxu0 0.0
        %2607 = vmatpush.msra.mxu0 0.0
        %2608 = vmatpush.msra.mxu0 0.0
        %2609 = vmatpush.msra.mxu0 0.0
        %2610 = vmatpush.msra.mxu0 0.0
        %2611 = vmatpush.msra.mxu0 0.0
        %2612 = vmatpush.msra.mxu0 0.0
        %2613 = vmatpush.msra.mxu0 %v2412
        %2614 = vmatpush.msra.mxu0 %v2404
        %2615 = vmatpush.msra.mxu0 %v2396
        %2616 = vmatpush.msra.mxu0 %v2388
        %2617 = vmatmul.f32.gmra.mxu0 %v2445
        %v2618 = vpop.f32.mrf.mxu0
        %v2619 = vadd.f32 %v2426, %v2618
        %2620 = vmatmul.f32.gmra.mxu0 %v2448
        %v2621 = vpop.f32.mrf.mxu0
        %v2622 = vadd.f32 %v2431, %v2621
        %2623 = vmatmul.f32.gmra.mxu0 %v2451
        %v2624 = vpop.f32.mrf.mxu0
        %v2625 = vadd.f32 %v2436, %v2624
        %2626 = vmatmul.f32.gmra.mxu0 %v2454
        %v2627 = vpop.f32.mrf.mxu0
        %v2628 = vadd.f32 %v2441, %v2627
        %2629 = vdwg.mxu0
        %2630 = vmatpush.msra.mxu0 0.0
        %2631 = vmatpush.msra.mxu0 0.0
        %2632 = vmatpush.msra.mxu0 0.0
        %2633 = vmatpush.msra.mxu0 0.0
        %2634 = vmatpush.msra.mxu0 0.0
        %2635 = vmatpush.msra.mxu0 0.0
        %2636 = vmatpush.msra.mxu0 0.0
        %2637 = vmatpush.msra.mxu0 0.0
        %2638 = vmatpush.msra.mxu0 0.0
        %2639 = vmatpush.msra.mxu0 0.0
        %2640 = vmatpush.msra.mxu0 0.0
        %2641 = vmatpush.msra.mxu0 0.0
        %2642 = vmatpush.msra.mxu0 %v2413
        %2643 = vmatpush.msra.mxu0 %v2405
        %2644 = vmatpush.msra.mxu0 %v2397
        %2645 = vmatpush.msra.mxu0 %v2389
        %2646 = vmatmul.f32.gmra.mxu0 %v2445
        %v2647 = vpop.f32.mrf.mxu0
        %v2648 = vadd.f32 %v2426, %v2647
        %2649 = vmatmul.f32.gmra.mxu0 %v2448
        %v2650 = vpop.f32.mrf.mxu0
        %v2651 = vadd.f32 %v2431, %v2650
        %2652 = vmatmul.f32.gmra.mxu0 %v2451
        %v2653 = vpop.f32.mrf.mxu0
        %v2654 = vadd.f32 %v2436, %v2653
        %2655 = vmatmul.f32.gmra.mxu0 %v2454
        %v2656 = vpop.f32.mrf.mxu0
        %v2657 = vadd.f32 %v2441, %v2656
        %2658 = vdwg.mxu0
        %2659 = vmatpush.msra.mxu0 0.0
        %2660 = vmatpush.msra.mxu0 0.0
        %2661 = vmatpush.msra.mxu0 0.0
        %2662 = vmatpush.msra.mxu0 0.0
        %2663 = vmatpush.msra.mxu0 0.0
        %2664 = vmatpush.msra.mxu0 0.0
        %2665 = vmatpush.msra.mxu0 0.0
        %2666 = vmatpush.msra.mxu0 0.0
        %2667 = vmatpush.msra.mxu0 0.0
        %2668 = vmatpush.msra.mxu0 0.0
        %2669 = vmatpush.msra.mxu0 0.0
        %2670 = vmatpush.msra.mxu0 0.0
        %2671 = vmatpush.msra.mxu0 %v2414
        %2672 = vmatpush.msra.mxu0 %v2406
        %2673 = vmatpush.msra.mxu0 %v2398
        %2674 = vmatpush.msra.mxu0 %v2390
        %2675 = vmatmul.f32.gmra.mxu0 %v2445
        %v2676 = vpop.f32.mrf.mxu0
        %v2677 = vadd.f32 %v2426, %v2676
        %2678 = vmatmul.f32.gmra.mxu0 %v2448
        %v2679 = vpop.f32.mrf.mxu0
        %v2680 = vadd.f32 %v2431, %v2679
        %2681 = vmatmul.f32.gmra.mxu0 %v2451
        %v2682 = vpop.f32.mrf.mxu0
        %v2683 = vadd.f32 %v2436, %v2682
        %2684 = vmatmul.f32.gmra.mxu0 %v2454
        %v2685 = vpop.f32.mrf.mxu0
        %v2686 = vadd.f32 %v2441, %v2685
        %2687 = vdwg.mxu0
        %v2688 = vmax.f32 %v2474, 0.0
        %v2689 = vmax.f32 %v2503, 0.0
        %v2690 = vmax.f32 %v2532, 0.0
        %v2691 = vmax.f32 %v2561, 0.0
        %v2692 = vmax.f32 %v2590, 0.0
        %v2693 = vmax.f32 %v2619, 0.0
        %v2694 = vmax.f32 %v2648, 0.0
        %v2695 = vmax.f32 %v2677, 0.0
        %v2696 = vmax.f32 %v2477, 0.0
        %v2697 = vmax.f32 %v2506, 0.0
        %v2698 = vmax.f32 %v2535, 0.0
        %v2699 = vmax.f32 %v2564, 0.0
        %v2700 = vmax.f32 %v2593, 0.0
        %v2701 = vmax.f32 %v2622, 0.0
        %v2702 = vmax.f32 %v2651, 0.0
        %v2703 = vmax.f32 %v2680, 0.0
        %v2704 = vmax.f32 %v2480, 0.0
        %v2705 = vmax.f32 %v2509, 0.0
        %v2706 = vmax.f32 %v2538, 0.0
        %v2707 = vmax.f32 %v2567, 0.0
        %v2708 = vmax.f32 %v2596, 0.0
        %v2709 = vmax.f32 %v2625, 0.0
        %v2710 = vmax.f32 %v2654, 0.0
        %v2711 = vmax.f32 %v2683, 0.0
        %v2712 = vmax.f32 %v2483, 0.0
        %v2713 = vmax.f32 %v2512, 0.0
        %v2714 = vmax.f32 %v2541, 0.0
        %v2715 = vmax.f32 %v2570, 0.0
        %v2716 = vmax.f32 %v2599, 0.0
        %v2717 = vmax.f32 %v2628, 0.0
        %v2718 = vmax.f32 %v2657, 0.0
        %v2719 = vmax.f32 %v2686, 0.0
        %v2720 = vld [vmem:[#allocation8] sm:$0xff]
        %v2721 = vld [vmem:[#allocation8 + $0x8] sm:$0xff]
        %v2722 = vld [vmem:[#allocation8 + $0x10] sm:$0xff]
        %v2723 = vld [vmem:[#allocation8 + $0x18] sm:$0xff]
        %v2724 = vld [vmem:[%s5] sm:$0xff]
        %v2725 = vld [vmem:[%s5 + $0x8] sm:$0xff]
        %v2726 = vld [vmem:[%s5 + $0x10] sm:$0xff]
        %v2727 = vld [vmem:[%s5 + $0x18] sm:$0xff]
        %2729 = vset.pattern.permute.xlu0 0
        %2730 = vperm.xlu0 %2729, %v2724
        %v2731 = vpop.permute.xlu0 %2730
        %2734 = vset.pattern.permute.xlu0 0
        %2735 = vperm.xlu0 %2734, %v2725
        %v2736 = vpop.permute.xlu0 %2735
        %2739 = vset.pattern.permute.xlu0 0
        %2740 = vperm.xlu0 %2739, %v2726
        %v2741 = vpop.permute.xlu0 %2740
        %2744 = vset.pattern.permute.xlu0 0
        %2745 = vperm.xlu0 %2744, %v2727
        %v2746 = vpop.permute.xlu0 %2745
        %v2749 = vsel %vm2443, %v2720, 0
        %v2752 = vsel %vm2443, %v2721, 0
        %v2755 = vsel %vm2443, %v2722, 0
        %v2758 = vsel %vm2443, %v2723, 0
        %2760 = vmatpush.msra.mxu0 0.0
        %2761 = vmatpush.msra.mxu0 0.0
        %2762 = vmatpush.msra.mxu0 0.0
        %2763 = vmatpush.msra.mxu0 0.0
        %2764 = vmatpush.msra.mxu0 0.0
        %2765 = vmatpush.msra.mxu0 0.0
        %2766 = vmatpush.msra.mxu0 0.0
        %2767 = vmatpush.msra.mxu0 0.0
        %2768 = vmatpush.msra.mxu0 0.0
        %2769 = vmatpush.msra.mxu0 0.0
        %2770 = vmatpush.msra.mxu0 0.0
        %2771 = vmatpush.msra.mxu0 0.0
        %2772 = vmatpush.msra.mxu0 %v2712
        %2773 = vmatpush.msra.mxu0 %v2704
        %2774 = vmatpush.msra.mxu0 %v2696
        %2775 = vmatpush.msra.mxu0 %v2688
        %2776 = vmatmul.f32.gmra.mxu0 %v2749
        %v2777 = vpop.f32.mrf.mxu0
        %v2778 = vadd.f32 %v2731, %v2777
        %2779 = vmatmul.f32.gmra.mxu0 %v2752
        %v2780 = vpop.f32.mrf.mxu0
        %v2781 = vadd.f32 %v2736, %v2780
        %2782 = vmatmul.f32.gmra.mxu0 %v2755
        %v2783 = vpop.f32.mrf.mxu0
        %v2784 = vadd.f32 %v2741, %v2783
        %2785 = vmatmul.f32.gmra.mxu0 %v2758
        %v2786 = vpop.f32.mrf.mxu0
        %v2787 = vadd.f32 %v2746, %v2786
        %2788 = vdwg.mxu0
        %2789 = vmatpush.msra.mxu0 0.0
        %2790 = vmatpush.msra.mxu0 0.0
        %2791 = vmatpush.msra.mxu0 0.0
        %2792 = vmatpush.msra.mxu0 0.0
        %2793 = vmatpush.msra.mxu0 0.0
        %2794 = vmatpush.msra.mxu0 0.0
        %2795 = vmatpush.msra.mxu0 0.0
        %2796 = vmatpush.msra.mxu0 0.0
        %2797 = vmatpush.msra.mxu0 0.0
        %2798 = vmatpush.msra.mxu0 0.0
        %2799 = vmatpush.msra.mxu0 0.0
        %2800 = vmatpush.msra.mxu0 0.0
        %2801 = vmatpush.msra.mxu0 %v2713
        %2802 = vmatpush.msra.mxu0 %v2705
        %2803 = vmatpush.msra.mxu0 %v2697
        %2804 = vmatpush.msra.mxu0 %v2689
        %2805 = vmatmul.f32.gmra.mxu0 %v2749
        %v2806 = vpop.f32.mrf.mxu0
        %v2807 = vadd.f32 %v2731, %v2806
        %2808 = vmatmul.f32.gmra.mxu0 %v2752
        %v2809 = vpop.f32.mrf.mxu0
        %v2810 = vadd.f32 %v2736, %v2809
        %2811 = vmatmul.f32.gmra.mxu0 %v2755
        %v2812 = vpop.f32.mrf.mxu0
        %v2813 = vadd.f32 %v2741, %v2812
        %2814 = vmatmul.f32.gmra.mxu0 %v2758
        %v2815 = vpop.f32.mrf.mxu0
        %v2816 = vadd.f32 %v2746, %v2815
        %2817 = vdwg.mxu0
        %2818 = vmatpush.msra.mxu0 0.0
        %2819 = vmatpush.msra.mxu0 0.0
        %2820 = vmatpush.msra.mxu0 0.0
        %2821 = vmatpush.msra.mxu0 0.0
        %2822 = vmatpush.msra.mxu0 0.0
        %2823 = vmatpush.msra.mxu0 0.0
        %2824 = vmatpush.msra.mxu0 0.0
        %2825 = vmatpush.msra.mxu0 0.0
        %2826 = vmatpush.msra.mxu0 0.0
        %2827 = vmatpush.msra.mxu0 0.0
        %2828 = vmatpush.msra.mxu0 0.0
        %2829 = vmatpush.msra.mxu0 0.0
        %2830 = vmatpush.msra.mxu0 %v2714
        %2831 = vmatpush.msra.mxu0 %v2706
        %2832 = vmatpush.msra.mxu0 %v2698
        %2833 = vmatpush.msra.mxu0 %v2690
        %2834 = vmatmul.f32.gmra.mxu0 %v2749
        %v2835 = vpop.f32.mrf.mxu0
        %v2836 = vadd.f32 %v2731, %v2835
        %2837 = vmatmul.f32.gmra.mxu0 %v2752
        %v2838 = vpop.f32.mrf.mxu0
        %v2839 = vadd.f32 %v2736, %v2838
        %2840 = vmatmul.f32.gmra.mxu0 %v2755
        %v2841 = vpop.f32.mrf.mxu0
        %v2842 = vadd.f32 %v2741, %v2841
        %2843 = vmatmul.f32.gmra.mxu0 %v2758
        %v2844 = vpop.f32.mrf.mxu0
        %v2845 = vadd.f32 %v2746, %v2844
        %2846 = vdwg.mxu0
        %2847 = vmatpush.msra.mxu0 0.0
        %2848 = vmatpush.msra.mxu0 0.0
        %2849 = vmatpush.msra.mxu0 0.0
        %2850 = vmatpush.msra.mxu0 0.0
        %2851 = vmatpush.msra.mxu0 0.0
        %2852 = vmatpush.msra.mxu0 0.0
        %2853 = vmatpush.msra.mxu0 0.0
        %2854 = vmatpush.msra.mxu0 0.0
        %2855 = vmatpush.msra.mxu0 0.0
        %2856 = vmatpush.msra.mxu0 0.0
        %2857 = vmatpush.msra.mxu0 0.0
        %2858 = vmatpush.msra.mxu0 0.0
        %2859 = vmatpush.msra.mxu0 %v2715
        %2860 = vmatpush.msra.mxu0 %v2707
        %2861 = vmatpush.msra.mxu0 %v2699
        %2862 = vmatpush.msra.mxu0 %v2691
        %2863 = vmatmul.f32.gmra.mxu0 %v2749
        %v2864 = vpop.f32.mrf.mxu0
        %v2865 = vadd.f32 %v2731, %v2864
        %2866 = vmatmul.f32.gmra.mxu0 %v2752
        %v2867 = vpop.f32.mrf.mxu0
        %v2868 = vadd.f32 %v2736, %v2867
        %2869 = vmatmul.f32.gmra.mxu0 %v2755
        %v2870 = vpop.f32.mrf.mxu0
        %v2871 = vadd.f32 %v2741, %v2870
        %2872 = vmatmul.f32.gmra.mxu0 %v2758
        %v2873 = vpop.f32.mrf.mxu0
        %v2874 = vadd.f32 %v2746, %v2873
        %2875 = vdwg.mxu0
        %2876 = vmatpush.msra.mxu0 0.0
        %2877 = vmatpush.msra.mxu0 0.0
        %2878 = vmatpush.msra.mxu0 0.0
        %2879 = vmatpush.msra.mxu0 0.0
        %2880 = vmatpush.msra.mxu0 0.0
        %2881 = vmatpush.msra.mxu0 0.0
        %2882 = vmatpush.msra.mxu0 0.0
        %2883 = vmatpush.msra.mxu0 0.0
        %2884 = vmatpush.msra.mxu0 0.0
        %2885 = vmatpush.msra.mxu0 0.0
        %2886 = vmatpush.msra.mxu0 0.0
        %2887 = vmatpush.msra.mxu0 0.0
        %2888 = vmatpush.msra.mxu0 %v2716
        %2889 = vmatpush.msra.mxu0 %v2708
        %2890 = vmatpush.msra.mxu0 %v2700
        %2891 = vmatpush.msra.mxu0 %v2692
        %2892 = vmatmul.f32.gmra.mxu0 %v2749
        %v2893 = vpop.f32.mrf.mxu0
        %v2894 = vadd.f32 %v2731, %v2893
        %2895 = vmatmul.f32.gmra.mxu0 %v2752
        %v2896 = vpop.f32.mrf.mxu0
        %v2897 = vadd.f32 %v2736, %v2896
        %2898 = vmatmul.f32.gmra.mxu0 %v2755
        %v2899 = vpop.f32.mrf.mxu0
        %v2900 = vadd.f32 %v2741, %v2899
        %2901 = vmatmul.f32.gmra.mxu0 %v2758
        %v2902 = vpop.f32.mrf.mxu0
        %v2903 = vadd.f32 %v2746, %v2902
        %2904 = vdwg.mxu0
        %2905 = vmatpush.msra.mxu0 0.0
        %2906 = vmatpush.msra.mxu0 0.0
        %2907 = vmatpush.msra.mxu0 0.0
        %2908 = vmatpush.msra.mxu0 0.0
        %2909 = vmatpush.msra.mxu0 0.0
        %2910 = vmatpush.msra.mxu0 0.0
        %2911 = vmatpush.msra.mxu0 0.0
        %2912 = vmatpush.msra.mxu0 0.0
        %2913 = vmatpush.msra.mxu0 0.0
        %2914 = vmatpush.msra.mxu0 0.0
        %2915 = vmatpush.msra.mxu0 0.0
        %2916 = vmatpush.msra.mxu0 0.0
        %2917 = vmatpush.msra.mxu0 %v2717
        %2918 = vmatpush.msra.mxu0 %v2709
        %2919 = vmatpush.msra.mxu0 %v2701
        %2920 = vmatpush.msra.mxu0 %v2693
        %2921 = vmatmul.f32.gmra.mxu0 %v2749
        %v2922 = vpop.f32.mrf.mxu0
        %v2923 = vadd.f32 %v2731, %v2922
        %2924 = vmatmul.f32.gmra.mxu0 %v2752
        %v2925 = vpop.f32.mrf.mxu0
        %v2926 = vadd.f32 %v2736, %v2925
        %2927 = vmatmul.f32.gmra.mxu0 %v2755
        %v2928 = vpop.f32.mrf.mxu0
        %v2929 = vadd.f32 %v2741, %v2928
        %2930 = vmatmul.f32.gmra.mxu0 %v2758
        %v2931 = vpop.f32.mrf.mxu0
        %v2932 = vadd.f32 %v2746, %v2931
        %2933 = vdwg.mxu0
        %2934 = vmatpush.msra.mxu0 0.0
        %2935 = vmatpush.msra.mxu0 0.0
        %2936 = vmatpush.msra.mxu0 0.0
        %2937 = vmatpush.msra.mxu0 0.0
        %2938 = vmatpush.msra.mxu0 0.0
        %2939 = vmatpush.msra.mxu0 0.0
        %2940 = vmatpush.msra.mxu0 0.0
        %2941 = vmatpush.msra.mxu0 0.0
        %2942 = vmatpush.msra.mxu0 0.0
        %2943 = vmatpush.msra.mxu0 0.0
        %2944 = vmatpush.msra.mxu0 0.0
        %2945 = vmatpush.msra.mxu0 0.0
        %2946 = vmatpush.msra.mxu0 %v2718
        %2947 = vmatpush.msra.mxu0 %v2710
        %2948 = vmatpush.msra.mxu0 %v2702
        %2949 = vmatpush.msra.mxu0 %v2694
        %2950 = vmatmul.f32.gmra.mxu0 %v2749
        %v2951 = vpop.f32.mrf.mxu0
        %v2952 = vadd.f32 %v2731, %v2951
        %2953 = vmatmul.f32.gmra.mxu0 %v2752
        %v2954 = vpop.f32.mrf.mxu0
        %v2955 = vadd.f32 %v2736, %v2954
        %2956 = vmatmul.f32.gmra.mxu0 %v2755
        %v2957 = vpop.f32.mrf.mxu0
        %v2958 = vadd.f32 %v2741, %v2957
        %2959 = vmatmul.f32.gmra.mxu0 %v2758
        %v2960 = vpop.f32.mrf.mxu0
        %v2961 = vadd.f32 %v2746, %v2960
        %2962 = vdwg.mxu0
        %2963 = vmatpush.msra.mxu0 0.0
        %2964 = vmatpush.msra.mxu0 0.0
        %2965 = vmatpush.msra.mxu0 0.0
        %2966 = vmatpush.msra.mxu0 0.0
        %2967 = vmatpush.msra.mxu0 0.0
        %2968 = vmatpush.msra.mxu0 0.0
        %2969 = vmatpush.msra.mxu0 0.0
        %2970 = vmatpush.msra.mxu0 0.0
        %2971 = vmatpush.msra.mxu0 0.0
        %2972 = vmatpush.msra.mxu0 0.0
        %2973 = vmatpush.msra.mxu0 0.0
        %2974 = vmatpush.msra.mxu0 0.0
        %2975 = vmatpush.msra.mxu0 %v2719
        %2976 = vmatpush.msra.mxu0 %v2711
        %2977 = vmatpush.msra.mxu0 %v2703
        %2978 = vmatpush.msra.mxu0 %v2695
        %2979 = vmatmul.f32.gmra.mxu0 %v2749
        %v2980 = vpop.f32.mrf.mxu0
        %v2981 = vadd.f32 %v2731, %v2980
        %2982 = vmatmul.f32.gmra.mxu0 %v2752
        %v2983 = vpop.f32.mrf.mxu0
        %v2984 = vadd.f32 %v2736, %v2983
        %2985 = vmatmul.f32.gmra.mxu0 %v2755
        %v2986 = vpop.f32.mrf.mxu0
        %v2987 = vadd.f32 %v2741, %v2986
        %2988 = vmatmul.f32.gmra.mxu0 %v2758
        %v2989 = vpop.f32.mrf.mxu0
        %v2990 = vadd.f32 %v2746, %v2989
        %2991 = vdwg.mxu0
        %v2992 = vmax.f32 %v2778, 0.0
        %v2993 = vmax.f32 %v2807, 0.0
        %v2994 = vmax.f32 %v2836, 0.0
        %v2995 = vmax.f32 %v2865, 0.0
        %v2996 = vmax.f32 %v2894, 0.0
        %v2997 = vmax.f32 %v2923, 0.0
        %v2998 = vmax.f32 %v2952, 0.0
        %v2999 = vmax.f32 %v2981, 0.0
        %v3000 = vmax.f32 %v2781, 0.0
        %v3001 = vmax.f32 %v2810, 0.0
        %v3002 = vmax.f32 %v2839, 0.0
        %v3003 = vmax.f32 %v2868, 0.0
        %v3004 = vmax.f32 %v2897, 0.0
        %v3005 = vmax.f32 %v2926, 0.0
        %v3006 = vmax.f32 %v2955, 0.0
        %v3007 = vmax.f32 %v2984, 0.0
        %v3008 = vmax.f32 %v2784, 0.0
        %v3009 = vmax.f32 %v2813, 0.0
        %v3010 = vmax.f32 %v2842, 0.0
        %v3011 = vmax.f32 %v2871, 0.0
        %v3012 = vmax.f32 %v2900, 0.0
        %v3013 = vmax.f32 %v2929, 0.0
        %v3014 = vmax.f32 %v2958, 0.0
        %v3015 = vmax.f32 %v2987, 0.0
        %v3016 = vmax.f32 %v2787, 0.0
        %v3017 = vmax.f32 %v2816, 0.0
        %v3018 = vmax.f32 %v2845, 0.0
        %v3019 = vmax.f32 %v2874, 0.0
        %v3020 = vmax.f32 %v2903, 0.0
        %v3021 = vmax.f32 %v2932, 0.0
        %v3022 = vmax.f32 %v2961, 0.0
        %v3023 = vmax.f32 %v2990, 0.0
        %v3024 = vld [vmem:[%s6] sm:$0xff]
        %v3025 = vld [vmem:[%s7] sm:$0xff]
        %3027 = vset.pattern.permute.xlu0 0
        %3028 = vperm.xlu0 %3027, %v3025
        %v3029 = vpop.permute.xlu0 %3028
        %v3032 = vsel %vm2443, %v3024, 0
        %3034 = vmatpush.msra.mxu0 0.0
        %3035 = vmatpush.msra.mxu0 0.0
        %3036 = vmatpush.msra.mxu0 0.0
        %3037 = vmatpush.msra.mxu0 0.0
        %3038 = vmatpush.msra.mxu0 0.0
        %3039 = vmatpush.msra.mxu0 0.0
        %3040 = vmatpush.msra.mxu0 0.0
        %3041 = vmatpush.msra.mxu0 0.0
        %3042 = vmatpush.msra.mxu0 0.0
        %3043 = vmatpush.msra.mxu0 0.0
        %3044 = vmatpush.msra.mxu0 0.0
        %3045 = vmatpush.msra.mxu0 0.0
        %3046 = vmatpush.msra.mxu0 %v3016
        %3047 = vmatpush.msra.mxu0 %v3008
        %3048 = vmatpush.msra.mxu0 %v3000
        %3049 = vmatpush.msra.mxu0 %v2992
        %3050 = vmatmul.f32.gmra.mxu0 %v3032
        %v3051 = vpop.f32.mrf.mxu0
        %v3052 = vadd.f32 %v3029, %v3051
        %3053 = vdwg.mxu0
        %3054 = vmatpush.msra.mxu0 0.0
        %3055 = vmatpush.msra.mxu0 0.0
        %3056 = vmatpush.msra.mxu0 0.0
        %3057 = vmatpush.msra.mxu0 0.0
        %3058 = vmatpush.msra.mxu0 0.0
        %3059 = vmatpush.msra.mxu0 0.0
        %3060 = vmatpush.msra.mxu0 0.0
        %3061 = vmatpush.msra.mxu0 0.0
        %3062 = vmatpush.msra.mxu0 0.0
        %3063 = vmatpush.msra.mxu0 0.0
        %3064 = vmatpush.msra.mxu0 0.0
        %3065 = vmatpush.msra.mxu0 0.0
        %3066 = vmatpush.msra.mxu0 %v3017
        %3067 = vmatpush.msra.mxu0 %v3009
        %3068 = vmatpush.msra.mxu0 %v3001
        %3069 = vmatpush.msra.mxu0 %v2993
        %3070 = vmatmul.f32.gmra.mxu0 %v3032
        %v3071 = vpop.f32.mrf.mxu0
        %v3072 = vadd.f32 %v3029, %v3071
        %3073 = vdwg.mxu0
        %3074 = vmatpush.msra.mxu0 0.0
        %3075 = vmatpush.msra.mxu0 0.0
        %3076 = vmatpush.msra.mxu0 0.0
        %3077 = vmatpush.msra.mxu0 0.0
        %3078 = vmatpush.msra.mxu0 0.0
        %3079 = vmatpush.msra.mxu0 0.0
        %3080 = vmatpush.msra.mxu0 0.0
        %3081 = vmatpush.msra.mxu0 0.0
        %3082 = vmatpush.msra.mxu0 0.0
        %3083 = vmatpush.msra.mxu0 0.0
        %3084 = vmatpush.msra.mxu0 0.0
        %3085 = vmatpush.msra.mxu0 0.0
        %3086 = vmatpush.msra.mxu0 %v3018
        %3087 = vmatpush.msra.mxu0 %v3010
        %3088 = vmatpush.msra.mxu0 %v3002
        %3089 = vmatpush.msra.mxu0 %v2994
        %3090 = vmatmul.f32.gmra.mxu0 %v3032
        %v3091 = vpop.f32.mrf.mxu0
        %v3092 = vadd.f32 %v3029, %v3091
        %3093 = vdwg.mxu0
        %3094 = vmatpush.msra.mxu0 0.0
        %3095 = vmatpush.msra.mxu0 0.0
        %3096 = vmatpush.msra.mxu0 0.0
        %3097 = vmatpush.msra.mxu0 0.0
        %3098 = vmatpush.msra.mxu0 0.0
        %3099 = vmatpush.msra.mxu0 0.0
        %3100 = vmatpush.msra.mxu0 0.0
        %3101 = vmatpush.msra.mxu0 0.0
        %3102 = vmatpush.msra.mxu0 0.0
        %3103 = vmatpush.msra.mxu0 0.0
        %3104 = vmatpush.msra.mxu0 0.0
        %3105 = vmatpush.msra.mxu0 0.0
        %3106 = vmatpush.msra.mxu0 %v3019
        %3107 = vmatpush.msra.mxu0 %v3011
        %3108 = vmatpush.msra.mxu0 %v3003
        %3109 = vmatpush.msra.mxu0 %v2995
        %3110 = vmatmul.f32.gmra.mxu0 %v3032
        %v3111 = vpop.f32.mrf.mxu0
        %v3112 = vadd.f32 %v3029, %v3111
        %3113 = vdwg.mxu0
        %3114 = vmatpush.msra.mxu0 0.0
        %3115 = vmatpush.msra.mxu0 0.0
        %3116 = vmatpush.msra.mxu0 0.0
        %3117 = vmatpush.msra.mxu0 0.0
        %3118 = vmatpush.msra.mxu0 0.0
        %3119 = vmatpush.msra.mxu0 0.0
        %3120 = vmatpush.msra.mxu0 0.0
        %3121 = vmatpush.msra.mxu0 0.0
        %3122 = vmatpush.msra.mxu0 0.0
        %3123 = vmatpush.msra.mxu0 0.0
        %3124 = vmatpush.msra.mxu0 0.0
        %3125 = vmatpush.msra.mxu0 0.0
        %3126 = vmatpush.msra.mxu0 %v3020
        %3127 = vmatpush.msra.mxu0 %v3012
        %3128 = vmatpush.msra.mxu0 %v3004
        %3129 = vmatpush.msra.mxu0 %v2996
        %3130 = vmatmul.f32.gmra.mxu0 %v3032
        %v3131 = vpop.f32.mrf.mxu0
        %v3132 = vadd.f32 %v3029, %v3131
        %3133 = vdwg.mxu0
        %3134 = vmatpush.msra.mxu0 0.0
        %3135 = vmatpush.msra.mxu0 0.0
        %3136 = vmatpush.msra.mxu0 0.0
        %3137 = vmatpush.msra.mxu0 0.0
        %3138 = vmatpush.msra.mxu0 0.0
        %3139 = vmatpush.msra.mxu0 0.0
        %3140 = vmatpush.msra.mxu0 0.0
        %3141 = vmatpush.msra.mxu0 0.0
        %3142 = vmatpush.msra.mxu0 0.0
        %3143 = vmatpush.msra.mxu0 0.0
        %3144 = vmatpush.msra.mxu0 0.0
        %3145 = vmatpush.msra.mxu0 0.0
        %3146 = vmatpush.msra.mxu0 %v3021
        %3147 = vmatpush.msra.mxu0 %v3013
        %3148 = vmatpush.msra.mxu0 %v3005
        %3149 = vmatpush.msra.mxu0 %v2997
        %3150 = vmatmul.f32.gmra.mxu0 %v3032
        %v3151 = vpop.f32.mrf.mxu0
        %v3152 = vadd.f32 %v3029, %v3151
        %3153 = vdwg.mxu0
        %3154 = vmatpush.msra.mxu0 0.0
        %3155 = vmatpush.msra.mxu0 0.0
        %3156 = vmatpush.msra.mxu0 0.0
        %3157 = vmatpush.msra.mxu0 0.0
        %3158 = vmatpush.msra.mxu0 0.0
        %3159 = vmatpush.msra.mxu0 0.0
        %3160 = vmatpush.msra.mxu0 0.0
        %3161 = vmatpush.msra.mxu0 0.0
        %3162 = vmatpush.msra.mxu0 0.0
        %3163 = vmatpush.msra.mxu0 0.0
        %3164 = vmatpush.msra.mxu0 0.0
        %3165 = vmatpush.msra.mxu0 0.0
        %3166 = vmatpush.msra.mxu0 %v3022
        %3167 = vmatpush.msra.mxu0 %v3014
        %3168 = vmatpush.msra.mxu0 %v3006
        %3169 = vmatpush.msra.mxu0 %v2998
        %3170 = vmatmul.f32.gmra.mxu0 %v3032
        %v3171 = vpop.f32.mrf.mxu0
        %v3172 = vadd.f32 %v3029, %v3171
        %3173 = vdwg.mxu0
        %3174 = vmatpush.msra.mxu0 0.0
        %3175 = vmatpush.msra.mxu0 0.0
        %3176 = vmatpush.msra.mxu0 0.0
        %3177 = vmatpush.msra.mxu0 0.0
        %3178 = vmatpush.msra.mxu0 0.0
        %3179 = vmatpush.msra.mxu0 0.0
        %3180 = vmatpush.msra.mxu0 0.0
        %3181 = vmatpush.msra.mxu0 0.0
        %3182 = vmatpush.msra.mxu0 0.0
        %3183 = vmatpush.msra.mxu0 0.0
        %3184 = vmatpush.msra.mxu0 0.0
        %3185 = vmatpush.msra.mxu0 0.0
        %3186 = vmatpush.msra.mxu0 %v3023
        %3187 = vmatpush.msra.mxu0 %v3015
        %3188 = vmatpush.msra.mxu0 %v3007
        %3189 = vmatpush.msra.mxu0 %v2999
        %3190 = vmatmul.f32.gmra.mxu0 %v3032
        %v3191 = vpop.f32.mrf.mxu0
        %v3192 = vadd.f32 %v3029, %v3191
        %3193 = vdwg.mxu0
        %3194 = vst [vmem:[%s349] sm:$0xff] %v3052
        %3195 = vst [vmem:[%s349 + $0x8] sm:$0xff] %v3072
        %3196 = vst [vmem:[%s349 + $0x10] sm:$0xff] %v3092
        %3197 = vst [vmem:[%s349 + $0x18] sm:$0xff] %v3112
        %3198 = vst [vmem:[%s349 + $0x20] sm:$0xff] %v3132
        %3199 = vst [vmem:[%s349 + $0x28] sm:$0xff] %v3152
        %3200 = vst [vmem:[%s349 + $0x30] sm:$0xff] %v3172
        %3201 = vst [vmem:[%s349 + $0x38] sm:$0xff] %v3192
        %s3202 = sand.u32 %s205, 1
        %s3203 = scalar_lea.sflag [#allocation5], %s3202
        %s3204 = sand.u32 %s205, 1
        %s3205 = smul.addr %s3204, 64
        %s3206 = scalar_lea.vmem [#allocation9], %s3205
        // Predicated region
        $region65: #{tpu_custom_call.1} parent=51 // pred_check
          %p3207 = pneg %p215
        $region66: #{tpu_custom_call.1} parent=51 // pred_check_branch
          %3209 = sbr.rel (%p3207) target = $region68
        $region67: #{tpu_custom_call.1} parent=51 // pred_region
          %s3210 = smul.u32 8, %s24
          %3212 = vsyncadd %s3203, 0
          %s3213 = smul.addr %s3210, 8
          %s3214 = scalar_lea.hbm %s8, %s3213
          %s3216 = sshll.u32 %s3206, 4
          %s3217 = int_to_ptr.vmem [resolvable:$true] %s3216
          %s3218 = sshll.u32 %s3214, 4
          %s3219 = int_to_ptr.hbm [resolvable:$true] %s3218
          %3221 = dma.vmem_to_hbm [thread:$0]  %s3217, 1024, %s3219, %s3203
        $region68: #{tpu_custom_call.1} parent=51 // pred_fallthru
          _
      $region52: #{tpu_custom_call.1} parent=5 // pred_fallthru
        _
      %p3222 = scmp.le.s32.totalorder 2, %s19
      // Predicated region
      $region69: #{tpu_custom_call.1} parent=5 // pred_check
        %p3223 = pneg %p3222
      $region70: #{tpu_custom_call.1} parent=5 // pred_check_branch
        %3225 = sbr.rel (%p3223) target = $region72
      $region71: #{tpu_custom_call.1} parent=5 // pred_region
        %s3226 = ssub.s32 %s19, 2
        // Predicated region
        $region73: #{tpu_custom_call.1} parent=71 // pred_check
          %p3227 = pneg %p221
        $region74: #{tpu_custom_call.1} parent=71 // pred_check_branch
          %3229 = sbr.rel (%p3227) target = $region76
        $region75: #{tpu_custom_call.1} parent=71 // pred_region
          %s3230 = sand.u32 %s206, 1
          %s3231 = scalar_lea.sflag [#allocation5], %s3230
          %s3232 = sand.u32 %s206, 1
          %s3233 = smul.addr %s3232, 64
          %s3234 = scalar_lea.vmem [#allocation9], %s3233
          %3236 = dma.done %s3231, 1024
        $region76: #{tpu_custom_call.1} parent=71 // pred_fallthru
          _
      $region72: #{tpu_custom_call.1} parent=5 // pred_fallthru
        _
    $region6: #{tpu_custom_call.1} parent=1 // loop_footer
      %s23 = sadd.s32 1, %s19
    $region7: #{tpu_custom_call.1} parent=1 // loop_footer_branch
      %18 = sbr.rel target = $region3
    $region8: #{tpu_custom_call.1} parent=1 // loop_exit
      _
    %3237 = vsyncpa [#allocation4], 1
    %s3238 = scalar_lea.sflag [#allocation4], 1
    %3239 = vsyncpa %s3238, 1
    %3240 = vsyncpa [#allocation7], 1
    %3241 = vsyncpa [#allocation5], 1
    %s3242 = scalar_lea.sflag [#allocation5], 1
    %3243 = vsyncpa %s3242, 1

</llo_original>
